<compile_context>
chip_gen: v6e
topology: v6e:2x2x1
jax: 0.10.0
libtpu: 0.0.40
codegen_flags: <defaults>
</compile_context>

<pallas_src>
import functools

import jax
import jax.numpy as jnp
from jax.experimental import pallas as pl
from jax.experimental.pallas import tpu as pltpu


def _round_up(x, m):
    return ((x + m - 1) // m) * m


# ----------------------------------------------------------------------------
# Kernel body
# ----------------------------------------------------------------------------
def _gaussian_kernel(x_ref, wt_ref, b_ref, o_ref, *, sigma, precision):
    # Linear: (tm, in_dims) @ (in_dims, tn) + (1, tn); f32 accumulation on MXU.
    y = jnp.dot(x_ref[...], wt_ref[...],
                preferred_element_type=jnp.float32,
                precision=precision)
    y = y + b_ref[...].astype(jnp.float32)
    neg_inv_two_sigma_sq = -1.0 / (2.0 * float(sigma) * float(sigma))
    # Square/scale on the VPU, exp on the EUP; negation folded into the const.
    o_ref[...] = jnp.exp((y * y) * neg_inv_two_sigma_sq).astype(o_ref.dtype)


# ----------------------------------------------------------------------------
# VMEM accounting & generation-aware policy
# ----------------------------------------------------------------------------
def _tile_vmem_bytes(rows, cols, itemsize):
    """VMEM footprint of a (rows, cols) tile: sublanes pad to 8, lanes to 128."""
    return _round_up(max(rows, 1), 8) * _round_up(max(cols, 1), 128) * itemsize


def _vmem_need_bytes(tm, tn, in_dims, x_isz, o_isz, w_isz, b_isz):
    # Conservative: every operand counted double-buffered (the grid-invariant
    # weight/bias may actually end up single-buffered -> real usage <= this).
    need = 2 * _tile_vmem_bytes(tm, in_dims, x_isz)      # x row block
    need += 2 * _tile_vmem_bytes(tm, tn, o_isz)          # output block
    need += 2 * _tile_vmem_bytes(in_dims, tn, w_isz)     # weight tile
    need += 2 * _tile_vmem_bytes(1, tn, b_isz)           # bias tile
    return need


def _tpu_generation():
    """(physical_vmem_bytes, tensorcores_per_chip) with v7x-safe fallbacks."""
    kind = ""
    try:
        kind = jax.devices()[0].device_kind.lower()
    except Exception:
        kind = ""
    is_v7 = ("v7" in kind) or ("tpu7" in kind)
    phys = None
    try:
        phys = int(pltpu.get_tpu_info().vmem_capacity_bytes)
    except Exception:
        phys = None
    if phys is None:
        if is_v7:
            phys = 64 << 20
        elif kind:
            phys = 128 << 20            # v5e / v6e class
        else:
            phys = 64 << 20             # unknown: be conservative
    cores = 2 if (is_v7 or phys <= (64 << 20)) else 1
    return phys, cores


def _vmem_policy(phys_vmem_bytes):
    """(default tile budget, vmem_limit clamp) per chip generation."""
    if phys_vmem_bytes <= (64 << 20):   # v7x-class: 64 MiB physical per TC
        return 24 << 20, 48 << 20
    return 80 << 20, 112 << 20          # v5e / v6e: 128 MiB physical


# ----------------------------------------------------------------------------
# Tile selection
# ----------------------------------------------------------------------------
def _choose_col_tile(out_dims, in_dims, x_isz, o_isz, w_isz, b_isz, budget):
    """Full out_dims when the resident weight tile leaves room for row blocks,
    otherwise a multiple-of-128 tile (lane-dense stores, full MXU N width)."""
    def resident(tn):
        return (2 * _tile_vmem_bytes(in_dims, tn, w_isz)
                + 2 * _tile_vmem_bytes(1, tn, b_isz))
    if resident(out_dims) <= budget // 2:
        return out_dims
    for tn in (2048, 1024, 512, 256, 128):
        if tn < out_dims and resident(tn) <= budget // 2:
            return tn
    return 128


def _choose_row_tile(n, in_dims, tn, x_isz, o_isz, w_isz, b_isz, budget,
                     min_steps):
    """Near-divisor row tile: smallest row-step count whose tile fits the VMEM
    budget.  min_steps >= 2 only where two TensorCores exist (v7x)."""
    resident = (2 * _tile_vmem_bytes(in_dims, tn, w_isz)
                + 2 * _tile_vmem_bytes(1, tn, b_isz))
    row_cost = 2 * (_round_up(in_dims, 128) * x_isz
                    + _round_up(tn, 128) * o_isz)          # double-buffered
    avail = max(budget - resident, 0)
    tm_max = max(8, (avail // row_cost) // 8 * 8)
    if n < 16:                      # not enough rows to feed two cores anyway
        min_steps = 1
    k = max(min_steps, pl.cdiv(n, tm_max))
    if k <= 1:
        return n                    # single full-extent block, zero padding
    return _round_up(pl.cdiv(n, k), 8)


# ----------------------------------------------------------------------------
# Wrapper
# ----------------------------------------------------------------------------
def gaussian_layer(x, weight, bias=None, *, sigma=0.1, tm=None, tn=None,
                   out_dtype=None, precision=None, vmem_budget_bytes=None):
    """x: [N, in_dims]; weight: [out_dims, in_dims]; bias: [out_dims] or None.

    Returns exp(-(x @ W.T + b)^2 / (2 sigma^2)) with dtype `out_dtype`
    (defaults to x.dtype; pass jnp.bfloat16 to halve the output HBM stream).
    """
    n, in_dims = x.shape
    out_dims, in_dims_w = weight.shape
    assert in_dims_w == in_dims, "weight must be [out_dims, in_dims]"
    out_dtype = x.dtype if out_dtype is None else jnp.dtype(out_dtype)
    if bias is None:
        bias = jnp.zeros((out_dims,), dtype=weight.dtype)

    x_isz = x.dtype.itemsize
    o_isz = jnp.dtype(out_dtype).itemsize
    w_isz = weight.dtype.itemsize
    b_isz = bias.dtype.itemsize

    phys_vmem, cores = _tpu_generation()
    default_budget, vmem_clamp = _vmem_policy(phys_vmem)
    budget = default_budget if vmem_budget_bytes is None else int(vmem_budget_bytes)

    # Out-dims tile (weight does not need to be fully VMEM-resident).
    # TODO(synk): add a K (in_dims) grid axis if in_dims ever gets huge.
    if tn is None:
        tn = _choose_col_tile(out_dims, in_dims, x_isz, o_isz, w_isz, b_isz,
                              budget)
    tn = min(int(tn), out_dims)
    grid_n = pl.cdiv(out_dims, tn)

    # Row tile: near-divisor, >= 2 steps only where the chip has 2 TCs and the
    # out axis does not already provide a second grid step.
    min_row_steps = cores if grid_n == 1 else 1
    if tm is None:
        tm = _choose_row_tile(n, in_dims, tn, x_isz, o_isz, w_isz, b_isz,
                              budget, min_row_steps)
    else:
        tm = int(tm)
        tm = n if tm >= n else max(8, (tm // 8) * 8)
    grid_m = pl.cdiv(n, tm)

    # Explicit scoped-VMEM limit from the actual (layout-padded) buffer sizes,
    # with headroom for compiler-internal scratch; clamped per generation.
    need = _vmem_need_bytes(tm, tn, in_dims, x_isz, o_isz, w_isz, b_isz)
    vmem_limit = int(min(max(need * 5 // 4 + (2 << 20), 8 << 20), vmem_clamp))

    cost = pl.CostEstimate(
        flops=2 * n * in_dims * out_dims,
        transcendentals=n * out_dims,
        bytes_accessed=(n * in_dims * x_isz
                        + (grid_m if grid_n > 1 else 1) * in_dims * out_dims * w_isz
                        + out_dims * b_isz
                        + n * out_dims * o_isz),
    )

    wt = weight.T                      # (in_dims, out_dims); tiny glue
    b2 = bias.reshape(1, out_dims)     # (1, out_dims);       tiny glue

    kernel = functools.partial(_gaussian_kernel, sigma=sigma,
                               precision=precision)

    def call(single_buffer_params):
        if single_buffer_params:
            # Grid-invariant operands: one resident VMEM buffer is enough.
            w_spec = pl.BlockSpec((in_dims, tn), lambda i, j: (0, j),
                                  pipeline_mode=pl.Buffered(1))
            b_spec = pl.BlockSpec((1, tn), lambda i, j: (0, j),
                                  pipeline_mode=pl.Buffered(1))
        else:
            w_spec = pl.BlockSpec((in_dims, tn), lambda i, j: (0, j))
            b_spec = pl.BlockSpec((1, tn), lambda i, j: (0, j))
        return pl.pallas_call(
            kernel,
            out_shape=jax.ShapeDtypeStruct((n, out_dims), out_dtype),
            grid_spec=pltpu.PrefetchScalarGridSpec(
                num_scalar_prefetch=0,
                grid=(grid_m, grid_n),
                in_specs=[
                    pl.BlockSpec((tm, in_dims), lambda i, j: (i, 0)),
                    w_spec,
                    b_spec,
                ],
                out_specs=pl.BlockSpec((tm, tn), lambda i, j: (i, j)),
            ),
            compiler_params=pltpu.CompilerParams(
                dimension_semantics=("parallel", "parallel"),
                vmem_limit_bytes=vmem_limit),
            cost_estimate=cost,
        )(x, wt, b2)

    # Single-buffering is only valid when weight/bias truly never change with
    # the grid (grid_n == 1); fall back to default buffering if this
    # Pallas/Mosaic version rejects pl.Buffered(1).
    if grid_n == 1:
        try:
            return call(True)
        except Exception:
            pass
    return call(False)


# ----------------------------------------------------------------------------
# Pure-JAX reference
# ----------------------------------------------------------------------------
def gaussian_layer_ref(x, weight, bias, sigma=0.1, precision=None):
    y = jnp.dot(x, weight.T, precision=precision) + bias
    return jnp.exp(-(y ** 2) / (2.0 * sigma ** 2))


if __name__ == "__main__":
    key = jax.random.PRNGKey(0)
    k_x, k_w, k_b = jax.random.split(key, 3)

    # Non-multiple-of-8 N exercises the ragged-last-block masking path.
    N, IN_DIMS, OUT_DIMS = 300, 32, 128
    SIGMA = 0.1

    x = jax.random.normal(k_x, (N, IN_DIMS), dtype=jnp.float32)
    # Deterministic "init" mimicking nn.Linear uniform(-1/sqrt(in), 1/sqrt(in))
    bound = 1.0 / jnp.sqrt(jnp.float32(IN_DIMS))
    weight = jax.random.uniform(k_w, (OUT_DIMS, IN_DIMS), jnp.float32,
                                minval=-bound, maxval=bound)
    bias = jax.random.uniform(k_b, (OUT_DIMS,), jnp.float32,
                              minval=-bound, maxval=bound)

    # Tight-tolerance checks use HIGHEST matmul precision on BOTH sides so the
    # exp's ~50*y error amplification doesn't turn matmul rounding into flake.
    # (The production default stays DEFAULT precision -- see run 4.)
    prec = jax.lax.Precision.HIGHEST
    ref = gaussian_layer_ref(x, weight, bias, sigma=SIGMA, precision=prec)

    # 1) Forced small row tile -> ragged last block (300 = 128 + 128 + 44);
    #    verifies the in-kernel masking that replaced the wrapper pad/slice.
    out_ragged = jax.block_until_ready(
        gaussian_layer(x, weight, bias, sigma=SIGMA, precision=prec, tm=128))
    assert out_ragged.shape == (N, OUT_DIMS)
    assert jnp.allclose(out_ragged, ref, atol=1e-5, rtol=1e-5), "ragged mismatch"

    # 2) Auto-tiled path (generation-aware near-divisor tiles / VMEM budget).
    out_auto = jax.block_until_ready(
        gaussian_layer(x, weight, bias, sigma=SIGMA, precision=prec))
    assert out_auto.shape == (N, OUT_DIMS)
    assert jnp.allclose(out_auto, ref, atol=1e-5, rtol=1e-5), "auto-tile mismatch"

    # 3) bf16 output store (halves the dominant output HBM stream); compute
    #    stays f32, only the final store is cast -> only bf16 rounding error.
    out_bf16 = jax.block_until_ready(
        gaussian_layer(x, weight, bias, sigma=SIGMA, precision=prec,
                       out_dtype=jnp.bfloat16))
    assert out_bf16.dtype == jnp.bfloat16
    assert jnp.allclose(out_bf16.astype(jnp.float32), ref,
                        atol=1e-2, rtol=1e-2), "bf16-output mismatch"

    # 4) Production path: DEFAULT matmul precision (no HIGHEST); sanity-check
    #    shape, finiteness and the Gaussian's (0, 1] value range.
    out_prod = jax.block_until_ready(
        gaussian_layer(x, weight, bias, sigma=SIGMA))
    o = out_prod.astype(jnp.float32)
    assert out_prod.shape == (N, OUT_DIMS)
    assert bool(jnp.all(jnp.isfinite(o)))
    assert bool(jnp.all((o >= 0.0) & (o <= 1.0)))

    print("KERNEL_OK")
</pallas_src>

<mosaic_0001>
module attributes {stable_mosaic.version = 11 : i64} {
  func.func @_gaussian_kernel(%arg0: i32, %arg1: i32, %arg2: memref<128x32xf32, #tpu.memory_space<vmem>>, %arg3: memref<32x128xf32, #tpu.memory_space<vmem>>, %arg4: memref<1x128xf32, #tpu.memory_space<vmem>>, %arg5: memref<128x128xf32, #tpu.memory_space<vmem>>) attributes {dimension_semantics = [#tpu.dimension_semantics<parallel>, #tpu.dimension_semantics<parallel>], iteration_bounds = array<i64: 3, 1>, scalar_prefetch = 0 : i64, scratch_operands = 0 : i64, tpu.core_type = #tpu.core_type<tc>, window_params = [{transform_indices = @transform_0, window_bounds = array<i64: 128, 32>}, {pipeline_mode = #tpu.pipeline_mode<synchronous>, transform_indices = @transform_1, window_bounds = array<i64: 32, 128>}, {pipeline_mode = #tpu.pipeline_mode<synchronous>, transform_indices = @transform_2, window_bounds = array<i64: 1, 128>}, {transform_indices = @transform_3, window_bounds = array<i64: 128, 128>}]} {
    %c0 = arith.constant 0 : index
    %c0_0 = arith.constant 0 : index
    %0 = vector.load %arg2[%c0, %c0_0] : memref<128x32xf32, #tpu.memory_space<vmem>>, vector<128x32xf32>
    %c0_1 = arith.constant 0 : index
    %c0_2 = arith.constant 0 : index
    %1 = vector.load %arg3[%c0_1, %c0_2] : memref<32x128xf32, #tpu.memory_space<vmem>>, vector<32x128xf32>
    %cst = arith.constant dense<0.000000e+00> : vector<128x128xf32>
    %2 = tpu.matmul %0, %1, %cst {dimension_numbers = #tpu.dot_dimension_numbers<[1], [0], [0], [1], [0, 0, 1, 1], [], []>, precision = #tpu.contract_precision<fp32>} : vector<128x32xf32>, vector<32x128xf32>, vector<128x128xf32> -> vector<128x128xf32>
    %c0_3 = arith.constant 0 : index
    %c0_4 = arith.constant 0 : index
    %3 = vector.load %arg4[%c0_3, %c0_4] : memref<1x128xf32, #tpu.memory_space<vmem>>, vector<1x128xf32>
    %4 = vector.broadcast %3 : vector<1x128xf32> to vector<128x128xf32>
    %5 = arith.addf %2, %4 : vector<128x128xf32>
    %6 = arith.mulf %5, %5 : vector<128x128xf32>
    %cst_5 = arith.constant -5.000000e+01 : f32
    %7 = vector.broadcast %cst_5 : f32 to vector<128x128xf32>
    %8 = arith.mulf %6, %7 : vector<128x128xf32>
    %9 = math.exp %8 : vector<128x128xf32>
    %c0_6 = arith.constant 0 : index
    %c0_7 = arith.constant 0 : index
    %10 = vector.load %arg5[%c0_6, %c0_7] : memref<128x128xf32, #tpu.memory_space<vmem>>, vector<128x128xf32>
    tpu.vector_store %arg5[%c0_6, %c0_7], %9 {strides = array<i32>} : memref<128x128xf32, #tpu.memory_space<vmem>>, vector<128x128xf32>,
    return
  }
  func.func @transform_0(%arg0: i32, %arg1: i32) -> (i32, i32) {
    %c0_i32 = arith.constant 0 : i32
    %c0_i32_0 = arith.constant 0 : i32
    return %arg0, %c0_i32 : i32, i32
  }
  func.func @transform_1(%arg0: i32, %arg1: i32) -> (i32, i32) {
    %c0_i32 = arith.constant 0 : i32
    %c0_i32_0 = arith.constant 0 : i32
    return %c0_i32, %arg1 : i32, i32
  }
  func.func @transform_2(%arg0: i32, %arg1: i32) -> (i32, i32) {
    %c0_i32 = arith.constant 0 : i32
    %c0_i32_0 = arith.constant 0 : i32
    return %c0_i32, %arg1 : i32, i32
  }
  func.func @transform_3(%arg0: i32, %arg1: i32) -> (i32, i32) {
    %c0_i32 = arith.constant 0 : i32
    return %arg0, %arg1 : i32, i32
  }
}

module attributes {stable_mosaic.version = 11 : i64} {
  func.func @_gaussian_kernel(%arg0: i32, %arg1: i32, %arg2: memref<128x32xf32, #tpu.memory_space<vmem>>, %arg3: memref<32x128xf32, #tpu.memory_space<vmem>>, %arg4: memref<1x128xf32, #tpu.memory_space<vmem>>, %arg5: memref<128x128xf32, #tpu.memory_space<vmem>>) attributes {dimension_semantics = [#tpu.dimension_semantics<parallel>, #tpu.dimension_semantics<parallel>], iteration_bounds = array<i64: 3, 1>, scalar_prefetch = 0 : i64, scratch_operands = 0 : i64, tpu.core_type = #tpu.core_type<tc>, window_params = [{transform_indices = @transform_0, window_bounds = array<i64: 128, 32>}, {transform_indices = @transform_1, window_bounds = array<i64: 32, 128>}, {transform_indices = @transform_2, window_bounds = array<i64: 1, 128>}, {transform_indices = @transform_3, window_bounds = array<i64: 128, 128>}]} {
    %c0 = arith.constant 0 : index
    %c0_0 = arith.constant 0 : index
    %0 = vector.load %arg2[%c0, %c0_0] : memref<128x32xf32, #tpu.memory_space<vmem>>, vector<128x32xf32>
    %c0_1 = arith.constant 0 : index
    %c0_2 = arith.constant 0 : index
    %1 = vector.load %arg3[%c0_1, %c0_2] : memref<32x128xf32, #tpu.memory_space<vmem>>, vector<32x128xf32>
    %cst = arith.constant dense<0.000000e+00> : vector<128x128xf32>
    %2 = tpu.matmul %0, %1, %cst {dimension_numbers = #tpu.dot_dimension_numbers<[1], [0], [0], [1], [0, 0, 1, 1], [], []>, precision = #tpu.contract_precision<fp32>} : vector<128x32xf32>, vector<32x128xf32>, vector<128x128xf32> -> vector<128x128xf32>
    %c0_3 = arith.constant 0 : index
    %c0_4 = arith.constant 0 : index
    %3 = vector.load %arg4[%c0_3, %c0_4] : memref<1x128xf32, #tpu.memory_space<vmem>>, vector<1x128xf32>
    %4 = vector.broadcast %3 : vector<1x128xf32> to vector<128x128xf32>
    %5 = arith.addf %2, %4 : vector<128x128xf32>
    %6 = arith.mulf %5, %5 : vector<128x128xf32>
    %cst_5 = arith.constant -5.000000e+01 : f32
    %7 = vector.broadcast %cst_5 : f32 to vector<128x128xf32>
    %8 = arith.mulf %6, %7 : vector<128x128xf32>
    %9 = math.exp %8 : vector<128x128xf32>
    %c0_6 = arith.constant 0 : index
    %c0_7 = arith.constant 0 : index
    %10 = vector.load %arg5[%c0_6, %c0_7] : memref<128x128xf32, #tpu.memory_space<vmem>>, vector<128x128xf32>
    tpu.vector_store %arg5[%c0_6, %c0_7], %9 {strides = array<i32>} : memref<128x128xf32, #tpu.memory_space<vmem>>, vector<128x128xf32>,
    return
  }
  func.func @transform_0(%arg0: i32, %arg1: i32) -> (i32, i32) {
    %c0_i32 = arith.constant 0 : i32
    %c0_i32_0 = arith.constant 0 : i32
    return %arg0, %c0_i32 : i32, i32
  }
  func.func @transform_1(%arg0: i32, %arg1: i32) -> (i32, i32) {
    %c0_i32 = arith.constant 0 : i32
    %c0_i32_0 = arith.constant 0 : i32
    return %c0_i32, %arg1 : i32, i32
  }
  func.func @transform_2(%arg0: i32, %arg1: i32) -> (i32, i32) {
    %c0_i32 = arith.constant 0 : i32
    %c0_i32_0 = arith.constant 0 : i32
    return %c0_i32, %arg1 : i32, i32
  }
  func.func @transform_3(%arg0: i32, %arg1: i32) -> (i32, i32) {
    %c0_i32 = arith.constant 0 : i32
    return %arg0, %arg1 : i32, i32
  }
}

</mosaic_0001>

<llo_original>
// kernel: tpu_custom_call.1
$region0: #{tpu_custom_call.1}
  #allocation0 [shape = 'u32[]', space=smem, size = 0x4, offset = 0x4, fixed_abs, tag = 'smem constant byte address 0x4 - core index']
  #allocation1 [shape = 'u32[144,128]{1,0:T(1,128)}', space=vmem, size = 0x12000, scoped, tag = 'internal scratch']
  %s0 = inlined_call_operand.vmem [shape: f32[300,32], index: 0, kind: input, shape index: {}]
  %s1 = inlined_call_operand.vmem [shape: f32[32,128], index: 1, kind: input, shape index: {}]
  %s2 = inlined_call_operand.vmem [shape: f32[1,128], index: 2, kind: input, shape index: {}]
  %s3 = inlined_call_operand.hbm [shape: f32[300,128], index: 3, kind: output, shape index: {}]
  %s4 = sld [smem:[#allocation0]]
  $region45: #{tpu_custom_call.1} parent=0
    _
  %s6 = ssub.s32 1, %s4
  %s7 = scalar_select 0, %s6, %s4
  $region1: #{tpu_custom_call.1} parent=0
    #allocation2 [shape = 'u8[131072]{0}', space=vmem, size = 0x20000, scoped, tag = 'output window, operand 0']
    #allocation3 [shape = 's32[2]{0}', space=sflag, size = 0x8, scoped, tag = 'scoped memory for tpu_custom_call.1']
    %8 = vsyncpa [#allocation3], 0
    %s9 = scalar_lea.sflag [#allocation3], 1
    %10 = vsyncpa %s9, 0
    loop: start=0, step=1, limit=5
    $region2: #{tpu_custom_call.1} parent=1 // loop_pre_header
      _
    $region3: #{tpu_custom_call.1} parent=1 // loop_header
      %s12 = sphi 0, %s16
      %p13 = scmp.ge.s32.totalorder %s12, 5
      %s19 = sphi 0, %s31
      %s20 = sphi 0, %s27
      %s21 = sphi 0, %s19
      %s22 = sphi 0, %s20
      %s23 = sphi 0, %s21
      %s24 = sphi 0, %s22
      %s34 = sphi 0, %s36
      %s37 = sphi 0, %s34
      %s38 = sphi 0, %s37
      %s54 = sphi 0, %s38
      %s60 = sphi 0, %s62
      %s63 = sphi 0, %s60
      %s64 = sphi 0, %s63
      %s80 = sphi 0, %s64
      %s86 = sphi 0, %s88
      %s89 = sphi 0, %s86
      %s90 = sphi 0, %s89
      %s106 = sphi 0, %s90
      %s114 = sphi 0, %s116
      %s117 = sphi 0, %s114
      %s118 = sphi 0, %s117
      %s134 = sphi 0, %s118
    $region4: #{tpu_custom_call.1} parent=1 // loop_header_branch
      %15 = sbr.rel (%p13) target = $region8
    $region5: #{tpu_custom_call.1} parent=1 // loop_body
      %s17 = ssub.s32 %s12, 1
      %s18 = ssub.s32 %s12, 2
      %s25 = sadd.s32 1, %s20
      %p26 = scmp.ge.s32.totalorder %s25, 1
      %s27 = scalar_select %p26, 0, %s25
      %s28 = sadd.s32 1, %s19
      %s29 = scalar_select %p26, %s28, %s19
      %p30 = scmp.ge.s32.totalorder %s29, 3
      %s31 = scalar_select %p30, 0, %s29
      %s32 = ssub.s32 %s19, %s31
      %p33 = scmp.eq.s32.totalorder %s32, 0
      %s35 = sadd.s32 %s34, 1
      %s36 = scalar_select %p33, %s34, %s35
      %p39 = pneg %p33
      %p40 = scmp.eq.s32.totalorder %s12, 2
      %p41 = por %p39, %p40
      %p42 = scmp.ne.s32.totalorder %s34, %s37
      %p43 = scmp.eq.s32.totalorder %s12, 0
      %p44 = por %p42, %p43
      %p45 = scmp.ne.s32.totalorder %s34, %s37
      %p46 = scmp.eq.s32.totalorder %s17, 2
      %p47 = por %p45, %p46
      %p48 = scmp.ne.s32.totalorder %s37, %s38
      %p49 = scmp.eq.s32.totalorder %s17, 0
      %p50 = por %p48, %p49
      %p51 = scmp.ne.s32.totalorder %s37, %s38
      %p52 = scmp.eq.s32.totalorder %s18, 2
      %p53 = por %p51, %p52
      %p55 = scmp.ne.s32.totalorder %s38, %s54
      %p56 = scmp.eq.s32.totalorder %s18, 0
      %p57 = por %p55, %p56
      %s58 = ssub.s32 %s20, %s27
      %p59 = scmp.eq.s32.totalorder %s58, 0
      %s61 = sadd.s32 %s60, 1
      %s62 = scalar_select %p59, %s60, %s61
      %p65 = pneg %p59
      %p66 = scmp.eq.s32.totalorder %s12, 2
      %p67 = por %p65, %p66
      %p68 = scmp.ne.s32.totalorder %s60, %s63
      %p69 = scmp.eq.s32.totalorder %s12, 0
      %p70 = por %p68, %p69
      %p71 = scmp.ne.s32.totalorder %s60, %s63
      %p72 = scmp.eq.s32.totalorder %s17, 2
      %p73 = por %p71, %p72
      %p74 = scmp.ne.s32.totalorder %s63, %s64
      %p75 = scmp.eq.s32.totalorder %s17, 0
      %p76 = por %p74, %p75
      %p77 = scmp.ne.s32.totalorder %s63, %s64
      %p78 = scmp.eq.s32.totalorder %s18, 2
      %p79 = por %p77, %p78
      %p81 = scmp.ne.s32.totalorder %s64, %s80
      %p82 = scmp.eq.s32.totalorder %s18, 0
      %p83 = por %p81, %p82
      %s84 = ssub.s32 %s20, %s27
      %p85 = scmp.eq.s32.totalorder %s84, 0
      %s87 = sadd.s32 %s86, 1
      %s88 = scalar_select %p85, %s86, %s87
      %p91 = pneg %p85
      %p92 = scmp.eq.s32.totalorder %s12, 2
      %p93 = por %p91, %p92
      %p94 = scmp.ne.s32.totalorder %s86, %s89
      %p95 = scmp.eq.s32.totalorder %s12, 0
      %p96 = por %p94, %p95
      %p97 = scmp.ne.s32.totalorder %s86, %s89
      %p98 = scmp.eq.s32.totalorder %s17, 2
      %p99 = por %p97, %p98
      %p100 = scmp.ne.s32.totalorder %s89, %s90
      %p101 = scmp.eq.s32.totalorder %s17, 0
      %p102 = por %p100, %p101
      %p103 = scmp.ne.s32.totalorder %s89, %s90
      %p104 = scmp.eq.s32.totalorder %s18, 2
      %p105 = por %p103, %p104
      %p107 = scmp.ne.s32.totalorder %s90, %s106
      %p108 = scmp.eq.s32.totalorder %s18, 0
      %p109 = por %p107, %p108
      %s110 = ssub.s32 %s19, %s31
      %s111 = ssub.s32 %s20, %s27
      %s112 = sor.u32 %s110, %s111
      %p113 = scmp.eq.s32.totalorder %s112, 0
      %s115 = sadd.s32 %s114, 1
      %s116 = scalar_select %p113, %s114, %s115
      %p119 = pneg %p113
      %p120 = scmp.eq.s32.totalorder %s12, 2
      %p121 = por %p119, %p120
      %p122 = scmp.ne.s32.totalorder %s114, %s117
      %p123 = scmp.eq.s32.totalorder %s12, 0
      %p124 = por %p122, %p123
      %p125 = scmp.ne.s32.totalorder %s114, %s117
      %p126 = scmp.eq.s32.totalorder %s17, 2
      %p127 = por %p125, %p126
      %p128 = scmp.ne.s32.totalorder %s117, %s118
      %p129 = scmp.eq.s32.totalorder %s17, 0
      %p130 = por %p128, %p129
      %p131 = scmp.ne.s32.totalorder %s117, %s118
      %p132 = scmp.eq.s32.totalorder %s18, 2
      %p133 = por %p131, %p132
      %p135 = scmp.ne.s32.totalorder %s118, %s134
      %p136 = scmp.eq.s32.totalorder %s18, 0
      %p137 = por %p135, %p136
      %p138 = scmp.le.s32.totalorder 1, %s12
      %p139 = scmp.lt.s32.totalorder %s12, 4
      %p140 = pnand %p138, %p139
      %p141 = pneg %p140
      // Predicated region
      $region9: #{tpu_custom_call.1} parent=5 // pred_check
        _
      $region10: #{tpu_custom_call.1} parent=5 // pred_check_branch
        %143 = sbr.rel (%p140) target = $region12
      $region11: #{tpu_custom_call.1} parent=5 // pred_region
        %s144 = ssub.s32 %s12, 1
        // Predicated region
        $region13: #{tpu_custom_call.1} parent=11 // pred_check
          %p145 = pneg %p76
        $region14: #{tpu_custom_call.1} parent=11 // pred_check_branch
          %147 = sbr.rel (%p145) target = $region16
        $region15: #{tpu_custom_call.1} parent=11 // pred_region
          %p148 = scmp.lt.s32.totalorder %s22, 0
          %s149 = scalar_select %p148, %s22, 0
          %s150 = smul.addr %s149, 8
          %s151 = scalar_lea.vmem %s1, %s150
        $region16: #{tpu_custom_call.1} parent=11 // pred_fallthru
          _
        // Predicated region
        $region17: #{tpu_custom_call.1} parent=11 // pred_check
          %p152 = pneg %p102
        $region18: #{tpu_custom_call.1} parent=11 // pred_check_branch
          %154 = sbr.rel (%p152) target = $region20
        $region19: #{tpu_custom_call.1} parent=11 // pred_region
          %p155 = scmp.lt.s32.totalorder %s22, 0
          %s156 = scalar_select %p155, %s22, 0
          %s157 = scalar_lea.vmem %s2, %s156
        $region20: #{tpu_custom_call.1} parent=11 // pred_fallthru
          _
      $region12: #{tpu_custom_call.1} parent=5 // pred_fallthru
        _
      %p158 = scmp.lt.s32.totalorder %s12, 3
      // Predicated region
      $region21: #{tpu_custom_call.1} parent=5 // pred_check
        %p159 = pneg %p158
      $region22: #{tpu_custom_call.1} parent=5 // pred_check_branch
        %161 = sbr.rel (%p159) target = $region24
      $region23: #{tpu_custom_call.1} parent=5 // pred_region
        // Predicated region
        $region25: #{tpu_custom_call.1} parent=23 // pred_check
          %p162 = pneg %p44
        $region26: #{tpu_custom_call.1} parent=23 // pred_check_branch
          %164 = sbr.rel (%p162) target = $region28
        $region27: #{tpu_custom_call.1} parent=23 // pred_region
          %s165 = smul.u32 16, %s19
          %s166 = ssub.s32 38, %s165
          %p167 = scmp.lt.s32.totalorder %s166, 16
          %s168 = scalar_select %p167, %s166, 16
          %s169 = smul.u32 128, %s168
          %p170 = scmp.lt.s32.totalorder %s165, 37
          %s171 = scalar_select %p170, %s165, 37
          %s172 = smul.addr %s171, 8
          %s173 = scalar_lea.vmem %s0, %s172
          %s174 = smul.u32 16, %s19
          %s175 = ssub.s32 38, %s174
          %p176 = scmp.lt.s32.totalorder %s175, 16
          %s177 = scalar_select %p176, %s175, 16
          %s178 = smul.u32 128, %s177
        $region28: #{tpu_custom_call.1} parent=23 // pred_fallthru
          _
      $region24: #{tpu_custom_call.1} parent=5 // pred_fallthru
        _
      %p179 = scmp.le.s32.totalorder 1, %s12
      %p180 = scmp.lt.s32.totalorder %s12, 4
      %p181 = pnand %p179, %p180
      %p182 = pneg %p181
      // Predicated region
      $region29: #{tpu_custom_call.1} parent=5 // pred_check
        _
      $region30: #{tpu_custom_call.1} parent=5 // pred_check_branch
        %184 = sbr.rel (%p181) target = $region32
      $region31: #{tpu_custom_call.1} parent=5 // pred_region
        %s185 = ssub.s32 %s12, 1
        %s186 = smul.u32 16, %s21
        %s187 = ssub.s32 38, %s186
        %p188 = scmp.lt.s32.totalorder %s187, 16
        %s189 = scalar_select %p188, %s187, 16
        %s190 = smul.u32 128, %s189
        %p191 = scmp.lt.s32.totalorder %s186, 37
        %s192 = scalar_select %p191, %s186, 37
        %s193 = smul.addr %s192, 8
        %s194 = scalar_lea.vmem %s0, %s193
        %p195 = pneg %p50
        %p196 = pneg %p47
        %p197 = scmp.lt.s32.totalorder %s22, 0
        %s198 = scalar_select %p197, %s22, 0
        %s199 = smul.addr %s198, 8
        %s200 = scalar_lea.vmem %s1, %s199
        %p201 = pneg %p76
        %p202 = pneg %p73
        %p203 = scmp.lt.s32.totalorder %s22, 0
        %s204 = scalar_select %p203, %s22, 0
        %s205 = scalar_lea.vmem %s2, %s204
        %p206 = pneg %p102
        %p207 = pneg %p99
        %p208 = pneg %p130
        %p209 = pneg %p127
        %s210 = sand.u32 %s117, 1
        %s211 = scalar_lea.sflag [#allocation3], %s210
        %s212 = sand.u32 %s117, 1
        %s213 = smul.addr %s212, 128
        %s214 = scalar_lea.vmem [#allocation2], %s213
        %s215 = smul.u32 16, %s21
        %s216 = ssub.s32 38, %s215
        %p217 = scmp.lt.s32.totalorder %s216, 16
        %s218 = scalar_select %p217, %s216, 16
        %s219 = smul.u32 128, %s218
        %p220 = scmp.lt.s32.totalorder %s215, 37
        %s221 = scalar_select %p220, %s215, 37
        %s222 = smul.addr %s221, 8
        %s223 = scalar_lea.vmem %s0, %s222
        %s224 = smul.u32 16, %s21
        %s225 = ssub.s32 38, %s224
        %p226 = scmp.lt.s32.totalorder %s225, 16
        %s227 = scalar_select %p226, %s225, 16
        %s228 = smul.u32 128, %s227
        %p229 = scmp.lt.s32.totalorder %s22, 0
        %s230 = scalar_select %p229, %s22, 0
        %s231 = smul.addr %s230, 8
        %s232 = scalar_lea.vmem %s1, %s231
        %p233 = scmp.lt.s32.totalorder %s22, 0
        %s234 = scalar_select %p233, %s22, 0
        %s235 = scalar_lea.vmem %s2, %s234
        %s236 = smul.u32 16, %s21
        %s237 = ssub.s32 38, %s236
        %p238 = scmp.lt.s32.totalorder %s237, 16
        %s239 = scalar_select %p238, %s237, 16
        %s240 = smul.u32 128, %s239
        %v241 = vld [vmem:[%s223] sm:$0xff]
        %v242 = vld [vmem:[%s223 + $0x8] sm:$0xff]
        %v243 = vld [vmem:[%s223 + $0x10] sm:$0xff]
        %v244 = vld [vmem:[%s223 + $0x18] sm:$0xff]
        %v245 = vld [vmem:[%s223 + $0x20] sm:$0xff]
        %v246 = vld [vmem:[%s223 + $0x28] sm:$0xff]
        %v247 = vld [vmem:[%s223 + $0x30] sm:$0xff]
        %v248 = vld [vmem:[%s223 + $0x38] sm:$0xff]
        %v249 = vld [vmem:[%s223 + $0x40] sm:$0xff]
        %v250 = vld [vmem:[%s223 + $0x48] sm:$0xff]
        %v251 = vld [vmem:[%s223 + $0x50] sm:$0xff]
        %v252 = vld [vmem:[%s223 + $0x58] sm:$0xff]
        %v253 = vld [vmem:[%s223 + $0x60] sm:$0xff]
        %v254 = vld [vmem:[%s223 + $0x68] sm:$0xff]
        %v255 = vld [vmem:[%s223 + $0x70] sm:$0xff]
        %v256 = vld [vmem:[%s223 + $0x78] sm:$0xff]
        %v257 = vld [vmem:[%s232] sm:$0xff]
        %v258 = vld [vmem:[%s232 + $0x8] sm:$0xff]
        %v259 = vld [vmem:[%s232 + $0x10] sm:$0xff]
        %v260 = vld [vmem:[%s232 + $0x18] sm:$0xff]
        %v261 = vld [vmem:[%s235] sm:$0x1]
        %v263 = vlaneseq
        %v264 = vshrl.u32 %v263, 7
        %v265 = vsub.s32 0, %v264
        %v266 = vrot.slane %v261, %v265
        %vm268 = vcmask 261120
        %v270 = vsel %vm268, %v241, 0
        %v273 = vsel %vm268, %v242, 0
        %v276 = vsel %vm268, %v243, 0
        %v279 = vsel %vm268, %v244, 0
        %v282 = vsel %vm268, %v245, 0
        %v285 = vsel %vm268, %v246, 0
        %v288 = vsel %vm268, %v247, 0
        %v291 = vsel %vm268, %v248, 0
        %v294 = vsel %vm268, %v249, 0
        %v297 = vsel %vm268, %v250, 0
        %v300 = vsel %vm268, %v251, 0
        %v303 = vsel %vm268, %v252, 0
        %v306 = vsel %vm268, %v253, 0
        %v309 = vsel %vm268, %v254, 0
        %v312 = vsel %vm268, %v255, 0
        %v315 = vsel %vm268, %v256, 0
        %317 = vmatprep.subr.mxu0 0.0
        %318 = vmatpush1.msra.mxu0 0.0
        %319 = vmatprep.subr.mxu0 0.0
        %320 = vmatpush1.msra.mxu0 0.0
        %321 = vmatprep.subr.mxu0 0.0
        %322 = vmatpush1.msra.mxu0 0.0
        %323 = vmatprep.subr.mxu0 0.0
        %324 = vmatpush1.msra.mxu0 0.0
        %325 = vmatprep.subr.mxu0 0.0
        %326 = vmatpush1.msra.mxu0 0.0
        %327 = vmatprep.subr.mxu0 0.0
        %328 = vmatpush1.msra.mxu0 0.0
        %329 = vmatprep.subr.mxu0 0.0
        %330 = vmatpush1.msra.mxu0 0.0
        %331 = vmatprep.subr.mxu0 0.0
        %332 = vmatpush1.msra.mxu0 0.0
        %333 = vmatprep.subr.mxu0 0.0
        %334 = vmatpush1.msra.mxu0 0.0
        %335 = vmatprep.subr.mxu0 0.0
        %336 = vmatpush1.msra.mxu0 0.0
        %337 = vmatprep.subr.mxu0 0.0
        %338 = vmatpush1.msra.mxu0 0.0
        %339 = vmatprep.subr.mxu0 0.0
        %340 = vmatpush1.msra.mxu0 0.0
        %341 = vmatprep.subr.mxu0 0.0
        %v342 = vand.u32 %v260, 4294901760
        %343 = vmatpush1.msra.mxu0 %v342
        %344 = vmatprep.subr.mxu0 0.0
        %v345 = vand.u32 %v259, 4294901760
        %346 = vmatpush1.msra.mxu0 %v345
        %347 = vmatprep.subr.mxu0 0.0
        %v348 = vand.u32 %v258, 4294901760
        %349 = vmatpush1.msra.mxu0 %v348
        %350 = vmatprep.subr.mxu0 0.0
        %v351 = vand.u32 %v257, 4294901760
        %352 = vmatpush1.msra.mxu0 %v351
        %353 = vmatprep.subr.mxu0 0.0
        %354 = vmatpush2.msra.mxu0 0.0
        %355 = vmatprep.subr.mxu0 0.0
        %356 = vmatpush2.msra.mxu0 0.0
        %357 = vmatprep.subr.mxu0 0.0
        %358 = vmatpush2.msra.mxu0 0.0
        %359 = vmatprep.subr.mxu0 0.0
        %360 = vmatpush2.msra.mxu0 0.0
        %361 = vmatprep.subr.mxu0 0.0
        %362 = vmatpush2.msra.mxu0 0.0
        %363 = vmatprep.subr.mxu0 0.0
        %364 = vmatpush2.msra.mxu0 0.0
        %365 = vmatprep.subr.mxu0 0.0
        %366 = vmatpush2.msra.mxu0 0.0
        %367 = vmatprep.subr.mxu0 0.0
        %368 = vmatpush2.msra.mxu0 0.0
        %369 = vmatprep.subr.mxu0 0.0
        %370 = vmatpush2.msra.mxu0 0.0
        %371 = vmatprep.subr.mxu0 0.0
        %372 = vmatpush2.msra.mxu0 0.0
        %373 = vmatprep.subr.mxu0 0.0
        %374 = vmatpush2.msra.mxu0 0.0
        %375 = vmatprep.subr.mxu0 0.0
        %376 = vmatpush2.msra.mxu0 0.0
        %377 = vmatprep.subr.mxu0 0.0
        %378 = vmatpush2.msra.mxu0 0.0
        %379 = vmatprep.subr.mxu0 0.0
        %380 = vmatpush2.msra.mxu0 0.0
        %381 = vmatprep.subr.mxu0 0.0
        %382 = vmatpush2.msra.mxu0 0.0
        %383 = vmatprep.subr.mxu0 0.0
        %384 = vmatpush2.msra.mxu0 0.0
        %385 = vmatprep.mubr.f32.mxu0 0.0
        %v386 = vand.u32 %v270, 4294901760
        %v387 = vsub.f32 %v270, %v386
        %v388 = vand.u32 %v387, 4294901760
        %v389 = vsub.f32 %v387, %v388
        %v390 = vand.u32 %v389, 4294901760
        %391 = vmatmul.mubr.f32.gmra.mxu0 %v390
        %v392 = vpop.f32.mrf.mxu0
        %v393 = vadd.f32 %v266, %v392
        %v394 = vpop.f32.mrf.mxu0
        %395 = vmatprep.mubr.f32.mxu0 0.0
        %v396 = vand.u32 %v273, 4294901760
        %v397 = vsub.f32 %v273, %v396
        %v398 = vand.u32 %v397, 4294901760
        %v399 = vsub.f32 %v397, %v398
        %v400 = vand.u32 %v399, 4294901760
        %401 = vmatmul.mubr.f32.gmra.mxu0 %v400
        %v402 = vpop.f32.mrf.mxu0
        %v403 = vadd.f32 %v266, %v402
        %v404 = vpop.f32.mrf.mxu0
        %405 = vmatprep.mubr.f32.mxu0 0.0
        %v406 = vand.u32 %v276, 4294901760
        %v407 = vsub.f32 %v276, %v406
        %v408 = vand.u32 %v407, 4294901760
        %v409 = vsub.f32 %v407, %v408
        %v410 = vand.u32 %v409, 4294901760
        %411 = vmatmul.mubr.f32.gmra.mxu0 %v410
        %v412 = vpop.f32.mrf.mxu0
        %v413 = vadd.f32 %v266, %v412
        %v414 = vpop.f32.mrf.mxu0
        %415 = vmatprep.mubr.f32.mxu0 0.0
        %v416 = vand.u32 %v279, 4294901760
        %v417 = vsub.f32 %v279, %v416
        %v418 = vand.u32 %v417, 4294901760
        %v419 = vsub.f32 %v417, %v418
        %v420 = vand.u32 %v419, 4294901760
        %421 = vmatmul.mubr.f32.gmra.mxu0 %v420
        %v422 = vpop.f32.mrf.mxu0
        %v423 = vadd.f32 %v266, %v422
        %v424 = vpop.f32.mrf.mxu0
        %425 = vmatprep.mubr.f32.mxu0 0.0
        %v426 = vand.u32 %v282, 4294901760
        %v427 = vsub.f32 %v282, %v426
        %v428 = vand.u32 %v427, 4294901760
        %v429 = vsub.f32 %v427, %v428
        %v430 = vand.u32 %v429, 4294901760
        %431 = vmatmul.mubr.f32.gmra.mxu0 %v430
        %v432 = vpop.f32.mrf.mxu0
        %v433 = vadd.f32 %v266, %v432
        %v434 = vpop.f32.mrf.mxu0
        %435 = vmatprep.mubr.f32.mxu0 0.0
        %v436 = vand.u32 %v285, 4294901760
        %v437 = vsub.f32 %v285, %v436
        %v438 = vand.u32 %v437, 4294901760
        %v439 = vsub.f32 %v437, %v438
        %v440 = vand.u32 %v439, 4294901760
        %441 = vmatmul.mubr.f32.gmra.mxu0 %v440
        %v442 = vpop.f32.mrf.mxu0
        %v443 = vadd.f32 %v266, %v442
        %v444 = vpop.f32.mrf.mxu0
        %445 = vmatprep.mubr.f32.mxu0 0.0
        %v446 = vand.u32 %v288, 4294901760
        %v447 = vsub.f32 %v288, %v446
        %v448 = vand.u32 %v447, 4294901760
        %v449 = vsub.f32 %v447, %v448
        %v450 = vand.u32 %v449, 4294901760
        %451 = vmatmul.mubr.f32.gmra.mxu0 %v450
        %v452 = vpop.f32.mrf.mxu0
        %v453 = vadd.f32 %v266, %v452
        %v454 = vpop.f32.mrf.mxu0
        %455 = vmatprep.mubr.f32.mxu0 0.0
        %v456 = vand.u32 %v291, 4294901760
        %v457 = vsub.f32 %v291, %v456
        %v458 = vand.u32 %v457, 4294901760
        %v459 = vsub.f32 %v457, %v458
        %v460 = vand.u32 %v459, 4294901760
        %461 = vmatmul.mubr.f32.gmra.mxu0 %v460
        %v462 = vpop.f32.mrf.mxu0
        %v463 = vadd.f32 %v266, %v462
        %v464 = vpop.f32.mrf.mxu0
        %465 = vmatprep.mubr.f32.mxu0 0.0
        %v466 = vand.u32 %v294, 4294901760
        %v467 = vsub.f32 %v294, %v466
        %v468 = vand.u32 %v467, 4294901760
        %v469 = vsub.f32 %v467, %v468
        %v470 = vand.u32 %v469, 4294901760
        %471 = vmatmul.mubr.f32.gmra.mxu0 %v470
        %v472 = vpop.f32.mrf.mxu0
        %v473 = vadd.f32 %v266, %v472
        %v474 = vpop.f32.mrf.mxu0
        %475 = vmatprep.mubr.f32.mxu0 0.0
        %v476 = vand.u32 %v297, 4294901760
        %v477 = vsub.f32 %v297, %v476
        %v478 = vand.u32 %v477, 4294901760
        %v479 = vsub.f32 %v477, %v478
        %v480 = vand.u32 %v479, 4294901760
        %481 = vmatmul.mubr.f32.gmra.mxu0 %v480
        %v482 = vpop.f32.mrf.mxu0
        %v483 = vadd.f32 %v266, %v482
        %v484 = vpop.f32.mrf.mxu0
        %485 = vmatprep.mubr.f32.mxu0 0.0
        %v486 = vand.u32 %v300, 4294901760
        %v487 = vsub.f32 %v300, %v486
        %v488 = vand.u32 %v487, 4294901760
        %v489 = vsub.f32 %v487, %v488
        %v490 = vand.u32 %v489, 4294901760
        %491 = vmatmul.mubr.f32.gmra.mxu0 %v490
        %v492 = vpop.f32.mrf.mxu0
        %v493 = vadd.f32 %v266, %v492
        %v494 = vpop.f32.mrf.mxu0
        %495 = vmatprep.mubr.f32.mxu0 0.0
        %v496 = vand.u32 %v303, 4294901760
        %v497 = vsub.f32 %v303, %v496
        %v498 = vand.u32 %v497, 4294901760
        %v499 = vsub.f32 %v497, %v498
        %v500 = vand.u32 %v499, 4294901760
        %501 = vmatmul.mubr.f32.gmra.mxu0 %v500
        %v502 = vpop.f32.mrf.mxu0
        %v503 = vadd.f32 %v266, %v502
        %v504 = vpop.f32.mrf.mxu0
        %505 = vmatprep.mubr.f32.mxu0 0.0
        %v506 = vand.u32 %v306, 4294901760
        %v507 = vsub.f32 %v306, %v506
        %v508 = vand.u32 %v507, 4294901760
        %v509 = vsub.f32 %v507, %v508
        %v510 = vand.u32 %v509, 4294901760
        %511 = vmatmul.mubr.f32.gmra.mxu0 %v510
        %v512 = vpop.f32.mrf.mxu0
        %v513 = vadd.f32 %v266, %v512
        %v514 = vpop.f32.mrf.mxu0
        %515 = vmatprep.mubr.f32.mxu0 0.0
        %v516 = vand.u32 %v309, 4294901760
        %v517 = vsub.f32 %v309, %v516
        %v518 = vand.u32 %v517, 4294901760
        %v519 = vsub.f32 %v517, %v518
        %v520 = vand.u32 %v519, 4294901760
        %521 = vmatmul.mubr.f32.gmra.mxu0 %v520
        %v522 = vpop.f32.mrf.mxu0
        %v523 = vadd.f32 %v266, %v522
        %v524 = vpop.f32.mrf.mxu0
        %525 = vmatprep.mubr.f32.mxu0 0.0
        %v526 = vand.u32 %v312, 4294901760
        %v527 = vsub.f32 %v312, %v526
        %v528 = vand.u32 %v527, 4294901760
        %v529 = vsub.f32 %v527, %v528
        %v530 = vand.u32 %v529, 4294901760
        %531 = vmatmul.mubr.f32.gmra.mxu0 %v530
        %v532 = vpop.f32.mrf.mxu0
        %v533 = vadd.f32 %v266, %v532
        %v534 = vpop.f32.mrf.mxu0
        %535 = vmatprep.mubr.f32.mxu0 0.0
        %v536 = vand.u32 %v315, 4294901760
        %v537 = vsub.f32 %v315, %v536
        %v538 = vand.u32 %v537, 4294901760
        %v539 = vsub.f32 %v537, %v538
        %v540 = vand.u32 %v539, 4294901760
        %541 = vmatmul.mubr.f32.gmra.mxu0 %v540
        %v542 = vpop.f32.mrf.mxu0
        %v543 = vadd.f32 %v266, %v542
        %v544 = vpop.f32.mrf.mxu0
        %545 = vdwg.mxu0
        %546 = vmatprep.subr.mxu0 0.0
        %547 = vmatpush1.msra.mxu0 0.0
        %548 = vmatprep.subr.mxu0 0.0
        %549 = vmatpush1.msra.mxu0 0.0
        %550 = vmatprep.subr.mxu0 0.0
        %551 = vmatpush1.msra.mxu0 0.0
        %552 = vmatprep.subr.mxu0 0.0
        %553 = vmatpush1.msra.mxu0 0.0
        %554 = vmatprep.subr.mxu0 0.0
        %555 = vmatpush1.msra.mxu0 0.0
        %556 = vmatprep.subr.mxu0 0.0
        %557 = vmatpush1.msra.mxu0 0.0
        %558 = vmatprep.subr.mxu0 0.0
        %559 = vmatpush1.msra.mxu0 0.0
        %560 = vmatprep.subr.mxu0 0.0
        %561 = vmatpush1.msra.mxu0 0.0
        %562 = vmatprep.subr.mxu0 0.0
        %563 = vmatpush1.msra.mxu0 0.0
        %564 = vmatprep.subr.mxu0 0.0
        %565 = vmatpush1.msra.mxu0 0.0
        %566 = vmatprep.subr.mxu0 0.0
        %567 = vmatpush1.msra.mxu0 0.0
        %568 = vmatprep.subr.mxu0 0.0
        %569 = vmatpush1.msra.mxu0 0.0
        %570 = vmatprep.subr.mxu0 0.0
        %v571 = vand.u32 %v260, 4294901760
        %v572 = vsub.f32 %v260, %v571
        %v573 = vand.u32 %v572, 4294901760
        %v574 = vsub.f32 %v572, %v573
        %v575 = vand.u32 %v574, 4294901760
        %576 = vmatpush1.msra.mxu0 %v575
        %577 = vmatprep.subr.mxu0 0.0
        %v578 = vand.u32 %v259, 4294901760
        %v579 = vsub.f32 %v259, %v578
        %v580 = vand.u32 %v579, 4294901760
        %v581 = vsub.f32 %v579, %v580
        %v582 = vand.u32 %v581, 4294901760
        %583 = vmatpush1.msra.mxu0 %v582
        %584 = vmatprep.subr.mxu0 0.0
        %v585 = vand.u32 %v258, 4294901760
        %v586 = vsub.f32 %v258, %v585
        %v587 = vand.u32 %v586, 4294901760
        %v588 = vsub.f32 %v586, %v587
        %v589 = vand.u32 %v588, 4294901760
        %590 = vmatpush1.msra.mxu0 %v589
        %591 = vmatprep.subr.mxu0 0.0
        %v592 = vand.u32 %v257, 4294901760
        %v593 = vsub.f32 %v257, %v592
        %v594 = vand.u32 %v593, 4294901760
        %v595 = vsub.f32 %v593, %v594
        %v596 = vand.u32 %v595, 4294901760
        %597 = vmatpush1.msra.mxu0 %v596
        %598 = vmatprep.subr.mxu0 0.0
        %599 = vmatpush2.msra.mxu0 0.0
        %600 = vmatprep.subr.mxu0 0.0
        %601 = vmatpush2.msra.mxu0 0.0
        %602 = vmatprep.subr.mxu0 0.0
        %603 = vmatpush2.msra.mxu0 0.0
        %604 = vmatprep.subr.mxu0 0.0
        %605 = vmatpush2.msra.mxu0 0.0
        %606 = vmatprep.subr.mxu0 0.0
        %607 = vmatpush2.msra.mxu0 0.0
        %608 = vmatprep.subr.mxu0 0.0
        %609 = vmatpush2.msra.mxu0 0.0
        %610 = vmatprep.subr.mxu0 0.0
        %611 = vmatpush2.msra.mxu0 0.0
        %612 = vmatprep.subr.mxu0 0.0
        %613 = vmatpush2.msra.mxu0 0.0
        %614 = vmatprep.subr.mxu0 0.0
        %615 = vmatpush2.msra.mxu0 0.0
        %616 = vmatprep.subr.mxu0 0.0
        %617 = vmatpush2.msra.mxu0 0.0
        %618 = vmatprep.subr.mxu0 0.0
        %619 = vmatpush2.msra.mxu0 0.0
        %620 = vmatprep.subr.mxu0 0.0
        %621 = vmatpush2.msra.mxu0 0.0
        %622 = vmatprep.subr.mxu0 0.0
        %623 = vmatpush2.msra.mxu0 0.0
        %624 = vmatprep.subr.mxu0 0.0
        %625 = vmatpush2.msra.mxu0 0.0
        %626 = vmatprep.subr.mxu0 0.0
        %627 = vmatpush2.msra.mxu0 0.0
        %628 = vmatprep.subr.mxu0 0.0
        %629 = vmatpush2.msra.mxu0 0.0
        %630 = vmatprep.mubr.f32.mxu0 0.0
        %v631 = vand.u32 %v270, 4294901760
        %632 = vmatmul.mubr.f32.gmra.mxu0 %v631
        %v633 = vpop.f32.mrf.mxu0
        %v634 = vadd.f32 %v393, %v633
        %v635 = vpop.f32.mrf.mxu0
        %636 = vmatprep.mubr.f32.mxu0 0.0
        %v637 = vand.u32 %v273, 4294901760
        %638 = vmatmul.mubr.f32.gmra.mxu0 %v637
        %v639 = vpop.f32.mrf.mxu0
        %v640 = vadd.f32 %v403, %v639
        %v641 = vpop.f32.mrf.mxu0
        %642 = vmatprep.mubr.f32.mxu0 0.0
        %v643 = vand.u32 %v276, 4294901760
        %644 = vmatmul.mubr.f32.gmra.mxu0 %v643
        %v645 = vpop.f32.mrf.mxu0
        %v646 = vadd.f32 %v413, %v645
        %v647 = vpop.f32.mrf.mxu0
        %648 = vmatprep.mubr.f32.mxu0 0.0
        %v649 = vand.u32 %v279, 4294901760
        %650 = vmatmul.mubr.f32.gmra.mxu0 %v649
        %v651 = vpop.f32.mrf.mxu0
        %v652 = vadd.f32 %v423, %v651
        %v653 = vpop.f32.mrf.mxu0
        %654 = vmatprep.mubr.f32.mxu0 0.0
        %v655 = vand.u32 %v282, 4294901760
        %656 = vmatmul.mubr.f32.gmra.mxu0 %v655
        %v657 = vpop.f32.mrf.mxu0
        %v658 = vadd.f32 %v433, %v657
        %v659 = vpop.f32.mrf.mxu0
        %660 = vmatprep.mubr.f32.mxu0 0.0
        %v661 = vand.u32 %v285, 4294901760
        %662 = vmatmul.mubr.f32.gmra.mxu0 %v661
        %v663 = vpop.f32.mrf.mxu0
        %v664 = vadd.f32 %v443, %v663
        %v665 = vpop.f32.mrf.mxu0
        %666 = vmatprep.mubr.f32.mxu0 0.0
        %v667 = vand.u32 %v288, 4294901760
        %668 = vmatmul.mubr.f32.gmra.mxu0 %v667
        %v669 = vpop.f32.mrf.mxu0
        %v670 = vadd.f32 %v453, %v669
        %v671 = vpop.f32.mrf.mxu0
        %672 = vmatprep.mubr.f32.mxu0 0.0
        %v673 = vand.u32 %v291, 4294901760
        %674 = vmatmul.mubr.f32.gmra.mxu0 %v673
        %v675 = vpop.f32.mrf.mxu0
        %v676 = vadd.f32 %v463, %v675
        %v677 = vpop.f32.mrf.mxu0
        %678 = vmatprep.mubr.f32.mxu0 0.0
        %v679 = vand.u32 %v294, 4294901760
        %680 = vmatmul.mubr.f32.gmra.mxu0 %v679
        %v681 = vpop.f32.mrf.mxu0
        %v682 = vadd.f32 %v473, %v681
        %v683 = vpop.f32.mrf.mxu0
        %684 = vmatprep.mubr.f32.mxu0 0.0
        %v685 = vand.u32 %v297, 4294901760
        %686 = vmatmul.mubr.f32.gmra.mxu0 %v685
        %v687 = vpop.f32.mrf.mxu0
        %v688 = vadd.f32 %v483, %v687
        %v689 = vpop.f32.mrf.mxu0
        %690 = vmatprep.mubr.f32.mxu0 0.0
        %v691 = vand.u32 %v300, 4294901760
        %692 = vmatmul.mubr.f32.gmra.mxu0 %v691
        %v693 = vpop.f32.mrf.mxu0
        %v694 = vadd.f32 %v493, %v693
        %v695 = vpop.f32.mrf.mxu0
        %696 = vmatprep.mubr.f32.mxu0 0.0
        %v697 = vand.u32 %v303, 4294901760
        %698 = vmatmul.mubr.f32.gmra.mxu0 %v697
        %v699 = vpop.f32.mrf.mxu0
        %v700 = vadd.f32 %v503, %v699
        %v701 = vpop.f32.mrf.mxu0
        %702 = vmatprep.mubr.f32.mxu0 0.0
        %v703 = vand.u32 %v306, 4294901760
        %704 = vmatmul.mubr.f32.gmra.mxu0 %v703
        %v705 = vpop.f32.mrf.mxu0
        %v706 = vadd.f32 %v513, %v705
        %v707 = vpop.f32.mrf.mxu0
        %708 = vmatprep.mubr.f32.mxu0 0.0
        %v709 = vand.u32 %v309, 4294901760
        %710 = vmatmul.mubr.f32.gmra.mxu0 %v709
        %v711 = vpop.f32.mrf.mxu0
        %v712 = vadd.f32 %v523, %v711
        %v713 = vpop.f32.mrf.mxu0
        %714 = vmatprep.mubr.f32.mxu0 0.0
        %v715 = vand.u32 %v312, 4294901760
        %716 = vmatmul.mubr.f32.gmra.mxu0 %v715
        %v717 = vpop.f32.mrf.mxu0
        %v718 = vadd.f32 %v533, %v717
        %v719 = vpop.f32.mrf.mxu0
        %720 = vmatprep.mubr.f32.mxu0 0.0
        %v721 = vand.u32 %v315, 4294901760
        %722 = vmatmul.mubr.f32.gmra.mxu0 %v721
        %v723 = vpop.f32.mrf.mxu0
        %v724 = vadd.f32 %v543, %v723
        %v725 = vpop.f32.mrf.mxu0
        %726 = vdwg.mxu0
        %727 = vmatprep.subr.mxu0 0.0
        %728 = vmatpush1.msra.mxu0 0.0
        %729 = vmatprep.subr.mxu0 0.0
        %730 = vmatpush1.msra.mxu0 0.0
        %731 = vmatprep.subr.mxu0 0.0
        %732 = vmatpush1.msra.mxu0 0.0
        %733 = vmatprep.subr.mxu0 0.0
        %734 = vmatpush1.msra.mxu0 0.0
        %735 = vmatprep.subr.mxu0 0.0
        %736 = vmatpush1.msra.mxu0 0.0
        %737 = vmatprep.subr.mxu0 0.0
        %738 = vmatpush1.msra.mxu0 0.0
        %739 = vmatprep.subr.mxu0 0.0
        %740 = vmatpush1.msra.mxu0 0.0
        %741 = vmatprep.subr.mxu0 0.0
        %742 = vmatpush1.msra.mxu0 0.0
        %743 = vmatprep.subr.mxu0 0.0
        %744 = vmatpush1.msra.mxu0 0.0
        %745 = vmatprep.subr.mxu0 0.0
        %746 = vmatpush1.msra.mxu0 0.0
        %747 = vmatprep.subr.mxu0 0.0
        %748 = vmatpush1.msra.mxu0 0.0
        %749 = vmatprep.subr.mxu0 0.0
        %750 = vmatpush1.msra.mxu0 0.0
        %751 = vmatprep.subr.mxu0 0.0
        %v752 = vand.u32 %v260, 4294901760
        %v753 = vsub.f32 %v260, %v752
        %754 = vmatpush1.msra.mxu0 %v753
        %755 = vmatprep.subr.mxu0 0.0
        %v756 = vand.u32 %v259, 4294901760
        %v757 = vsub.f32 %v259, %v756
        %758 = vmatpush1.msra.mxu0 %v757
        %759 = vmatprep.subr.mxu0 0.0
        %v760 = vand.u32 %v258, 4294901760
        %v761 = vsub.f32 %v258, %v760
        %762 = vmatpush1.msra.mxu0 %v761
        %763 = vmatprep.subr.mxu0 0.0
        %v764 = vand.u32 %v257, 4294901760
        %v765 = vsub.f32 %v257, %v764
        %766 = vmatpush1.msra.mxu0 %v765
        %767 = vmatprep.subr.mxu0 0.0
        %768 = vmatpush2.msra.mxu0 0.0
        %769 = vmatprep.subr.mxu0 0.0
        %770 = vmatpush2.msra.mxu0 0.0
        %771 = vmatprep.subr.mxu0 0.0
        %772 = vmatpush2.msra.mxu0 0.0
        %773 = vmatprep.subr.mxu0 0.0
        %774 = vmatpush2.msra.mxu0 0.0
        %775 = vmatprep.subr.mxu0 0.0
        %776 = vmatpush2.msra.mxu0 0.0
        %777 = vmatprep.subr.mxu0 0.0
        %778 = vmatpush2.msra.mxu0 0.0
        %779 = vmatprep.subr.mxu0 0.0
        %780 = vmatpush2.msra.mxu0 0.0
        %781 = vmatprep.subr.mxu0 0.0
        %782 = vmatpush2.msra.mxu0 0.0
        %783 = vmatprep.subr.mxu0 0.0
        %784 = vmatpush2.msra.mxu0 0.0
        %785 = vmatprep.subr.mxu0 0.0
        %786 = vmatpush2.msra.mxu0 0.0
        %787 = vmatprep.subr.mxu0 0.0
        %788 = vmatpush2.msra.mxu0 0.0
        %789 = vmatprep.subr.mxu0 0.0
        %790 = vmatpush2.msra.mxu0 0.0
        %791 = vmatprep.subr.mxu0 0.0
        %792 = vmatpush2.msra.mxu0 0.0
        %793 = vmatprep.subr.mxu0 0.0
        %794 = vmatpush2.msra.mxu0 0.0
        %795 = vmatprep.subr.mxu0 0.0
        %796 = vmatpush2.msra.mxu0 0.0
        %797 = vmatprep.subr.mxu0 0.0
        %798 = vmatpush2.msra.mxu0 0.0
        %799 = vmatprep.mubr.f32.mxu0 0.0
        %v800 = vand.u32 %v270, 4294901760
        %v801 = vsub.f32 %v270, %v800
        %802 = vmatmul.mubr.f32.gmra.mxu0 %v801
        %v803 = vpop.f32.mrf.mxu0
        %v804 = vadd.f32 %v634, %v803
        %v805 = vpop.f32.mrf.mxu0
        %806 = vmatprep.mubr.f32.mxu0 0.0
        %v807 = vand.u32 %v273, 4294901760
        %v808 = vsub.f32 %v273, %v807
        %809 = vmatmul.mubr.f32.gmra.mxu0 %v808
        %v810 = vpop.f32.mrf.mxu0
        %v811 = vadd.f32 %v640, %v810
        %v812 = vpop.f32.mrf.mxu0
        %813 = vmatprep.mubr.f32.mxu0 0.0
        %v814 = vand.u32 %v276, 4294901760
        %v815 = vsub.f32 %v276, %v814
        %816 = vmatmul.mubr.f32.gmra.mxu0 %v815
        %v817 = vpop.f32.mrf.mxu0
        %v818 = vadd.f32 %v646, %v817
        %v819 = vpop.f32.mrf.mxu0
        %820 = vmatprep.mubr.f32.mxu0 0.0
        %v821 = vand.u32 %v279, 4294901760
        %v822 = vsub.f32 %v279, %v821
        %823 = vmatmul.mubr.f32.gmra.mxu0 %v822
        %v824 = vpop.f32.mrf.mxu0
        %v825 = vadd.f32 %v652, %v824
        %v826 = vpop.f32.mrf.mxu0
        %827 = vmatprep.mubr.f32.mxu0 0.0
        %v828 = vand.u32 %v282, 4294901760
        %v829 = vsub.f32 %v282, %v828
        %830 = vmatmul.mubr.f32.gmra.mxu0 %v829
        %v831 = vpop.f32.mrf.mxu0
        %v832 = vadd.f32 %v658, %v831
        %v833 = vpop.f32.mrf.mxu0
        %834 = vmatprep.mubr.f32.mxu0 0.0
        %v835 = vand.u32 %v285, 4294901760
        %v836 = vsub.f32 %v285, %v835
        %837 = vmatmul.mubr.f32.gmra.mxu0 %v836
        %v838 = vpop.f32.mrf.mxu0
        %v839 = vadd.f32 %v664, %v838
        %v840 = vpop.f32.mrf.mxu0
        %841 = vmatprep.mubr.f32.mxu0 0.0
        %v842 = vand.u32 %v288, 4294901760
        %v843 = vsub.f32 %v288, %v842
        %844 = vmatmul.mubr.f32.gmra.mxu0 %v843
        %v845 = vpop.f32.mrf.mxu0
        %v846 = vadd.f32 %v670, %v845
        %v847 = vpop.f32.mrf.mxu0
        %848 = vmatprep.mubr.f32.mxu0 0.0
        %v849 = vand.u32 %v291, 4294901760
        %v850 = vsub.f32 %v291, %v849
        %851 = vmatmul.mubr.f32.gmra.mxu0 %v850
        %v852 = vpop.f32.mrf.mxu0
        %v853 = vadd.f32 %v676, %v852
        %v854 = vpop.f32.mrf.mxu0
        %855 = vmatprep.mubr.f32.mxu0 0.0
        %v856 = vand.u32 %v294, 4294901760
        %v857 = vsub.f32 %v294, %v856
        %858 = vmatmul.mubr.f32.gmra.mxu0 %v857
        %v859 = vpop.f32.mrf.mxu0
        %v860 = vadd.f32 %v682, %v859
        %v861 = vpop.f32.mrf.mxu0
        %862 = vmatprep.mubr.f32.mxu0 0.0
        %v863 = vand.u32 %v297, 4294901760
        %v864 = vsub.f32 %v297, %v863
        %865 = vmatmul.mubr.f32.gmra.mxu0 %v864
        %v866 = vpop.f32.mrf.mxu0
        %v867 = vadd.f32 %v688, %v866
        %v868 = vpop.f32.mrf.mxu0
        %869 = vmatprep.mubr.f32.mxu0 0.0
        %v870 = vand.u32 %v300, 4294901760
        %v871 = vsub.f32 %v300, %v870
        %872 = vmatmul.mubr.f32.gmra.mxu0 %v871
        %v873 = vpop.f32.mrf.mxu0
        %v874 = vadd.f32 %v694, %v873
        %v875 = vpop.f32.mrf.mxu0
        %876 = vmatprep.mubr.f32.mxu0 0.0
        %v877 = vand.u32 %v303, 4294901760
        %v878 = vsub.f32 %v303, %v877
        %879 = vmatmul.mubr.f32.gmra.mxu0 %v878
        %v880 = vpop.f32.mrf.mxu0
        %v881 = vadd.f32 %v700, %v880
        %v882 = vpop.f32.mrf.mxu0
        %883 = vmatprep.mubr.f32.mxu0 0.0
        %v884 = vand.u32 %v306, 4294901760
        %v885 = vsub.f32 %v306, %v884
        %886 = vmatmul.mubr.f32.gmra.mxu0 %v885
        %v887 = vpop.f32.mrf.mxu0
        %v888 = vadd.f32 %v706, %v887
        %v889 = vpop.f32.mrf.mxu0
        %890 = vmatprep.mubr.f32.mxu0 0.0
        %v891 = vand.u32 %v309, 4294901760
        %v892 = vsub.f32 %v309, %v891
        %893 = vmatmul.mubr.f32.gmra.mxu0 %v892
        %v894 = vpop.f32.mrf.mxu0
        %v895 = vadd.f32 %v712, %v894
        %v896 = vpop.f32.mrf.mxu0
        %897 = vmatprep.mubr.f32.mxu0 0.0
        %v898 = vand.u32 %v312, 4294901760
        %v899 = vsub.f32 %v312, %v898
        %900 = vmatmul.mubr.f32.gmra.mxu0 %v899
        %v901 = vpop.f32.mrf.mxu0
        %v902 = vadd.f32 %v718, %v901
        %v903 = vpop.f32.mrf.mxu0
        %904 = vmatprep.mubr.f32.mxu0 0.0
        %v905 = vand.u32 %v315, 4294901760
        %v906 = vsub.f32 %v315, %v905
        %907 = vmatmul.mubr.f32.gmra.mxu0 %v906
        %v908 = vpop.f32.mrf.mxu0
        %v909 = vadd.f32 %v724, %v908
        %v910 = vpop.f32.mrf.mxu0
        %911 = vdwg.mxu0
        %912 = vmatprep.subr.mxu0 0.0
        %913 = vmatpush1.msra.mxu0 0.0
        %914 = vmatprep.subr.mxu0 0.0
        %915 = vmatpush1.msra.mxu0 0.0
        %916 = vmatprep.subr.mxu0 0.0
        %917 = vmatpush1.msra.mxu0 0.0
        %918 = vmatprep.subr.mxu0 0.0
        %919 = vmatpush1.msra.mxu0 0.0
        %920 = vmatprep.subr.mxu0 0.0
        %921 = vmatpush1.msra.mxu0 0.0
        %922 = vmatprep.subr.mxu0 0.0
        %923 = vmatpush1.msra.mxu0 0.0
        %924 = vmatprep.subr.mxu0 0.0
        %925 = vmatpush1.msra.mxu0 0.0
        %926 = vmatprep.subr.mxu0 0.0
        %927 = vmatpush1.msra.mxu0 0.0
        %928 = vmatprep.subr.mxu0 0.0
        %929 = vmatpush1.msra.mxu0 0.0
        %930 = vmatprep.subr.mxu0 0.0
        %931 = vmatpush1.msra.mxu0 0.0
        %932 = vmatprep.subr.mxu0 0.0
        %933 = vmatpush1.msra.mxu0 0.0
        %934 = vmatprep.subr.mxu0 0.0
        %935 = vmatpush1.msra.mxu0 0.0
        %936 = vmatprep.subr.mxu0 0.0
        %v937 = vand.u32 %v260, 4294901760
        %938 = vmatpush1.msra.mxu0 %v937
        %939 = vmatprep.subr.mxu0 0.0
        %v940 = vand.u32 %v259, 4294901760
        %941 = vmatpush1.msra.mxu0 %v940
        %942 = vmatprep.subr.mxu0 0.0
        %v943 = vand.u32 %v258, 4294901760
        %944 = vmatpush1.msra.mxu0 %v943
        %945 = vmatprep.subr.mxu0 0.0
        %v946 = vand.u32 %v257, 4294901760
        %947 = vmatpush1.msra.mxu0 %v946
        %948 = vmatprep.subr.mxu0 0.0
        %949 = vmatpush2.msra.mxu0 0.0
        %950 = vmatprep.subr.mxu0 0.0
        %951 = vmatpush2.msra.mxu0 0.0
        %952 = vmatprep.subr.mxu0 0.0
        %953 = vmatpush2.msra.mxu0 0.0
        %954 = vmatprep.subr.mxu0 0.0
        %955 = vmatpush2.msra.mxu0 0.0
        %956 = vmatprep.subr.mxu0 0.0
        %957 = vmatpush2.msra.mxu0 0.0
        %958 = vmatprep.subr.mxu0 0.0
        %959 = vmatpush2.msra.mxu0 0.0
        %960 = vmatprep.subr.mxu0 0.0
        %961 = vmatpush2.msra.mxu0 0.0
        %962 = vmatprep.subr.mxu0 0.0
        %963 = vmatpush2.msra.mxu0 0.0
        %964 = vmatprep.subr.mxu0 0.0
        %965 = vmatpush2.msra.mxu0 0.0
        %966 = vmatprep.subr.mxu0 0.0
        %967 = vmatpush2.msra.mxu0 0.0
        %968 = vmatprep.subr.mxu0 0.0
        %969 = vmatpush2.msra.mxu0 0.0
        %970 = vmatprep.subr.mxu0 0.0
        %971 = vmatpush2.msra.mxu0 0.0
        %972 = vmatprep.subr.mxu0 0.0
        %973 = vmatpush2.msra.mxu0 0.0
        %974 = vmatprep.subr.mxu0 0.0
        %975 = vmatpush2.msra.mxu0 0.0
        %976 = vmatprep.subr.mxu0 0.0
        %977 = vmatpush2.msra.mxu0 0.0
        %978 = vmatprep.subr.mxu0 0.0
        %979 = vmatpush2.msra.mxu0 0.0
        %980 = vmatprep.mubr.f32.mxu0 0.0
        %v981 = vand.u32 %v270, 4294901760
        %v982 = vsub.f32 %v270, %v981
        %v983 = vand.u32 %v982, 4294901760
        %984 = vmatmul.mubr.f32.gmra.mxu0 %v983
        %v985 = vpop.f32.mrf.mxu0
        %v986 = vadd.f32 %v804, %v985
        %v987 = vpop.f32.mrf.mxu0
        %988 = vmatprep.mubr.f32.mxu0 0.0
        %v989 = vand.u32 %v273, 4294901760
        %v990 = vsub.f32 %v273, %v989
        %v991 = vand.u32 %v990, 4294901760
        %992 = vmatmul.mubr.f32.gmra.mxu0 %v991
        %v993 = vpop.f32.mrf.mxu0
        %v994 = vadd.f32 %v811, %v993
        %v995 = vpop.f32.mrf.mxu0
        %996 = vmatprep.mubr.f32.mxu0 0.0
        %v997 = vand.u32 %v276, 4294901760
        %v998 = vsub.f32 %v276, %v997
        %v999 = vand.u32 %v998, 4294901760
        %1000 = vmatmul.mubr.f32.gmra.mxu0 %v999
        %v1001 = vpop.f32.mrf.mxu0
        %v1002 = vadd.f32 %v818, %v1001
        %v1003 = vpop.f32.mrf.mxu0
        %1004 = vmatprep.mubr.f32.mxu0 0.0
        %v1005 = vand.u32 %v279, 4294901760
        %v1006 = vsub.f32 %v279, %v1005
        %v1007 = vand.u32 %v1006, 4294901760
        %1008 = vmatmul.mubr.f32.gmra.mxu0 %v1007
        %v1009 = vpop.f32.mrf.mxu0
        %v1010 = vadd.f32 %v825, %v1009
        %v1011 = vpop.f32.mrf.mxu0
        %1012 = vmatprep.mubr.f32.mxu0 0.0
        %v1013 = vand.u32 %v282, 4294901760
        %v1014 = vsub.f32 %v282, %v1013
        %v1015 = vand.u32 %v1014, 4294901760
        %1016 = vmatmul.mubr.f32.gmra.mxu0 %v1015
        %v1017 = vpop.f32.mrf.mxu0
        %v1018 = vadd.f32 %v832, %v1017
        %v1019 = vpop.f32.mrf.mxu0
        %1020 = vmatprep.mubr.f32.mxu0 0.0
        %v1021 = vand.u32 %v285, 4294901760
        %v1022 = vsub.f32 %v285, %v1021
        %v1023 = vand.u32 %v1022, 4294901760
        %1024 = vmatmul.mubr.f32.gmra.mxu0 %v1023
        %v1025 = vpop.f32.mrf.mxu0
        %v1026 = vadd.f32 %v839, %v1025
        %v1027 = vpop.f32.mrf.mxu0
        %1028 = vmatprep.mubr.f32.mxu0 0.0
        %v1029 = vand.u32 %v288, 4294901760
        %v1030 = vsub.f32 %v288, %v1029
        %v1031 = vand.u32 %v1030, 4294901760
        %1032 = vmatmul.mubr.f32.gmra.mxu0 %v1031
        %v1033 = vpop.f32.mrf.mxu0
        %v1034 = vadd.f32 %v846, %v1033
        %v1035 = vpop.f32.mrf.mxu0
        %1036 = vmatprep.mubr.f32.mxu0 0.0
        %v1037 = vand.u32 %v291, 4294901760
        %v1038 = vsub.f32 %v291, %v1037
        %v1039 = vand.u32 %v1038, 4294901760
        %1040 = vmatmul.mubr.f32.gmra.mxu0 %v1039
        %v1041 = vpop.f32.mrf.mxu0
        %v1042 = vadd.f32 %v853, %v1041
        %v1043 = vpop.f32.mrf.mxu0
        %1044 = vmatprep.mubr.f32.mxu0 0.0
        %v1045 = vand.u32 %v294, 4294901760
        %v1046 = vsub.f32 %v294, %v1045
        %v1047 = vand.u32 %v1046, 4294901760
        %1048 = vmatmul.mubr.f32.gmra.mxu0 %v1047
        %v1049 = vpop.f32.mrf.mxu0
        %v1050 = vadd.f32 %v860, %v1049
        %v1051 = vpop.f32.mrf.mxu0
        %1052 = vmatprep.mubr.f32.mxu0 0.0
        %v1053 = vand.u32 %v297, 4294901760
        %v1054 = vsub.f32 %v297, %v1053
        %v1055 = vand.u32 %v1054, 4294901760
        %1056 = vmatmul.mubr.f32.gmra.mxu0 %v1055
        %v1057 = vpop.f32.mrf.mxu0
        %v1058 = vadd.f32 %v867, %v1057
        %v1059 = vpop.f32.mrf.mxu0
        %1060 = vmatprep.mubr.f32.mxu0 0.0
        %v1061 = vand.u32 %v300, 4294901760
        %v1062 = vsub.f32 %v300, %v1061
        %v1063 = vand.u32 %v1062, 4294901760
        %1064 = vmatmul.mubr.f32.gmra.mxu0 %v1063
        %v1065 = vpop.f32.mrf.mxu0
        %v1066 = vadd.f32 %v874, %v1065
        %v1067 = vpop.f32.mrf.mxu0
        %1068 = vmatprep.mubr.f32.mxu0 0.0
        %v1069 = vand.u32 %v303, 4294901760
        %v1070 = vsub.f32 %v303, %v1069
        %v1071 = vand.u32 %v1070, 4294901760
        %1072 = vmatmul.mubr.f32.gmra.mxu0 %v1071
        %v1073 = vpop.f32.mrf.mxu0
        %v1074 = vadd.f32 %v881, %v1073
        %v1075 = vpop.f32.mrf.mxu0
        %1076 = vmatprep.mubr.f32.mxu0 0.0
        %v1077 = vand.u32 %v306, 4294901760
        %v1078 = vsub.f32 %v306, %v1077
        %v1079 = vand.u32 %v1078, 4294901760
        %1080 = vmatmul.mubr.f32.gmra.mxu0 %v1079
        %v1081 = vpop.f32.mrf.mxu0
        %v1082 = vadd.f32 %v888, %v1081
        %v1083 = vpop.f32.mrf.mxu0
        %1084 = vmatprep.mubr.f32.mxu0 0.0
        %v1085 = vand.u32 %v309, 4294901760
        %v1086 = vsub.f32 %v309, %v1085
        %v1087 = vand.u32 %v1086, 4294901760
        %1088 = vmatmul.mubr.f32.gmra.mxu0 %v1087
        %v1089 = vpop.f32.mrf.mxu0
        %v1090 = vadd.f32 %v895, %v1089
        %v1091 = vpop.f32.mrf.mxu0
        %1092 = vmatprep.mubr.f32.mxu0 0.0
        %v1093 = vand.u32 %v312, 4294901760
        %v1094 = vsub.f32 %v312, %v1093
        %v1095 = vand.u32 %v1094, 4294901760
        %1096 = vmatmul.mubr.f32.gmra.mxu0 %v1095
        %v1097 = vpop.f32.mrf.mxu0
        %v1098 = vadd.f32 %v902, %v1097
        %v1099 = vpop.f32.mrf.mxu0
        %1100 = vmatprep.mubr.f32.mxu0 0.0
        %v1101 = vand.u32 %v315, 4294901760
        %v1102 = vsub.f32 %v315, %v1101
        %v1103 = vand.u32 %v1102, 4294901760
        %1104 = vmatmul.mubr.f32.gmra.mxu0 %v1103
        %v1105 = vpop.f32.mrf.mxu0
        %v1106 = vadd.f32 %v909, %v1105
        %v1107 = vpop.f32.mrf.mxu0
        %1108 = vdwg.mxu0
        %1109 = vmatprep.subr.mxu0 0.0
        %1110 = vmatpush1.msra.mxu0 0.0
        %1111 = vmatprep.subr.mxu0 0.0
        %1112 = vmatpush1.msra.mxu0 0.0
        %1113 = vmatprep.subr.mxu0 0.0
        %1114 = vmatpush1.msra.mxu0 0.0
        %1115 = vmatprep.subr.mxu0 0.0
        %1116 = vmatpush1.msra.mxu0 0.0
        %1117 = vmatprep.subr.mxu0 0.0
        %1118 = vmatpush1.msra.mxu0 0.0
        %1119 = vmatprep.subr.mxu0 0.0
        %1120 = vmatpush1.msra.mxu0 0.0
        %1121 = vmatprep.subr.mxu0 0.0
        %1122 = vmatpush1.msra.mxu0 0.0
        %1123 = vmatprep.subr.mxu0 0.0
        %1124 = vmatpush1.msra.mxu0 0.0
        %1125 = vmatprep.subr.mxu0 0.0
        %1126 = vmatpush1.msra.mxu0 0.0
        %1127 = vmatprep.subr.mxu0 0.0
        %1128 = vmatpush1.msra.mxu0 0.0
        %1129 = vmatprep.subr.mxu0 0.0
        %1130 = vmatpush1.msra.mxu0 0.0
        %1131 = vmatprep.subr.mxu0 0.0
        %1132 = vmatpush1.msra.mxu0 0.0
        %1133 = vmatprep.subr.mxu0 0.0
        %v1134 = vand.u32 %v260, 4294901760
        %v1135 = vsub.f32 %v260, %v1134
        %v1136 = vand.u32 %v1135, 4294901760
        %1137 = vmatpush1.msra.mxu0 %v1136
        %1138 = vmatprep.subr.mxu0 0.0
        %v1139 = vand.u32 %v259, 4294901760
        %v1140 = vsub.f32 %v259, %v1139
        %v1141 = vand.u32 %v1140, 4294901760
        %1142 = vmatpush1.msra.mxu0 %v1141
        %1143 = vmatprep.subr.mxu0 0.0
        %v1144 = vand.u32 %v258, 4294901760
        %v1145 = vsub.f32 %v258, %v1144
        %v1146 = vand.u32 %v1145, 4294901760
        %1147 = vmatpush1.msra.mxu0 %v1146
        %1148 = vmatprep.subr.mxu0 0.0
        %v1149 = vand.u32 %v257, 4294901760
        %v1150 = vsub.f32 %v257, %v1149
        %v1151 = vand.u32 %v1150, 4294901760
        %1152 = vmatpush1.msra.mxu0 %v1151
        %1153 = vmatprep.subr.mxu0 0.0
        %1154 = vmatpush2.msra.mxu0 0.0
        %1155 = vmatprep.subr.mxu0 0.0
        %1156 = vmatpush2.msra.mxu0 0.0
        %1157 = vmatprep.subr.mxu0 0.0
        %1158 = vmatpush2.msra.mxu0 0.0
        %1159 = vmatprep.subr.mxu0 0.0
        %1160 = vmatpush2.msra.mxu0 0.0
        %1161 = vmatprep.subr.mxu0 0.0
        %1162 = vmatpush2.msra.mxu0 0.0
        %1163 = vmatprep.subr.mxu0 0.0
        %1164 = vmatpush2.msra.mxu0 0.0
        %1165 = vmatprep.subr.mxu0 0.0
        %1166 = vmatpush2.msra.mxu0 0.0
        %1167 = vmatprep.subr.mxu0 0.0
        %1168 = vmatpush2.msra.mxu0 0.0
        %1169 = vmatprep.subr.mxu0 0.0
        %1170 = vmatpush2.msra.mxu0 0.0
        %1171 = vmatprep.subr.mxu0 0.0
        %1172 = vmatpush2.msra.mxu0 0.0
        %1173 = vmatprep.subr.mxu0 0.0
        %1174 = vmatpush2.msra.mxu0 0.0
        %1175 = vmatprep.subr.mxu0 0.0
        %1176 = vmatpush2.msra.mxu0 0.0
        %1177 = vmatprep.subr.mxu0 0.0
        %1178 = vmatpush2.msra.mxu0 0.0
        %1179 = vmatprep.subr.mxu0 0.0
        %1180 = vmatpush2.msra.mxu0 0.0
        %1181 = vmatprep.subr.mxu0 0.0
        %1182 = vmatpush2.msra.mxu0 0.0
        %1183 = vmatprep.subr.mxu0 0.0
        %1184 = vmatpush2.msra.mxu0 0.0
        %1185 = vmatprep.mubr.f32.mxu0 0.0
        %v1186 = vand.u32 %v270, 4294901760
        %1187 = vmatmul.mubr.f32.gmra.mxu0 %v1186
        %v1188 = vpop.f32.mrf.mxu0
        %v1189 = vadd.f32 %v986, %v1188
        %v1190 = vpop.f32.mrf.mxu0
        %1191 = vmatprep.mubr.f32.mxu0 0.0
        %v1192 = vand.u32 %v273, 4294901760
        %1193 = vmatmul.mubr.f32.gmra.mxu0 %v1192
        %v1194 = vpop.f32.mrf.mxu0
        %v1195 = vadd.f32 %v994, %v1194
        %v1196 = vpop.f32.mrf.mxu0
        %1197 = vmatprep.mubr.f32.mxu0 0.0
        %v1198 = vand.u32 %v276, 4294901760
        %1199 = vmatmul.mubr.f32.gmra.mxu0 %v1198
        %v1200 = vpop.f32.mrf.mxu0
        %v1201 = vadd.f32 %v1002, %v1200
        %v1202 = vpop.f32.mrf.mxu0
        %1203 = vmatprep.mubr.f32.mxu0 0.0
        %v1204 = vand.u32 %v279, 4294901760
        %1205 = vmatmul.mubr.f32.gmra.mxu0 %v1204
        %v1206 = vpop.f32.mrf.mxu0
        %v1207 = vadd.f32 %v1010, %v1206
        %v1208 = vpop.f32.mrf.mxu0
        %1209 = vmatprep.mubr.f32.mxu0 0.0
        %v1210 = vand.u32 %v282, 4294901760
        %1211 = vmatmul.mubr.f32.gmra.mxu0 %v1210
        %v1212 = vpop.f32.mrf.mxu0
        %v1213 = vadd.f32 %v1018, %v1212
        %v1214 = vpop.f32.mrf.mxu0
        %1215 = vmatprep.mubr.f32.mxu0 0.0
        %v1216 = vand.u32 %v285, 4294901760
        %1217 = vmatmul.mubr.f32.gmra.mxu0 %v1216
        %v1218 = vpop.f32.mrf.mxu0
        %v1219 = vadd.f32 %v1026, %v1218
        %v1220 = vpop.f32.mrf.mxu0
        %1221 = vmatprep.mubr.f32.mxu0 0.0
        %v1222 = vand.u32 %v288, 4294901760
        %1223 = vmatmul.mubr.f32.gmra.mxu0 %v1222
        %v1224 = vpop.f32.mrf.mxu0
        %v1225 = vadd.f32 %v1034, %v1224
        %v1226 = vpop.f32.mrf.mxu0
        %1227 = vmatprep.mubr.f32.mxu0 0.0
        %v1228 = vand.u32 %v291, 4294901760
        %1229 = vmatmul.mubr.f32.gmra.mxu0 %v1228
        %v1230 = vpop.f32.mrf.mxu0
        %v1231 = vadd.f32 %v1042, %v1230
        %v1232 = vpop.f32.mrf.mxu0
        %1233 = vmatprep.mubr.f32.mxu0 0.0
        %v1234 = vand.u32 %v294, 4294901760
        %1235 = vmatmul.mubr.f32.gmra.mxu0 %v1234
        %v1236 = vpop.f32.mrf.mxu0
        %v1237 = vadd.f32 %v1050, %v1236
        %v1238 = vpop.f32.mrf.mxu0
        %1239 = vmatprep.mubr.f32.mxu0 0.0
        %v1240 = vand.u32 %v297, 4294901760
        %1241 = vmatmul.mubr.f32.gmra.mxu0 %v1240
        %v1242 = vpop.f32.mrf.mxu0
        %v1243 = vadd.f32 %v1058, %v1242
        %v1244 = vpop.f32.mrf.mxu0
        %1245 = vmatprep.mubr.f32.mxu0 0.0
        %v1246 = vand.u32 %v300, 4294901760
        %1247 = vmatmul.mubr.f32.gmra.mxu0 %v1246
        %v1248 = vpop.f32.mrf.mxu0
        %v1249 = vadd.f32 %v1066, %v1248
        %v1250 = vpop.f32.mrf.mxu0
        %1251 = vmatprep.mubr.f32.mxu0 0.0
        %v1252 = vand.u32 %v303, 4294901760
        %1253 = vmatmul.mubr.f32.gmra.mxu0 %v1252
        %v1254 = vpop.f32.mrf.mxu0
        %v1255 = vadd.f32 %v1074, %v1254
        %v1256 = vpop.f32.mrf.mxu0
        %1257 = vmatprep.mubr.f32.mxu0 0.0
        %v1258 = vand.u32 %v306, 4294901760
        %1259 = vmatmul.mubr.f32.gmra.mxu0 %v1258
        %v1260 = vpop.f32.mrf.mxu0
        %v1261 = vadd.f32 %v1082, %v1260
        %v1262 = vpop.f32.mrf.mxu0
        %1263 = vmatprep.mubr.f32.mxu0 0.0
        %v1264 = vand.u32 %v309, 4294901760
        %1265 = vmatmul.mubr.f32.gmra.mxu0 %v1264
        %v1266 = vpop.f32.mrf.mxu0
        %v1267 = vadd.f32 %v1090, %v1266
        %v1268 = vpop.f32.mrf.mxu0
        %1269 = vmatprep.mubr.f32.mxu0 0.0
        %v1270 = vand.u32 %v312, 4294901760
        %1271 = vmatmul.mubr.f32.gmra.mxu0 %v1270
        %v1272 = vpop.f32.mrf.mxu0
        %v1273 = vadd.f32 %v1098, %v1272
        %v1274 = vpop.f32.mrf.mxu0
        %1275 = vmatprep.mubr.f32.mxu0 0.0
        %v1276 = vand.u32 %v315, 4294901760
        %1277 = vmatmul.mubr.f32.gmra.mxu0 %v1276
        %v1278 = vpop.f32.mrf.mxu0
        %v1279 = vadd.f32 %v1106, %v1278
        %v1280 = vpop.f32.mrf.mxu0
        %1281 = vdwg.mxu0
        %1282 = vmatprep.subr.mxu0 0.0
        %1283 = vmatpush1.msra.mxu0 0.0
        %1284 = vmatprep.subr.mxu0 0.0
        %1285 = vmatpush1.msra.mxu0 0.0
        %1286 = vmatprep.subr.mxu0 0.0
        %1287 = vmatpush1.msra.mxu0 0.0
        %1288 = vmatprep.subr.mxu0 0.0
        %1289 = vmatpush1.msra.mxu0 0.0
        %1290 = vmatprep.subr.mxu0 0.0
        %1291 = vmatpush1.msra.mxu0 0.0
        %1292 = vmatprep.subr.mxu0 0.0
        %1293 = vmatpush1.msra.mxu0 0.0
        %1294 = vmatprep.subr.mxu0 0.0
        %1295 = vmatpush1.msra.mxu0 0.0
        %1296 = vmatprep.subr.mxu0 0.0
        %1297 = vmatpush1.msra.mxu0 0.0
        %1298 = vmatprep.subr.mxu0 0.0
        %1299 = vmatpush1.msra.mxu0 0.0
        %1300 = vmatprep.subr.mxu0 0.0
        %1301 = vmatpush1.msra.mxu0 0.0
        %1302 = vmatprep.subr.mxu0 0.0
        %1303 = vmatpush1.msra.mxu0 0.0
        %1304 = vmatprep.subr.mxu0 0.0
        %1305 = vmatpush1.msra.mxu0 0.0
        %1306 = vmatprep.subr.mxu0 0.0
        %v1307 = vand.u32 %v260, 4294901760
        %1308 = vmatpush1.msra.mxu0 %v1307
        %1309 = vmatprep.subr.mxu0 0.0
        %v1310 = vand.u32 %v259, 4294901760
        %1311 = vmatpush1.msra.mxu0 %v1310
        %1312 = vmatprep.subr.mxu0 0.0
        %v1313 = vand.u32 %v258, 4294901760
        %1314 = vmatpush1.msra.mxu0 %v1313
        %1315 = vmatprep.subr.mxu0 0.0
        %v1316 = vand.u32 %v257, 4294901760
        %1317 = vmatpush1.msra.mxu0 %v1316
        %1318 = vmatprep.subr.mxu0 0.0
        %1319 = vmatpush2.msra.mxu0 0.0
        %1320 = vmatprep.subr.mxu0 0.0
        %1321 = vmatpush2.msra.mxu0 0.0
        %1322 = vmatprep.subr.mxu0 0.0
        %1323 = vmatpush2.msra.mxu0 0.0
        %1324 = vmatprep.subr.mxu0 0.0
        %1325 = vmatpush2.msra.mxu0 0.0
        %1326 = vmatprep.subr.mxu0 0.0
        %1327 = vmatpush2.msra.mxu0 0.0
        %1328 = vmatprep.subr.mxu0 0.0
        %1329 = vmatpush2.msra.mxu0 0.0
        %1330 = vmatprep.subr.mxu0 0.0
        %1331 = vmatpush2.msra.mxu0 0.0
        %1332 = vmatprep.subr.mxu0 0.0
        %1333 = vmatpush2.msra.mxu0 0.0
        %1334 = vmatprep.subr.mxu0 0.0
        %1335 = vmatpush2.msra.mxu0 0.0
        %1336 = vmatprep.subr.mxu0 0.0
        %1337 = vmatpush2.msra.mxu0 0.0
        %1338 = vmatprep.subr.mxu0 0.0
        %1339 = vmatpush2.msra.mxu0 0.0
        %1340 = vmatprep.subr.mxu0 0.0
        %1341 = vmatpush2.msra.mxu0 0.0
        %1342 = vmatprep.subr.mxu0 0.0
        %1343 = vmatpush2.msra.mxu0 0.0
        %1344 = vmatprep.subr.mxu0 0.0
        %1345 = vmatpush2.msra.mxu0 0.0
        %1346 = vmatprep.subr.mxu0 0.0
        %1347 = vmatpush2.msra.mxu0 0.0
        %1348 = vmatprep.subr.mxu0 0.0
        %1349 = vmatpush2.msra.mxu0 0.0
        %1350 = vmatprep.mubr.f32.mxu0 0.0
        %v1351 = vand.u32 %v270, 4294901760
        %1352 = vmatmul.mubr.f32.gmra.mxu0 %v1351
        %v1353 = vpop.f32.mrf.mxu0
        %v1354 = vadd.f32 %v1189, %v1353
        %v1355 = vpop.f32.mrf.mxu0
        %1356 = vmatprep.mubr.f32.mxu0 0.0
        %v1357 = vand.u32 %v273, 4294901760
        %1358 = vmatmul.mubr.f32.gmra.mxu0 %v1357
        %v1359 = vpop.f32.mrf.mxu0
        %v1360 = vadd.f32 %v1195, %v1359
        %v1361 = vpop.f32.mrf.mxu0
        %1362 = vmatprep.mubr.f32.mxu0 0.0
        %v1363 = vand.u32 %v276, 4294901760
        %1364 = vmatmul.mubr.f32.gmra.mxu0 %v1363
        %v1365 = vpop.f32.mrf.mxu0
        %v1366 = vadd.f32 %v1201, %v1365
        %v1367 = vpop.f32.mrf.mxu0
        %1368 = vmatprep.mubr.f32.mxu0 0.0
        %v1369 = vand.u32 %v279, 4294901760
        %1370 = vmatmul.mubr.f32.gmra.mxu0 %v1369
        %v1371 = vpop.f32.mrf.mxu0
        %v1372 = vadd.f32 %v1207, %v1371
        %v1373 = vpop.f32.mrf.mxu0
        %1374 = vmatprep.mubr.f32.mxu0 0.0
        %v1375 = vand.u32 %v282, 4294901760
        %1376 = vmatmul.mubr.f32.gmra.mxu0 %v1375
        %v1377 = vpop.f32.mrf.mxu0
        %v1378 = vadd.f32 %v1213, %v1377
        %v1379 = vpop.f32.mrf.mxu0
        %1380 = vmatprep.mubr.f32.mxu0 0.0
        %v1381 = vand.u32 %v285, 4294901760
        %1382 = vmatmul.mubr.f32.gmra.mxu0 %v1381
        %v1383 = vpop.f32.mrf.mxu0
        %v1384 = vadd.f32 %v1219, %v1383
        %v1385 = vpop.f32.mrf.mxu0
        %1386 = vmatprep.mubr.f32.mxu0 0.0
        %v1387 = vand.u32 %v288, 4294901760
        %1388 = vmatmul.mubr.f32.gmra.mxu0 %v1387
        %v1389 = vpop.f32.mrf.mxu0
        %v1390 = vadd.f32 %v1225, %v1389
        %v1391 = vpop.f32.mrf.mxu0
        %1392 = vmatprep.mubr.f32.mxu0 0.0
        %v1393 = vand.u32 %v291, 4294901760
        %1394 = vmatmul.mubr.f32.gmra.mxu0 %v1393
        %v1395 = vpop.f32.mrf.mxu0
        %v1396 = vadd.f32 %v1231, %v1395
        %v1397 = vpop.f32.mrf.mxu0
        %1398 = vmatprep.mubr.f32.mxu0 0.0
        %v1399 = vand.u32 %v294, 4294901760
        %1400 = vmatmul.mubr.f32.gmra.mxu0 %v1399
        %v1401 = vpop.f32.mrf.mxu0
        %v1402 = vadd.f32 %v1237, %v1401
        %v1403 = vpop.f32.mrf.mxu0
        %1404 = vmatprep.mubr.f32.mxu0 0.0
        %v1405 = vand.u32 %v297, 4294901760
        %1406 = vmatmul.mubr.f32.gmra.mxu0 %v1405
        %v1407 = vpop.f32.mrf.mxu0
        %v1408 = vadd.f32 %v1243, %v1407
        %v1409 = vpop.f32.mrf.mxu0
        %1410 = vmatprep.mubr.f32.mxu0 0.0
        %v1411 = vand.u32 %v300, 4294901760
        %1412 = vmatmul.mubr.f32.gmra.mxu0 %v1411
        %v1413 = vpop.f32.mrf.mxu0
        %v1414 = vadd.f32 %v1249, %v1413
        %v1415 = vpop.f32.mrf.mxu0
        %1416 = vmatprep.mubr.f32.mxu0 0.0
        %v1417 = vand.u32 %v303, 4294901760
        %1418 = vmatmul.mubr.f32.gmra.mxu0 %v1417
        %v1419 = vpop.f32.mrf.mxu0
        %v1420 = vadd.f32 %v1255, %v1419
        %v1421 = vpop.f32.mrf.mxu0
        %1422 = vmatprep.mubr.f32.mxu0 0.0
        %v1423 = vand.u32 %v306, 4294901760
        %1424 = vmatmul.mubr.f32.gmra.mxu0 %v1423
        %v1425 = vpop.f32.mrf.mxu0
        %v1426 = vadd.f32 %v1261, %v1425
        %v1427 = vpop.f32.mrf.mxu0
        %1428 = vmatprep.mubr.f32.mxu0 0.0
        %v1429 = vand.u32 %v309, 4294901760
        %1430 = vmatmul.mubr.f32.gmra.mxu0 %v1429
        %v1431 = vpop.f32.mrf.mxu0
        %v1432 = vadd.f32 %v1267, %v1431
        %v1433 = vpop.f32.mrf.mxu0
        %1434 = vmatprep.mubr.f32.mxu0 0.0
        %v1435 = vand.u32 %v312, 4294901760
        %1436 = vmatmul.mubr.f32.gmra.mxu0 %v1435
        %v1437 = vpop.f32.mrf.mxu0
        %v1438 = vadd.f32 %v1273, %v1437
        %v1439 = vpop.f32.mrf.mxu0
        %1440 = vmatprep.mubr.f32.mxu0 0.0
        %v1441 = vand.u32 %v315, 4294901760
        %1442 = vmatmul.mubr.f32.gmra.mxu0 %v1441
        %v1443 = vpop.f32.mrf.mxu0
        %v1444 = vadd.f32 %v1279, %v1443
        %v1445 = vpop.f32.mrf.mxu0
        %1446 = vdwg.mxu0
        %v1447 = vmul.f32 %v1354, %v1354
        %v1448 = vmul.f32 %v1360, %v1360
        %v1449 = vmul.f32 %v1366, %v1366
        %v1450 = vmul.f32 %v1372, %v1372
        %v1451 = vmul.f32 %v1378, %v1378
        %v1452 = vmul.f32 %v1384, %v1384
        %v1453 = vmul.f32 %v1390, %v1390
        %v1454 = vmul.f32 %v1396, %v1396
        %v1455 = vmul.f32 %v1402, %v1402
        %v1456 = vmul.f32 %v1408, %v1408
        %v1457 = vmul.f32 %v1414, %v1414
        %v1458 = vmul.f32 %v1420, %v1420
        %v1459 = vmul.f32 %v1426, %v1426
        %v1460 = vmul.f32 %v1432, %v1432
        %v1461 = vmul.f32 %v1438, %v1438
        %v1462 = vmul.f32 %v1444, %v1444
        %v1463 = vmul.f32 %v1447, -50.0
        %v1464 = vmul.f32 %v1448, -50.0
        %v1465 = vmul.f32 %v1449, -50.0
        %v1466 = vmul.f32 %v1450, -50.0
        %v1467 = vmul.f32 %v1451, -50.0
        %v1468 = vmul.f32 %v1452, -50.0
        %v1469 = vmul.f32 %v1453, -50.0
        %v1470 = vmul.f32 %v1454, -50.0
        %v1471 = vmul.f32 %v1455, -50.0
        %v1472 = vmul.f32 %v1456, -50.0
        %v1473 = vmul.f32 %v1457, -50.0
        %v1474 = vmul.f32 %v1458, -50.0
        %v1475 = vmul.f32 %v1459, -50.0
        %v1476 = vmul.f32 %v1460, -50.0
        %v1477 = vmul.f32 %v1461, -50.0
        %v1478 = vmul.f32 %v1462, -50.0
        %v1479 = vmul.f32 %v1463, 1.442695
        %v1480 = vpow.pop %v1479
        %v1481 = vmul.f32 %v1464, 1.442695
        %v1482 = vpow.pop %v1481
        %v1483 = vmul.f32 %v1465, 1.442695
        %v1484 = vpow.pop %v1483
        %v1485 = vmul.f32 %v1466, 1.442695
        %v1486 = vpow.pop %v1485
        %v1487 = vmul.f32 %v1467, 1.442695
        %v1488 = vpow.pop %v1487
        %v1489 = vmul.f32 %v1468, 1.442695
        %v1490 = vpow.pop %v1489
        %v1491 = vmul.f32 %v1469, 1.442695
        %v1492 = vpow.pop %v1491
        %v1493 = vmul.f32 %v1470, 1.442695
        %v1494 = vpow.pop %v1493
        %v1495 = vmul.f32 %v1471, 1.442695
        %v1496 = vpow.pop %v1495
        %v1497 = vmul.f32 %v1472, 1.442695
        %v1498 = vpow.pop %v1497
        %v1499 = vmul.f32 %v1473, 1.442695
        %v1500 = vpow.pop %v1499
        %v1501 = vmul.f32 %v1474, 1.442695
        %v1502 = vpow.pop %v1501
        %v1503 = vmul.f32 %v1475, 1.442695
        %v1504 = vpow.pop %v1503
        %v1505 = vmul.f32 %v1476, 1.442695
        %v1506 = vpow.pop %v1505
        %v1507 = vmul.f32 %v1477, 1.442695
        %v1508 = vpow.pop %v1507
        %v1509 = vmul.f32 %v1478, 1.442695
        %v1510 = vpow.pop %v1509
        %1511 = vst [vmem:[%s214] sm:$0xff] %v1480
        %1512 = vst [vmem:[%s214 + $0x8] sm:$0xff] %v1482
        %1513 = vst [vmem:[%s214 + $0x10] sm:$0xff] %v1484
        %1514 = vst [vmem:[%s214 + $0x18] sm:$0xff] %v1486
        %1515 = vst [vmem:[%s214 + $0x20] sm:$0xff] %v1488
        %1516 = vst [vmem:[%s214 + $0x28] sm:$0xff] %v1490
        %1517 = vst [vmem:[%s214 + $0x30] sm:$0xff] %v1492
        %1518 = vst [vmem:[%s214 + $0x38] sm:$0xff] %v1494
        %1519 = vst [vmem:[%s214 + $0x40] sm:$0xff] %v1496
        %1520 = vst [vmem:[%s214 + $0x48] sm:$0xff] %v1498
        %1521 = vst [vmem:[%s214 + $0x50] sm:$0xff] %v1500
        %1522 = vst [vmem:[%s214 + $0x58] sm:$0xff] %v1502
        %1523 = vst [vmem:[%s214 + $0x60] sm:$0xff] %v1504
        %1524 = vst [vmem:[%s214 + $0x68] sm:$0xff] %v1506
        %1525 = vst [vmem:[%s214 + $0x70] sm:$0xff] %v1508
        %1526 = vst [vmem:[%s214 + $0x78] sm:$0xff] %v1510
        %s1527 = sand.u32 %s117, 1
        %s1528 = scalar_lea.sflag [#allocation3], %s1527
        %s1529 = sand.u32 %s117, 1
        %s1530 = smul.addr %s1529, 128
        %s1531 = scalar_lea.vmem [#allocation2], %s1530
        // Predicated region
        $region33: #{tpu_custom_call.1} parent=31 // pred_check
          %p1532 = pneg %p127
        $region34: #{tpu_custom_call.1} parent=31 // pred_check_branch
          %1534 = sbr.rel (%p1532) target = $region36
        $region35: #{tpu_custom_call.1} parent=31 // pred_region
          %s1535 = smul.u32 16, %s21
          %s1536 = ssub.s32 38, %s1535
          %p1537 = scmp.lt.s32.totalorder %s1536, 16
          %s1538 = scalar_select %p1537, %s1536, 16
          %s1539 = smul.u32 128, %s1538
          %s1541 = ssub.s32 2048, %s1539
          %1542 = vsyncadd %s1528, %s1541
          %p1543 = scmp.ne.s32.totalorder 0, %s1539
          %s1544 = sadd.s32 %s22, %s1535
          %s1545 = smul.addr %s1544, 128
          %s1546 = scalar_lea.hbm %s3, %s1545
          %s1547 = smul.u32 8, %s1538
          %s1548 = sshll.u32 %s1531, 4
          %s1549 = int_to_ptr.vmem [resolvable:$true] %s1548
          %s1550 = sshll.u32 %s1547, 4
          %1554 = dma.vmem_to_hbm [thread:$0]  (%p1543), %s1549, %s1550, %s1546, %s1528, 128, 128, 8
        $region36: #{tpu_custom_call.1} parent=31 // pred_fallthru
          _
      $region32: #{tpu_custom_call.1} parent=5 // pred_fallthru
        _
      %p1555 = scmp.le.s32.totalorder 2, %s12
      // Predicated region
      $region37: #{tpu_custom_call.1} parent=5 // pred_check
        %p1556 = pneg %p1555
      $region38: #{tpu_custom_call.1} parent=5 // pred_check_branch
        %1558 = sbr.rel (%p1556) target = $region40
      $region39: #{tpu_custom_call.1} parent=5 // pred_region
        %s1559 = ssub.s32 %s12, 2
        // Predicated region
        $region41: #{tpu_custom_call.1} parent=39 // pred_check
          %p1560 = pneg %p133
        $region42: #{tpu_custom_call.1} parent=39 // pred_check_branch
          %1562 = sbr.rel (%p1560) target = $region44
        $region43: #{tpu_custom_call.1} parent=39 // pred_region
          %s1563 = sand.u32 %s118, 1
          %s1564 = scalar_lea.sflag [#allocation3], %s1563
          %s1565 = sand.u32 %s118, 1
          %s1566 = smul.addr %s1565, 128
          %s1567 = scalar_lea.vmem [#allocation2], %s1566
          %1568 = dma.done %s1564, 2048
        $region44: #{tpu_custom_call.1} parent=39 // pred_fallthru
          _
      $region40: #{tpu_custom_call.1} parent=5 // pred_fallthru
        _
    $region6: #{tpu_custom_call.1} parent=1 // loop_footer
      %s16 = sadd.s32 1, %s12
    $region7: #{tpu_custom_call.1} parent=1 // loop_footer_branch
      %11 = sbr.rel target = $region3
    $region8: #{tpu_custom_call.1} parent=1 // loop_exit
      _
    %1569 = vsyncpa [#allocation3], 1
    %s1570 = scalar_lea.sflag [#allocation3], 1
    %1571 = vsyncpa %s1570, 1

// kernel: tpu_custom_call.1
$region0: #{tpu_custom_call.1}
  #allocation0 [shape = 'u32[]', space=smem, size = 0x4, offset = 0x4, fixed_abs, tag = 'smem constant byte address 0x4 - core index']
  #allocation1 [shape = 'u32[144,128]{1,0:T(1,128)}', space=vmem, size = 0x12000, scoped, tag = 'internal scratch']
  %s0 = inlined_call_operand.vmem [shape: f32[300,32], index: 0, kind: input, shape index: {}]
  %s1 = inlined_call_operand.vmem [shape: f32[32,128], index: 1, kind: input, shape index: {}]
  %s2 = inlined_call_operand.vmem [shape: f32[1,128], index: 2, kind: input, shape index: {}]
  %s3 = inlined_call_operand.hbm [shape: f32[300,128], index: 3, kind: output, shape index: {}]
  %s4 = sld [smem:[#allocation0]]
  $region45: #{tpu_custom_call.1} parent=0
    _
  %s6 = ssub.s32 1, %s4
  %s7 = scalar_select 0, %s6, %s4
  $region1: #{tpu_custom_call.1} parent=0
    #allocation2 [shape = 'u8[131072]{0}', space=vmem, size = 0x20000, scoped, tag = 'output window, operand 0']
    #allocation3 [shape = 's32[2]{0}', space=sflag, size = 0x8, scoped, tag = 'scoped memory for tpu_custom_call.1']
    %8 = vsyncpa [#allocation3], 0
    %s9 = scalar_lea.sflag [#allocation3], 1
    %10 = vsyncpa %s9, 0
    loop: start=0, step=1, limit=5
    $region2: #{tpu_custom_call.1} parent=1 // loop_pre_header
      _
    $region3: #{tpu_custom_call.1} parent=1 // loop_header
      %s12 = sphi 0, %s16
      %p13 = scmp.ge.s32.totalorder %s12, 5
      %s19 = sphi 0, %s31
      %s20 = sphi 0, %s27
      %s21 = sphi 0, %s19
      %s22 = sphi 0, %s20
      %s23 = sphi 0, %s21
      %s24 = sphi 0, %s22
      %s34 = sphi 0, %s36
      %s37 = sphi 0, %s34
      %s38 = sphi 0, %s37
      %s54 = sphi 0, %s38
      %s60 = sphi 0, %s62
      %s63 = sphi 0, %s60
      %s64 = sphi 0, %s63
      %s80 = sphi 0, %s64
      %s86 = sphi 0, %s88
      %s89 = sphi 0, %s86
      %s90 = sphi 0, %s89
      %s106 = sphi 0, %s90
      %s114 = sphi 0, %s116
      %s117 = sphi 0, %s114
      %s118 = sphi 0, %s117
      %s134 = sphi 0, %s118
    $region4: #{tpu_custom_call.1} parent=1 // loop_header_branch
      %15 = sbr.rel (%p13) target = $region8
    $region5: #{tpu_custom_call.1} parent=1 // loop_body
      %s17 = ssub.s32 %s12, 1
      %s18 = ssub.s32 %s12, 2
      %s25 = sadd.s32 1, %s20
      %p26 = scmp.ge.s32.totalorder %s25, 1
      %s27 = scalar_select %p26, 0, %s25
      %s28 = sadd.s32 1, %s19
      %s29 = scalar_select %p26, %s28, %s19
      %p30 = scmp.ge.s32.totalorder %s29, 3
      %s31 = scalar_select %p30, 0, %s29
      %s32 = ssub.s32 %s19, %s31
      %p33 = scmp.eq.s32.totalorder %s32, 0
      %s35 = sadd.s32 %s34, 1
      %s36 = scalar_select %p33, %s34, %s35
      %p39 = pneg %p33
      %p40 = scmp.eq.s32.totalorder %s12, 2
      %p41 = por %p39, %p40
      %p42 = scmp.ne.s32.totalorder %s34, %s37
      %p43 = scmp.eq.s32.totalorder %s12, 0
      %p44 = por %p42, %p43
      %p45 = scmp.ne.s32.totalorder %s34, %s37
      %p46 = scmp.eq.s32.totalorder %s17, 2
      %p47 = por %p45, %p46
      %p48 = scmp.ne.s32.totalorder %s37, %s38
      %p49 = scmp.eq.s32.totalorder %s17, 0
      %p50 = por %p48, %p49
      %p51 = scmp.ne.s32.totalorder %s37, %s38
      %p52 = scmp.eq.s32.totalorder %s18, 2
      %p53 = por %p51, %p52
      %p55 = scmp.ne.s32.totalorder %s38, %s54
      %p56 = scmp.eq.s32.totalorder %s18, 0
      %p57 = por %p55, %p56
      %s58 = ssub.s32 %s20, %s27
      %p59 = scmp.eq.s32.totalorder %s58, 0
      %s61 = sadd.s32 %s60, 1
      %s62 = scalar_select %p59, %s60, %s61
      %p65 = pneg %p59
      %p66 = scmp.eq.s32.totalorder %s12, 2
      %p67 = por %p65, %p66
      %p68 = scmp.ne.s32.totalorder %s60, %s63
      %p69 = scmp.eq.s32.totalorder %s12, 0
      %p70 = por %p68, %p69
      %p71 = scmp.ne.s32.totalorder %s60, %s63
      %p72 = scmp.eq.s32.totalorder %s17, 2
      %p73 = por %p71, %p72
      %p74 = scmp.ne.s32.totalorder %s63, %s64
      %p75 = scmp.eq.s32.totalorder %s17, 0
      %p76 = por %p74, %p75
      %p77 = scmp.ne.s32.totalorder %s63, %s64
      %p78 = scmp.eq.s32.totalorder %s18, 2
      %p79 = por %p77, %p78
      %p81 = scmp.ne.s32.totalorder %s64, %s80
      %p82 = scmp.eq.s32.totalorder %s18, 0
      %p83 = por %p81, %p82
      %s84 = ssub.s32 %s20, %s27
      %p85 = scmp.eq.s32.totalorder %s84, 0
      %s87 = sadd.s32 %s86, 1
      %s88 = scalar_select %p85, %s86, %s87
      %p91 = pneg %p85
      %p92 = scmp.eq.s32.totalorder %s12, 2
      %p93 = por %p91, %p92
      %p94 = scmp.ne.s32.totalorder %s86, %s89
      %p95 = scmp.eq.s32.totalorder %s12, 0
      %p96 = por %p94, %p95
      %p97 = scmp.ne.s32.totalorder %s86, %s89
      %p98 = scmp.eq.s32.totalorder %s17, 2
      %p99 = por %p97, %p98
      %p100 = scmp.ne.s32.totalorder %s89, %s90
      %p101 = scmp.eq.s32.totalorder %s17, 0
      %p102 = por %p100, %p101
      %p103 = scmp.ne.s32.totalorder %s89, %s90
      %p104 = scmp.eq.s32.totalorder %s18, 2
      %p105 = por %p103, %p104
      %p107 = scmp.ne.s32.totalorder %s90, %s106
      %p108 = scmp.eq.s32.totalorder %s18, 0
      %p109 = por %p107, %p108
      %s110 = ssub.s32 %s19, %s31
      %s111 = ssub.s32 %s20, %s27
      %s112 = sor.u32 %s110, %s111
      %p113 = scmp.eq.s32.totalorder %s112, 0
      %s115 = sadd.s32 %s114, 1
      %s116 = scalar_select %p113, %s114, %s115
      %p119 = pneg %p113
      %p120 = scmp.eq.s32.totalorder %s12, 2
      %p121 = por %p119, %p120
      %p122 = scmp.ne.s32.totalorder %s114, %s117
      %p123 = scmp.eq.s32.totalorder %s12, 0
      %p124 = por %p122, %p123
      %p125 = scmp.ne.s32.totalorder %s114, %s117
      %p126 = scmp.eq.s32.totalorder %s17, 2
      %p127 = por %p125, %p126
      %p128 = scmp.ne.s32.totalorder %s117, %s118
      %p129 = scmp.eq.s32.totalorder %s17, 0
      %p130 = por %p128, %p129
      %p131 = scmp.ne.s32.totalorder %s117, %s118
      %p132 = scmp.eq.s32.totalorder %s18, 2
      %p133 = por %p131, %p132
      %p135 = scmp.ne.s32.totalorder %s118, %s134
      %p136 = scmp.eq.s32.totalorder %s18, 0
      %p137 = por %p135, %p136
      %p138 = scmp.le.s32.totalorder 1, %s12
      %p139 = scmp.lt.s32.totalorder %s12, 4
      %p140 = pnand %p138, %p139
      %p141 = pneg %p140
      // Predicated region
      $region9: #{tpu_custom_call.1} parent=5 // pred_check
        _
      $region10: #{tpu_custom_call.1} parent=5 // pred_check_branch
        %143 = sbr.rel (%p140) target = $region12
      $region11: #{tpu_custom_call.1} parent=5 // pred_region
        %s144 = ssub.s32 %s12, 1
        // Predicated region
        $region13: #{tpu_custom_call.1} parent=11 // pred_check
          %p145 = pneg %p76
        $region14: #{tpu_custom_call.1} parent=11 // pred_check_branch
          %147 = sbr.rel (%p145) target = $region16
        $region15: #{tpu_custom_call.1} parent=11 // pred_region
          %p148 = scmp.lt.s32.totalorder %s22, 0
          %s149 = scalar_select %p148, %s22, 0
          %s150 = smul.addr %s149, 8
          %s151 = scalar_lea.vmem %s1, %s150
        $region16: #{tpu_custom_call.1} parent=11 // pred_fallthru
          _
        // Predicated region
        $region17: #{tpu_custom_call.1} parent=11 // pred_check
          %p152 = pneg %p102
        $region18: #{tpu_custom_call.1} parent=11 // pred_check_branch
          %154 = sbr.rel (%p152) target = $region20
        $region19: #{tpu_custom_call.1} parent=11 // pred_region
          %p155 = scmp.lt.s32.totalorder %s22, 0
          %s156 = scalar_select %p155, %s22, 0
          %s157 = scalar_lea.vmem %s2, %s156
        $region20: #{tpu_custom_call.1} parent=11 // pred_fallthru
          _
      $region12: #{tpu_custom_call.1} parent=5 // pred_fallthru
        _
      %p158 = scmp.lt.s32.totalorder %s12, 3
      // Predicated region
      $region21: #{tpu_custom_call.1} parent=5 // pred_check
        %p159 = pneg %p158
      $region22: #{tpu_custom_call.1} parent=5 // pred_check_branch
        %161 = sbr.rel (%p159) target = $region24
      $region23: #{tpu_custom_call.1} parent=5 // pred_region
        // Predicated region
        $region25: #{tpu_custom_call.1} parent=23 // pred_check
          %p162 = pneg %p44
        $region26: #{tpu_custom_call.1} parent=23 // pred_check_branch
          %164 = sbr.rel (%p162) target = $region28
        $region27: #{tpu_custom_call.1} parent=23 // pred_region
          %s165 = smul.u32 16, %s19
          %s166 = ssub.s32 38, %s165
          %p167 = scmp.lt.s32.totalorder %s166, 16
          %s168 = scalar_select %p167, %s166, 16
          %s169 = smul.u32 128, %s168
          %p170 = scmp.lt.s32.totalorder %s165, 37
          %s171 = scalar_select %p170, %s165, 37
          %s172 = smul.addr %s171, 8
          %s173 = scalar_lea.vmem %s0, %s172
          %s174 = smul.u32 16, %s19
          %s175 = ssub.s32 38, %s174
          %p176 = scmp.lt.s32.totalorder %s175, 16
          %s177 = scalar_select %p176, %s175, 16
          %s178 = smul.u32 128, %s177
        $region28: #{tpu_custom_call.1} parent=23 // pred_fallthru
          _
      $region24: #{tpu_custom_call.1} parent=5 // pred_fallthru
        _
      %p179 = scmp.le.s32.totalorder 1, %s12
      %p180 = scmp.lt.s32.totalorder %s12, 4
      %p181 = pnand %p179, %p180
      %p182 = pneg %p181
      // Predicated region
      $region29: #{tpu_custom_call.1} parent=5 // pred_check
        _
      $region30: #{tpu_custom_call.1} parent=5 // pred_check_branch
        %184 = sbr.rel (%p181) target = $region32
      $region31: #{tpu_custom_call.1} parent=5 // pred_region
        %s185 = ssub.s32 %s12, 1
        %s186 = smul.u32 16, %s21
        %s187 = ssub.s32 38, %s186
        %p188 = scmp.lt.s32.totalorder %s187, 16
        %s189 = scalar_select %p188, %s187, 16
        %s190 = smul.u32 128, %s189
        %p191 = scmp.lt.s32.totalorder %s186, 37
        %s192 = scalar_select %p191, %s186, 37
        %s193 = smul.addr %s192, 8
        %s194 = scalar_lea.vmem %s0, %s193
        %p195 = pneg %p50
        %p196 = pneg %p47
        %p197 = scmp.lt.s32.totalorder %s22, 0
        %s198 = scalar_select %p197, %s22, 0
        %s199 = smul.addr %s198, 8
        %s200 = scalar_lea.vmem %s1, %s199
        %p201 = pneg %p76
        %p202 = pneg %p73
        %p203 = scmp.lt.s32.totalorder %s22, 0
        %s204 = scalar_select %p203, %s22, 0
        %s205 = scalar_lea.vmem %s2, %s204
        %p206 = pneg %p102
        %p207 = pneg %p99
        %p208 = pneg %p130
        %p209 = pneg %p127
        %s210 = sand.u32 %s117, 1
        %s211 = scalar_lea.sflag [#allocation3], %s210
        %s212 = sand.u32 %s117, 1
        %s213 = smul.addr %s212, 128
        %s214 = scalar_lea.vmem [#allocation2], %s213
        %s215 = smul.u32 16, %s21
        %s216 = ssub.s32 38, %s215
        %p217 = scmp.lt.s32.totalorder %s216, 16
        %s218 = scalar_select %p217, %s216, 16
        %s219 = smul.u32 128, %s218
        %p220 = scmp.lt.s32.totalorder %s215, 37
        %s221 = scalar_select %p220, %s215, 37
        %s222 = smul.addr %s221, 8
        %s223 = scalar_lea.vmem %s0, %s222
        %s224 = smul.u32 16, %s21
        %s225 = ssub.s32 38, %s224
        %p226 = scmp.lt.s32.totalorder %s225, 16
        %s227 = scalar_select %p226, %s225, 16
        %s228 = smul.u32 128, %s227
        %p229 = scmp.lt.s32.totalorder %s22, 0
        %s230 = scalar_select %p229, %s22, 0
        %s231 = smul.addr %s230, 8
        %s232 = scalar_lea.vmem %s1, %s231
        %p233 = scmp.lt.s32.totalorder %s22, 0
        %s234 = scalar_select %p233, %s22, 0
        %s235 = scalar_lea.vmem %s2, %s234
        %s236 = smul.u32 16, %s21
        %s237 = ssub.s32 38, %s236
        %p238 = scmp.lt.s32.totalorder %s237, 16
        %s239 = scalar_select %p238, %s237, 16
        %s240 = smul.u32 128, %s239
        %v241 = vld [vmem:[%s223] sm:$0xff]
        %v242 = vld [vmem:[%s223 + $0x8] sm:$0xff]
        %v243 = vld [vmem:[%s223 + $0x10] sm:$0xff]
        %v244 = vld [vmem:[%s223 + $0x18] sm:$0xff]
        %v245 = vld [vmem:[%s223 + $0x20] sm:$0xff]
        %v246 = vld [vmem:[%s223 + $0x28] sm:$0xff]
        %v247 = vld [vmem:[%s223 + $0x30] sm:$0xff]
        %v248 = vld [vmem:[%s223 + $0x38] sm:$0xff]
        %v249 = vld [vmem:[%s223 + $0x40] sm:$0xff]
        %v250 = vld [vmem:[%s223 + $0x48] sm:$0xff]
        %v251 = vld [vmem:[%s223 + $0x50] sm:$0xff]
        %v252 = vld [vmem:[%s223 + $0x58] sm:$0xff]
        %v253 = vld [vmem:[%s223 + $0x60] sm:$0xff]
        %v254 = vld [vmem:[%s223 + $0x68] sm:$0xff]
        %v255 = vld [vmem:[%s223 + $0x70] sm:$0xff]
        %v256 = vld [vmem:[%s223 + $0x78] sm:$0xff]
        %v257 = vld [vmem:[%s232] sm:$0xff]
        %v258 = vld [vmem:[%s232 + $0x8] sm:$0xff]
        %v259 = vld [vmem:[%s232 + $0x10] sm:$0xff]
        %v260 = vld [vmem:[%s232 + $0x18] sm:$0xff]
        %v261 = vld [vmem:[%s235] sm:$0x1]
        %v263 = vlaneseq
        %v264 = vshrl.u32 %v263, 7
        %v265 = vsub.s32 0, %v264
        %v266 = vrot.slane %v261, %v265
        %vm268 = vcmask 261120
        %v270 = vsel %vm268, %v241, 0
        %v273 = vsel %vm268, %v242, 0
        %v276 = vsel %vm268, %v243, 0
        %v279 = vsel %vm268, %v244, 0
        %v282 = vsel %vm268, %v245, 0
        %v285 = vsel %vm268, %v246, 0
        %v288 = vsel %vm268, %v247, 0
        %v291 = vsel %vm268, %v248, 0
        %v294 = vsel %vm268, %v249, 0
        %v297 = vsel %vm268, %v250, 0
        %v300 = vsel %vm268, %v251, 0
        %v303 = vsel %vm268, %v252, 0
        %v306 = vsel %vm268, %v253, 0
        %v309 = vsel %vm268, %v254, 0
        %v312 = vsel %vm268, %v255, 0
        %v315 = vsel %vm268, %v256, 0
        %317 = vmatprep.subr.mxu0 0.0
        %318 = vmatpush1.msra.mxu0 0.0
        %319 = vmatprep.subr.mxu0 0.0
        %320 = vmatpush1.msra.mxu0 0.0
        %321 = vmatprep.subr.mxu0 0.0
        %322 = vmatpush1.msra.mxu0 0.0
        %323 = vmatprep.subr.mxu0 0.0
        %324 = vmatpush1.msra.mxu0 0.0
        %325 = vmatprep.subr.mxu0 0.0
        %326 = vmatpush1.msra.mxu0 0.0
        %327 = vmatprep.subr.mxu0 0.0
        %328 = vmatpush1.msra.mxu0 0.0
        %329 = vmatprep.subr.mxu0 0.0
        %330 = vmatpush1.msra.mxu0 0.0
        %331 = vmatprep.subr.mxu0 0.0
        %332 = vmatpush1.msra.mxu0 0.0
        %333 = vmatprep.subr.mxu0 0.0
        %334 = vmatpush1.msra.mxu0 0.0
        %335 = vmatprep.subr.mxu0 0.0
        %336 = vmatpush1.msra.mxu0 0.0
        %337 = vmatprep.subr.mxu0 0.0
        %338 = vmatpush1.msra.mxu0 0.0
        %339 = vmatprep.subr.mxu0 0.0
        %340 = vmatpush1.msra.mxu0 0.0
        %341 = vmatprep.subr.mxu0 0.0
        %v342 = vand.u32 %v260, 4294901760
        %343 = vmatpush1.msra.mxu0 %v342
        %344 = vmatprep.subr.mxu0 0.0
        %v345 = vand.u32 %v259, 4294901760
        %346 = vmatpush1.msra.mxu0 %v345
        %347 = vmatprep.subr.mxu0 0.0
        %v348 = vand.u32 %v258, 4294901760
        %349 = vmatpush1.msra.mxu0 %v348
        %350 = vmatprep.subr.mxu0 0.0
        %v351 = vand.u32 %v257, 4294901760
        %352 = vmatpush1.msra.mxu0 %v351
        %353 = vmatprep.subr.mxu0 0.0
        %354 = vmatpush2.msra.mxu0 0.0
        %355 = vmatprep.subr.mxu0 0.0
        %356 = vmatpush2.msra.mxu0 0.0
        %357 = vmatprep.subr.mxu0 0.0
        %358 = vmatpush2.msra.mxu0 0.0
        %359 = vmatprep.subr.mxu0 0.0
        %360 = vmatpush2.msra.mxu0 0.0
        %361 = vmatprep.subr.mxu0 0.0
        %362 = vmatpush2.msra.mxu0 0.0
        %363 = vmatprep.subr.mxu0 0.0
        %364 = vmatpush2.msra.mxu0 0.0
        %365 = vmatprep.subr.mxu0 0.0
        %366 = vmatpush2.msra.mxu0 0.0
        %367 = vmatprep.subr.mxu0 0.0
        %368 = vmatpush2.msra.mxu0 0.0
        %369 = vmatprep.subr.mxu0 0.0
        %370 = vmatpush2.msra.mxu0 0.0
        %371 = vmatprep.subr.mxu0 0.0
        %372 = vmatpush2.msra.mxu0 0.0
        %373 = vmatprep.subr.mxu0 0.0
        %374 = vmatpush2.msra.mxu0 0.0
        %375 = vmatprep.subr.mxu0 0.0
        %376 = vmatpush2.msra.mxu0 0.0
        %377 = vmatprep.subr.mxu0 0.0
        %378 = vmatpush2.msra.mxu0 0.0
        %379 = vmatprep.subr.mxu0 0.0
        %380 = vmatpush2.msra.mxu0 0.0
        %381 = vmatprep.subr.mxu0 0.0
        %382 = vmatpush2.msra.mxu0 0.0
        %383 = vmatprep.subr.mxu0 0.0
        %384 = vmatpush2.msra.mxu0 0.0
        %385 = vmatprep.mubr.f32.mxu0 0.0
        %v386 = vand.u32 %v270, 4294901760
        %v387 = vsub.f32 %v270, %v386
        %v388 = vand.u32 %v387, 4294901760
        %v389 = vsub.f32 %v387, %v388
        %v390 = vand.u32 %v389, 4294901760
        %391 = vmatmul.mubr.f32.gmra.mxu0 %v390
        %v392 = vpop.f32.mrf.mxu0
        %v393 = vadd.f32 %v266, %v392
        %v394 = vpop.f32.mrf.mxu0
        %395 = vmatprep.mubr.f32.mxu0 0.0
        %v396 = vand.u32 %v273, 4294901760
        %v397 = vsub.f32 %v273, %v396
        %v398 = vand.u32 %v397, 4294901760
        %v399 = vsub.f32 %v397, %v398
        %v400 = vand.u32 %v399, 4294901760
        %401 = vmatmul.mubr.f32.gmra.mxu0 %v400
        %v402 = vpop.f32.mrf.mxu0
        %v403 = vadd.f32 %v266, %v402
        %v404 = vpop.f32.mrf.mxu0
        %405 = vmatprep.mubr.f32.mxu0 0.0
        %v406 = vand.u32 %v276, 4294901760
        %v407 = vsub.f32 %v276, %v406
        %v408 = vand.u32 %v407, 4294901760
        %v409 = vsub.f32 %v407, %v408
        %v410 = vand.u32 %v409, 4294901760
        %411 = vmatmul.mubr.f32.gmra.mxu0 %v410
        %v412 = vpop.f32.mrf.mxu0
        %v413 = vadd.f32 %v266, %v412
        %v414 = vpop.f32.mrf.mxu0
        %415 = vmatprep.mubr.f32.mxu0 0.0
        %v416 = vand.u32 %v279, 4294901760
        %v417 = vsub.f32 %v279, %v416
        %v418 = vand.u32 %v417, 4294901760
        %v419 = vsub.f32 %v417, %v418
        %v420 = vand.u32 %v419, 4294901760
        %421 = vmatmul.mubr.f32.gmra.mxu0 %v420
        %v422 = vpop.f32.mrf.mxu0
        %v423 = vadd.f32 %v266, %v422
        %v424 = vpop.f32.mrf.mxu0
        %425 = vmatprep.mubr.f32.mxu0 0.0
        %v426 = vand.u32 %v282, 4294901760
        %v427 = vsub.f32 %v282, %v426
        %v428 = vand.u32 %v427, 4294901760
        %v429 = vsub.f32 %v427, %v428
        %v430 = vand.u32 %v429, 4294901760
        %431 = vmatmul.mubr.f32.gmra.mxu0 %v430
        %v432 = vpop.f32.mrf.mxu0
        %v433 = vadd.f32 %v266, %v432
        %v434 = vpop.f32.mrf.mxu0
        %435 = vmatprep.mubr.f32.mxu0 0.0
        %v436 = vand.u32 %v285, 4294901760
        %v437 = vsub.f32 %v285, %v436
        %v438 = vand.u32 %v437, 4294901760
        %v439 = vsub.f32 %v437, %v438
        %v440 = vand.u32 %v439, 4294901760
        %441 = vmatmul.mubr.f32.gmra.mxu0 %v440
        %v442 = vpop.f32.mrf.mxu0
        %v443 = vadd.f32 %v266, %v442
        %v444 = vpop.f32.mrf.mxu0
        %445 = vmatprep.mubr.f32.mxu0 0.0
        %v446 = vand.u32 %v288, 4294901760
        %v447 = vsub.f32 %v288, %v446
        %v448 = vand.u32 %v447, 4294901760
        %v449 = vsub.f32 %v447, %v448
        %v450 = vand.u32 %v449, 4294901760
        %451 = vmatmul.mubr.f32.gmra.mxu0 %v450
        %v452 = vpop.f32.mrf.mxu0
        %v453 = vadd.f32 %v266, %v452
        %v454 = vpop.f32.mrf.mxu0
        %455 = vmatprep.mubr.f32.mxu0 0.0
        %v456 = vand.u32 %v291, 4294901760
        %v457 = vsub.f32 %v291, %v456
        %v458 = vand.u32 %v457, 4294901760
        %v459 = vsub.f32 %v457, %v458
        %v460 = vand.u32 %v459, 4294901760
        %461 = vmatmul.mubr.f32.gmra.mxu0 %v460
        %v462 = vpop.f32.mrf.mxu0
        %v463 = vadd.f32 %v266, %v462
        %v464 = vpop.f32.mrf.mxu0
        %465 = vmatprep.mubr.f32.mxu0 0.0
        %v466 = vand.u32 %v294, 4294901760
        %v467 = vsub.f32 %v294, %v466
        %v468 = vand.u32 %v467, 4294901760
        %v469 = vsub.f32 %v467, %v468
        %v470 = vand.u32 %v469, 4294901760
        %471 = vmatmul.mubr.f32.gmra.mxu0 %v470
        %v472 = vpop.f32.mrf.mxu0
        %v473 = vadd.f32 %v266, %v472
        %v474 = vpop.f32.mrf.mxu0
        %475 = vmatprep.mubr.f32.mxu0 0.0
        %v476 = vand.u32 %v297, 4294901760
        %v477 = vsub.f32 %v297, %v476
        %v478 = vand.u32 %v477, 4294901760
        %v479 = vsub.f32 %v477, %v478
        %v480 = vand.u32 %v479, 4294901760
        %481 = vmatmul.mubr.f32.gmra.mxu0 %v480
        %v482 = vpop.f32.mrf.mxu0
        %v483 = vadd.f32 %v266, %v482
        %v484 = vpop.f32.mrf.mxu0
        %485 = vmatprep.mubr.f32.mxu0 0.0
        %v486 = vand.u32 %v300, 4294901760
        %v487 = vsub.f32 %v300, %v486
        %v488 = vand.u32 %v487, 4294901760
        %v489 = vsub.f32 %v487, %v488
        %v490 = vand.u32 %v489, 4294901760
        %491 = vmatmul.mubr.f32.gmra.mxu0 %v490
        %v492 = vpop.f32.mrf.mxu0
        %v493 = vadd.f32 %v266, %v492
        %v494 = vpop.f32.mrf.mxu0
        %495 = vmatprep.mubr.f32.mxu0 0.0
        %v496 = vand.u32 %v303, 4294901760
        %v497 = vsub.f32 %v303, %v496
        %v498 = vand.u32 %v497, 4294901760
        %v499 = vsub.f32 %v497, %v498
        %v500 = vand.u32 %v499, 4294901760
        %501 = vmatmul.mubr.f32.gmra.mxu0 %v500
        %v502 = vpop.f32.mrf.mxu0
        %v503 = vadd.f32 %v266, %v502
        %v504 = vpop.f32.mrf.mxu0
        %505 = vmatprep.mubr.f32.mxu0 0.0
        %v506 = vand.u32 %v306, 4294901760
        %v507 = vsub.f32 %v306, %v506
        %v508 = vand.u32 %v507, 4294901760
        %v509 = vsub.f32 %v507, %v508
        %v510 = vand.u32 %v509, 4294901760
        %511 = vmatmul.mubr.f32.gmra.mxu0 %v510
        %v512 = vpop.f32.mrf.mxu0
        %v513 = vadd.f32 %v266, %v512
        %v514 = vpop.f32.mrf.mxu0
        %515 = vmatprep.mubr.f32.mxu0 0.0
        %v516 = vand.u32 %v309, 4294901760
        %v517 = vsub.f32 %v309, %v516
        %v518 = vand.u32 %v517, 4294901760
        %v519 = vsub.f32 %v517, %v518
        %v520 = vand.u32 %v519, 4294901760
        %521 = vmatmul.mubr.f32.gmra.mxu0 %v520
        %v522 = vpop.f32.mrf.mxu0
        %v523 = vadd.f32 %v266, %v522
        %v524 = vpop.f32.mrf.mxu0
        %525 = vmatprep.mubr.f32.mxu0 0.0
        %v526 = vand.u32 %v312, 4294901760
        %v527 = vsub.f32 %v312, %v526
        %v528 = vand.u32 %v527, 4294901760
        %v529 = vsub.f32 %v527, %v528
        %v530 = vand.u32 %v529, 4294901760
        %531 = vmatmul.mubr.f32.gmra.mxu0 %v530
        %v532 = vpop.f32.mrf.mxu0
        %v533 = vadd.f32 %v266, %v532
        %v534 = vpop.f32.mrf.mxu0
        %535 = vmatprep.mubr.f32.mxu0 0.0
        %v536 = vand.u32 %v315, 4294901760
        %v537 = vsub.f32 %v315, %v536
        %v538 = vand.u32 %v537, 4294901760
        %v539 = vsub.f32 %v537, %v538
        %v540 = vand.u32 %v539, 4294901760
        %541 = vmatmul.mubr.f32.gmra.mxu0 %v540
        %v542 = vpop.f32.mrf.mxu0
        %v543 = vadd.f32 %v266, %v542
        %v544 = vpop.f32.mrf.mxu0
        %545 = vdwg.mxu0
        %546 = vmatprep.subr.mxu0 0.0
        %547 = vmatpush1.msra.mxu0 0.0
        %548 = vmatprep.subr.mxu0 0.0
        %549 = vmatpush1.msra.mxu0 0.0
        %550 = vmatprep.subr.mxu0 0.0
        %551 = vmatpush1.msra.mxu0 0.0
        %552 = vmatprep.subr.mxu0 0.0
        %553 = vmatpush1.msra.mxu0 0.0
        %554 = vmatprep.subr.mxu0 0.0
        %555 = vmatpush1.msra.mxu0 0.0
        %556 = vmatprep.subr.mxu0 0.0
        %557 = vmatpush1.msra.mxu0 0.0
        %558 = vmatprep.subr.mxu0 0.0
        %559 = vmatpush1.msra.mxu0 0.0
        %560 = vmatprep.subr.mxu0 0.0
        %561 = vmatpush1.msra.mxu0 0.0
        %562 = vmatprep.subr.mxu0 0.0
        %563 = vmatpush1.msra.mxu0 0.0
        %564 = vmatprep.subr.mxu0 0.0
        %565 = vmatpush1.msra.mxu0 0.0
        %566 = vmatprep.subr.mxu0 0.0
        %567 = vmatpush1.msra.mxu0 0.0
        %568 = vmatprep.subr.mxu0 0.0
        %569 = vmatpush1.msra.mxu0 0.0
        %570 = vmatprep.subr.mxu0 0.0
        %v571 = vand.u32 %v260, 4294901760
        %v572 = vsub.f32 %v260, %v571
        %v573 = vand.u32 %v572, 4294901760
        %v574 = vsub.f32 %v572, %v573
        %v575 = vand.u32 %v574, 4294901760
        %576 = vmatpush1.msra.mxu0 %v575
        %577 = vmatprep.subr.mxu0 0.0
        %v578 = vand.u32 %v259, 4294901760
        %v579 = vsub.f32 %v259, %v578
        %v580 = vand.u32 %v579, 4294901760
        %v581 = vsub.f32 %v579, %v580
        %v582 = vand.u32 %v581, 4294901760
        %583 = vmatpush1.msra.mxu0 %v582
        %584 = vmatprep.subr.mxu0 0.0
        %v585 = vand.u32 %v258, 4294901760
        %v586 = vsub.f32 %v258, %v585
        %v587 = vand.u32 %v586, 4294901760
        %v588 = vsub.f32 %v586, %v587
        %v589 = vand.u32 %v588, 4294901760
        %590 = vmatpush1.msra.mxu0 %v589
        %591 = vmatprep.subr.mxu0 0.0
        %v592 = vand.u32 %v257, 4294901760
        %v593 = vsub.f32 %v257, %v592
        %v594 = vand.u32 %v593, 4294901760
        %v595 = vsub.f32 %v593, %v594
        %v596 = vand.u32 %v595, 4294901760
        %597 = vmatpush1.msra.mxu0 %v596
        %598 = vmatprep.subr.mxu0 0.0
        %599 = vmatpush2.msra.mxu0 0.0
        %600 = vmatprep.subr.mxu0 0.0
        %601 = vmatpush2.msra.mxu0 0.0
        %602 = vmatprep.subr.mxu0 0.0
        %603 = vmatpush2.msra.mxu0 0.0
        %604 = vmatprep.subr.mxu0 0.0
        %605 = vmatpush2.msra.mxu0 0.0
        %606 = vmatprep.subr.mxu0 0.0
        %607 = vmatpush2.msra.mxu0 0.0
        %608 = vmatprep.subr.mxu0 0.0
        %609 = vmatpush2.msra.mxu0 0.0
        %610 = vmatprep.subr.mxu0 0.0
        %611 = vmatpush2.msra.mxu0 0.0
        %612 = vmatprep.subr.mxu0 0.0
        %613 = vmatpush2.msra.mxu0 0.0
        %614 = vmatprep.subr.mxu0 0.0
        %615 = vmatpush2.msra.mxu0 0.0
        %616 = vmatprep.subr.mxu0 0.0
        %617 = vmatpush2.msra.mxu0 0.0
        %618 = vmatprep.subr.mxu0 0.0
        %619 = vmatpush2.msra.mxu0 0.0
        %620 = vmatprep.subr.mxu0 0.0
        %621 = vmatpush2.msra.mxu0 0.0
        %622 = vmatprep.subr.mxu0 0.0
        %623 = vmatpush2.msra.mxu0 0.0
        %624 = vmatprep.subr.mxu0 0.0
        %625 = vmatpush2.msra.mxu0 0.0
        %626 = vmatprep.subr.mxu0 0.0
        %627 = vmatpush2.msra.mxu0 0.0
        %628 = vmatprep.subr.mxu0 0.0
        %629 = vmatpush2.msra.mxu0 0.0
        %630 = vmatprep.mubr.f32.mxu0 0.0
        %v631 = vand.u32 %v270, 4294901760
        %632 = vmatmul.mubr.f32.gmra.mxu0 %v631
        %v633 = vpop.f32.mrf.mxu0
        %v634 = vadd.f32 %v393, %v633
        %v635 = vpop.f32.mrf.mxu0
        %636 = vmatprep.mubr.f32.mxu0 0.0
        %v637 = vand.u32 %v273, 4294901760
        %638 = vmatmul.mubr.f32.gmra.mxu0 %v637
        %v639 = vpop.f32.mrf.mxu0
        %v640 = vadd.f32 %v403, %v639
        %v641 = vpop.f32.mrf.mxu0
        %642 = vmatprep.mubr.f32.mxu0 0.0
        %v643 = vand.u32 %v276, 4294901760
        %644 = vmatmul.mubr.f32.gmra.mxu0 %v643
        %v645 = vpop.f32.mrf.mxu0
        %v646 = vadd.f32 %v413, %v645
        %v647 = vpop.f32.mrf.mxu0
        %648 = vmatprep.mubr.f32.mxu0 0.0
        %v649 = vand.u32 %v279, 4294901760
        %650 = vmatmul.mubr.f32.gmra.mxu0 %v649
        %v651 = vpop.f32.mrf.mxu0
        %v652 = vadd.f32 %v423, %v651
        %v653 = vpop.f32.mrf.mxu0
        %654 = vmatprep.mubr.f32.mxu0 0.0
        %v655 = vand.u32 %v282, 4294901760
        %656 = vmatmul.mubr.f32.gmra.mxu0 %v655
        %v657 = vpop.f32.mrf.mxu0
        %v658 = vadd.f32 %v433, %v657
        %v659 = vpop.f32.mrf.mxu0
        %660 = vmatprep.mubr.f32.mxu0 0.0
        %v661 = vand.u32 %v285, 4294901760
        %662 = vmatmul.mubr.f32.gmra.mxu0 %v661
        %v663 = vpop.f32.mrf.mxu0
        %v664 = vadd.f32 %v443, %v663
        %v665 = vpop.f32.mrf.mxu0
        %666 = vmatprep.mubr.f32.mxu0 0.0
        %v667 = vand.u32 %v288, 4294901760
        %668 = vmatmul.mubr.f32.gmra.mxu0 %v667
        %v669 = vpop.f32.mrf.mxu0
        %v670 = vadd.f32 %v453, %v669
        %v671 = vpop.f32.mrf.mxu0
        %672 = vmatprep.mubr.f32.mxu0 0.0
        %v673 = vand.u32 %v291, 4294901760
        %674 = vmatmul.mubr.f32.gmra.mxu0 %v673
        %v675 = vpop.f32.mrf.mxu0
        %v676 = vadd.f32 %v463, %v675
        %v677 = vpop.f32.mrf.mxu0
        %678 = vmatprep.mubr.f32.mxu0 0.0
        %v679 = vand.u32 %v294, 4294901760
        %680 = vmatmul.mubr.f32.gmra.mxu0 %v679
        %v681 = vpop.f32.mrf.mxu0
        %v682 = vadd.f32 %v473, %v681
        %v683 = vpop.f32.mrf.mxu0
        %684 = vmatprep.mubr.f32.mxu0 0.0
        %v685 = vand.u32 %v297, 4294901760
        %686 = vmatmul.mubr.f32.gmra.mxu0 %v685
        %v687 = vpop.f32.mrf.mxu0
        %v688 = vadd.f32 %v483, %v687
        %v689 = vpop.f32.mrf.mxu0
        %690 = vmatprep.mubr.f32.mxu0 0.0
        %v691 = vand.u32 %v300, 4294901760
        %692 = vmatmul.mubr.f32.gmra.mxu0 %v691
        %v693 = vpop.f32.mrf.mxu0
        %v694 = vadd.f32 %v493, %v693
        %v695 = vpop.f32.mrf.mxu0
        %696 = vmatprep.mubr.f32.mxu0 0.0
        %v697 = vand.u32 %v303, 4294901760
        %698 = vmatmul.mubr.f32.gmra.mxu0 %v697
        %v699 = vpop.f32.mrf.mxu0
        %v700 = vadd.f32 %v503, %v699
        %v701 = vpop.f32.mrf.mxu0
        %702 = vmatprep.mubr.f32.mxu0 0.0
        %v703 = vand.u32 %v306, 4294901760
        %704 = vmatmul.mubr.f32.gmra.mxu0 %v703
        %v705 = vpop.f32.mrf.mxu0
        %v706 = vadd.f32 %v513, %v705
        %v707 = vpop.f32.mrf.mxu0
        %708 = vmatprep.mubr.f32.mxu0 0.0
        %v709 = vand.u32 %v309, 4294901760
        %710 = vmatmul.mubr.f32.gmra.mxu0 %v709
        %v711 = vpop.f32.mrf.mxu0
        %v712 = vadd.f32 %v523, %v711
        %v713 = vpop.f32.mrf.mxu0
        %714 = vmatprep.mubr.f32.mxu0 0.0
        %v715 = vand.u32 %v312, 4294901760
        %716 = vmatmul.mubr.f32.gmra.mxu0 %v715
        %v717 = vpop.f32.mrf.mxu0
        %v718 = vadd.f32 %v533, %v717
        %v719 = vpop.f32.mrf.mxu0
        %720 = vmatprep.mubr.f32.mxu0 0.0
        %v721 = vand.u32 %v315, 4294901760
        %722 = vmatmul.mubr.f32.gmra.mxu0 %v721
        %v723 = vpop.f32.mrf.mxu0
        %v724 = vadd.f32 %v543, %v723
        %v725 = vpop.f32.mrf.mxu0
        %726 = vdwg.mxu0
        %727 = vmatprep.subr.mxu0 0.0
        %728 = vmatpush1.msra.mxu0 0.0
        %729 = vmatprep.subr.mxu0 0.0
        %730 = vmatpush1.msra.mxu0 0.0
        %731 = vmatprep.subr.mxu0 0.0
        %732 = vmatpush1.msra.mxu0 0.0
        %733 = vmatprep.subr.mxu0 0.0
        %734 = vmatpush1.msra.mxu0 0.0
        %735 = vmatprep.subr.mxu0 0.0
        %736 = vmatpush1.msra.mxu0 0.0
        %737 = vmatprep.subr.mxu0 0.0
        %738 = vmatpush1.msra.mxu0 0.0
        %739 = vmatprep.subr.mxu0 0.0
        %740 = vmatpush1.msra.mxu0 0.0
        %741 = vmatprep.subr.mxu0 0.0
        %742 = vmatpush1.msra.mxu0 0.0
        %743 = vmatprep.subr.mxu0 0.0
        %744 = vmatpush1.msra.mxu0 0.0
        %745 = vmatprep.subr.mxu0 0.0
        %746 = vmatpush1.msra.mxu0 0.0
        %747 = vmatprep.subr.mxu0 0.0
        %748 = vmatpush1.msra.mxu0 0.0
        %749 = vmatprep.subr.mxu0 0.0
        %750 = vmatpush1.msra.mxu0 0.0
        %751 = vmatprep.subr.mxu0 0.0
        %v752 = vand.u32 %v260, 4294901760
        %v753 = vsub.f32 %v260, %v752
        %754 = vmatpush1.msra.mxu0 %v753
        %755 = vmatprep.subr.mxu0 0.0
        %v756 = vand.u32 %v259, 4294901760
        %v757 = vsub.f32 %v259, %v756
        %758 = vmatpush1.msra.mxu0 %v757
        %759 = vmatprep.subr.mxu0 0.0
        %v760 = vand.u32 %v258, 4294901760
        %v761 = vsub.f32 %v258, %v760
        %762 = vmatpush1.msra.mxu0 %v761
        %763 = vmatprep.subr.mxu0 0.0
        %v764 = vand.u32 %v257, 4294901760
        %v765 = vsub.f32 %v257, %v764
        %766 = vmatpush1.msra.mxu0 %v765
        %767 = vmatprep.subr.mxu0 0.0
        %768 = vmatpush2.msra.mxu0 0.0
        %769 = vmatprep.subr.mxu0 0.0
        %770 = vmatpush2.msra.mxu0 0.0
        %771 = vmatprep.subr.mxu0 0.0
        %772 = vmatpush2.msra.mxu0 0.0
        %773 = vmatprep.subr.mxu0 0.0
        %774 = vmatpush2.msra.mxu0 0.0
        %775 = vmatprep.subr.mxu0 0.0
        %776 = vmatpush2.msra.mxu0 0.0
        %777 = vmatprep.subr.mxu0 0.0
        %778 = vmatpush2.msra.mxu0 0.0
        %779 = vmatprep.subr.mxu0 0.0
        %780 = vmatpush2.msra.mxu0 0.0
        %781 = vmatprep.subr.mxu0 0.0
        %782 = vmatpush2.msra.mxu0 0.0
        %783 = vmatprep.subr.mxu0 0.0
        %784 = vmatpush2.msra.mxu0 0.0
        %785 = vmatprep.subr.mxu0 0.0
        %786 = vmatpush2.msra.mxu0 0.0
        %787 = vmatprep.subr.mxu0 0.0
        %788 = vmatpush2.msra.mxu0 0.0
        %789 = vmatprep.subr.mxu0 0.0
        %790 = vmatpush2.msra.mxu0 0.0
        %791 = vmatprep.subr.mxu0 0.0
        %792 = vmatpush2.msra.mxu0 0.0
        %793 = vmatprep.subr.mxu0 0.0
        %794 = vmatpush2.msra.mxu0 0.0
        %795 = vmatprep.subr.mxu0 0.0
        %796 = vmatpush2.msra.mxu0 0.0
        %797 = vmatprep.subr.mxu0 0.0
        %798 = vmatpush2.msra.mxu0 0.0
        %799 = vmatprep.mubr.f32.mxu0 0.0
        %v800 = vand.u32 %v270, 4294901760
        %v801 = vsub.f32 %v270, %v800
        %802 = vmatmul.mubr.f32.gmra.mxu0 %v801
        %v803 = vpop.f32.mrf.mxu0
        %v804 = vadd.f32 %v634, %v803
        %v805 = vpop.f32.mrf.mxu0
        %806 = vmatprep.mubr.f32.mxu0 0.0
        %v807 = vand.u32 %v273, 4294901760
        %v808 = vsub.f32 %v273, %v807
        %809 = vmatmul.mubr.f32.gmra.mxu0 %v808
        %v810 = vpop.f32.mrf.mxu0
        %v811 = vadd.f32 %v640, %v810
        %v812 = vpop.f32.mrf.mxu0
        %813 = vmatprep.mubr.f32.mxu0 0.0
        %v814 = vand.u32 %v276, 4294901760
        %v815 = vsub.f32 %v276, %v814
        %816 = vmatmul.mubr.f32.gmra.mxu0 %v815
        %v817 = vpop.f32.mrf.mxu0
        %v818 = vadd.f32 %v646, %v817
        %v819 = vpop.f32.mrf.mxu0
        %820 = vmatprep.mubr.f32.mxu0 0.0
        %v821 = vand.u32 %v279, 4294901760
        %v822 = vsub.f32 %v279, %v821
        %823 = vmatmul.mubr.f32.gmra.mxu0 %v822
        %v824 = vpop.f32.mrf.mxu0
        %v825 = vadd.f32 %v652, %v824
        %v826 = vpop.f32.mrf.mxu0
        %827 = vmatprep.mubr.f32.mxu0 0.0
        %v828 = vand.u32 %v282, 4294901760
        %v829 = vsub.f32 %v282, %v828
        %830 = vmatmul.mubr.f32.gmra.mxu0 %v829
        %v831 = vpop.f32.mrf.mxu0
        %v832 = vadd.f32 %v658, %v831
        %v833 = vpop.f32.mrf.mxu0
        %834 = vmatprep.mubr.f32.mxu0 0.0
        %v835 = vand.u32 %v285, 4294901760
        %v836 = vsub.f32 %v285, %v835
        %837 = vmatmul.mubr.f32.gmra.mxu0 %v836
        %v838 = vpop.f32.mrf.mxu0
        %v839 = vadd.f32 %v664, %v838
        %v840 = vpop.f32.mrf.mxu0
        %841 = vmatprep.mubr.f32.mxu0 0.0
        %v842 = vand.u32 %v288, 4294901760
        %v843 = vsub.f32 %v288, %v842
        %844 = vmatmul.mubr.f32.gmra.mxu0 %v843
        %v845 = vpop.f32.mrf.mxu0
        %v846 = vadd.f32 %v670, %v845
        %v847 = vpop.f32.mrf.mxu0
        %848 = vmatprep.mubr.f32.mxu0 0.0
        %v849 = vand.u32 %v291, 4294901760
        %v850 = vsub.f32 %v291, %v849
        %851 = vmatmul.mubr.f32.gmra.mxu0 %v850
        %v852 = vpop.f32.mrf.mxu0
        %v853 = vadd.f32 %v676, %v852
        %v854 = vpop.f32.mrf.mxu0
        %855 = vmatprep.mubr.f32.mxu0 0.0
        %v856 = vand.u32 %v294, 4294901760
        %v857 = vsub.f32 %v294, %v856
        %858 = vmatmul.mubr.f32.gmra.mxu0 %v857
        %v859 = vpop.f32.mrf.mxu0
        %v860 = vadd.f32 %v682, %v859
        %v861 = vpop.f32.mrf.mxu0
        %862 = vmatprep.mubr.f32.mxu0 0.0
        %v863 = vand.u32 %v297, 4294901760
        %v864 = vsub.f32 %v297, %v863
        %865 = vmatmul.mubr.f32.gmra.mxu0 %v864
        %v866 = vpop.f32.mrf.mxu0
        %v867 = vadd.f32 %v688, %v866
        %v868 = vpop.f32.mrf.mxu0
        %869 = vmatprep.mubr.f32.mxu0 0.0
        %v870 = vand.u32 %v300, 4294901760
        %v871 = vsub.f32 %v300, %v870
        %872 = vmatmul.mubr.f32.gmra.mxu0 %v871
        %v873 = vpop.f32.mrf.mxu0
        %v874 = vadd.f32 %v694, %v873
        %v875 = vpop.f32.mrf.mxu0
        %876 = vmatprep.mubr.f32.mxu0 0.0
        %v877 = vand.u32 %v303, 4294901760
        %v878 = vsub.f32 %v303, %v877
        %879 = vmatmul.mubr.f32.gmra.mxu0 %v878
        %v880 = vpop.f32.mrf.mxu0
        %v881 = vadd.f32 %v700, %v880
        %v882 = vpop.f32.mrf.mxu0
        %883 = vmatprep.mubr.f32.mxu0 0.0
        %v884 = vand.u32 %v306, 4294901760
        %v885 = vsub.f32 %v306, %v884
        %886 = vmatmul.mubr.f32.gmra.mxu0 %v885
        %v887 = vpop.f32.mrf.mxu0
        %v888 = vadd.f32 %v706, %v887
        %v889 = vpop.f32.mrf.mxu0
        %890 = vmatprep.mubr.f32.mxu0 0.0
        %v891 = vand.u32 %v309, 4294901760
        %v892 = vsub.f32 %v309, %v891
        %893 = vmatmul.mubr.f32.gmra.mxu0 %v892
        %v894 = vpop.f32.mrf.mxu0
        %v895 = vadd.f32 %v712, %v894
        %v896 = vpop.f32.mrf.mxu0
        %897 = vmatprep.mubr.f32.mxu0 0.0
        %v898 = vand.u32 %v312, 4294901760
        %v899 = vsub.f32 %v312, %v898
        %900 = vmatmul.mubr.f32.gmra.mxu0 %v899
        %v901 = vpop.f32.mrf.mxu0
        %v902 = vadd.f32 %v718, %v901
        %v903 = vpop.f32.mrf.mxu0
        %904 = vmatprep.mubr.f32.mxu0 0.0
        %v905 = vand.u32 %v315, 4294901760
        %v906 = vsub.f32 %v315, %v905
        %907 = vmatmul.mubr.f32.gmra.mxu0 %v906
        %v908 = vpop.f32.mrf.mxu0
        %v909 = vadd.f32 %v724, %v908
        %v910 = vpop.f32.mrf.mxu0
        %911 = vdwg.mxu0
        %912 = vmatprep.subr.mxu0 0.0
        %913 = vmatpush1.msra.mxu0 0.0
        %914 = vmatprep.subr.mxu0 0.0
        %915 = vmatpush1.msra.mxu0 0.0
        %916 = vmatprep.subr.mxu0 0.0
        %917 = vmatpush1.msra.mxu0 0.0
        %918 = vmatprep.subr.mxu0 0.0
        %919 = vmatpush1.msra.mxu0 0.0
        %920 = vmatprep.subr.mxu0 0.0
        %921 = vmatpush1.msra.mxu0 0.0
        %922 = vmatprep.subr.mxu0 0.0
        %923 = vmatpush1.msra.mxu0 0.0
        %924 = vmatprep.subr.mxu0 0.0
        %925 = vmatpush1.msra.mxu0 0.0
        %926 = vmatprep.subr.mxu0 0.0
        %927 = vmatpush1.msra.mxu0 0.0
        %928 = vmatprep.subr.mxu0 0.0
        %929 = vmatpush1.msra.mxu0 0.0
        %930 = vmatprep.subr.mxu0 0.0
        %931 = vmatpush1.msra.mxu0 0.0
        %932 = vmatprep.subr.mxu0 0.0
        %933 = vmatpush1.msra.mxu0 0.0
        %934 = vmatprep.subr.mxu0 0.0
        %935 = vmatpush1.msra.mxu0 0.0
        %936 = vmatprep.subr.mxu0 0.0
        %v937 = vand.u32 %v260, 4294901760
        %938 = vmatpush1.msra.mxu0 %v937
        %939 = vmatprep.subr.mxu0 0.0
        %v940 = vand.u32 %v259, 4294901760
        %941 = vmatpush1.msra.mxu0 %v940
        %942 = vmatprep.subr.mxu0 0.0
        %v943 = vand.u32 %v258, 4294901760
        %944 = vmatpush1.msra.mxu0 %v943
        %945 = vmatprep.subr.mxu0 0.0
        %v946 = vand.u32 %v257, 4294901760
        %947 = vmatpush1.msra.mxu0 %v946
        %948 = vmatprep.subr.mxu0 0.0
        %949 = vmatpush2.msra.mxu0 0.0
        %950 = vmatprep.subr.mxu0 0.0
        %951 = vmatpush2.msra.mxu0 0.0
        %952 = vmatprep.subr.mxu0 0.0
        %953 = vmatpush2.msra.mxu0 0.0
        %954 = vmatprep.subr.mxu0 0.0
        %955 = vmatpush2.msra.mxu0 0.0
        %956 = vmatprep.subr.mxu0 0.0
        %957 = vmatpush2.msra.mxu0 0.0
        %958 = vmatprep.subr.mxu0 0.0
        %959 = vmatpush2.msra.mxu0 0.0
        %960 = vmatprep.subr.mxu0 0.0
        %961 = vmatpush2.msra.mxu0 0.0
        %962 = vmatprep.subr.mxu0 0.0
        %963 = vmatpush2.msra.mxu0 0.0
        %964 = vmatprep.subr.mxu0 0.0
        %965 = vmatpush2.msra.mxu0 0.0
        %966 = vmatprep.subr.mxu0 0.0
        %967 = vmatpush2.msra.mxu0 0.0
        %968 = vmatprep.subr.mxu0 0.0
        %969 = vmatpush2.msra.mxu0 0.0
        %970 = vmatprep.subr.mxu0 0.0
        %971 = vmatpush2.msra.mxu0 0.0
        %972 = vmatprep.subr.mxu0 0.0
        %973 = vmatpush2.msra.mxu0 0.0
        %974 = vmatprep.subr.mxu0 0.0
        %975 = vmatpush2.msra.mxu0 0.0
        %976 = vmatprep.subr.mxu0 0.0
        %977 = vmatpush2.msra.mxu0 0.0
        %978 = vmatprep.subr.mxu0 0.0
        %979 = vmatpush2.msra.mxu0 0.0
        %980 = vmatprep.mubr.f32.mxu0 0.0
        %v981 = vand.u32 %v270, 4294901760
        %v982 = vsub.f32 %v270, %v981
        %v983 = vand.u32 %v982, 4294901760
        %984 = vmatmul.mubr.f32.gmra.mxu0 %v983
        %v985 = vpop.f32.mrf.mxu0
        %v986 = vadd.f32 %v804, %v985
        %v987 = vpop.f32.mrf.mxu0
        %988 = vmatprep.mubr.f32.mxu0 0.0
        %v989 = vand.u32 %v273, 4294901760
        %v990 = vsub.f32 %v273, %v989
        %v991 = vand.u32 %v990, 4294901760
        %992 = vmatmul.mubr.f32.gmra.mxu0 %v991
        %v993 = vpop.f32.mrf.mxu0
        %v994 = vadd.f32 %v811, %v993
        %v995 = vpop.f32.mrf.mxu0
        %996 = vmatprep.mubr.f32.mxu0 0.0
        %v997 = vand.u32 %v276, 4294901760
        %v998 = vsub.f32 %v276, %v997
        %v999 = vand.u32 %v998, 4294901760
        %1000 = vmatmul.mubr.f32.gmra.mxu0 %v999
        %v1001 = vpop.f32.mrf.mxu0
        %v1002 = vadd.f32 %v818, %v1001
        %v1003 = vpop.f32.mrf.mxu0
        %1004 = vmatprep.mubr.f32.mxu0 0.0
        %v1005 = vand.u32 %v279, 4294901760
        %v1006 = vsub.f32 %v279, %v1005
        %v1007 = vand.u32 %v1006, 4294901760
        %1008 = vmatmul.mubr.f32.gmra.mxu0 %v1007
        %v1009 = vpop.f32.mrf.mxu0
        %v1010 = vadd.f32 %v825, %v1009
        %v1011 = vpop.f32.mrf.mxu0
        %1012 = vmatprep.mubr.f32.mxu0 0.0
        %v1013 = vand.u32 %v282, 4294901760
        %v1014 = vsub.f32 %v282, %v1013
        %v1015 = vand.u32 %v1014, 4294901760
        %1016 = vmatmul.mubr.f32.gmra.mxu0 %v1015
        %v1017 = vpop.f32.mrf.mxu0
        %v1018 = vadd.f32 %v832, %v1017
        %v1019 = vpop.f32.mrf.mxu0
        %1020 = vmatprep.mubr.f32.mxu0 0.0
        %v1021 = vand.u32 %v285, 4294901760
        %v1022 = vsub.f32 %v285, %v1021
        %v1023 = vand.u32 %v1022, 4294901760
        %1024 = vmatmul.mubr.f32.gmra.mxu0 %v1023
        %v1025 = vpop.f32.mrf.mxu0
        %v1026 = vadd.f32 %v839, %v1025
        %v1027 = vpop.f32.mrf.mxu0
        %1028 = vmatprep.mubr.f32.mxu0 0.0
        %v1029 = vand.u32 %v288, 4294901760
        %v1030 = vsub.f32 %v288, %v1029
        %v1031 = vand.u32 %v1030, 4294901760
        %1032 = vmatmul.mubr.f32.gmra.mxu0 %v1031
        %v1033 = vpop.f32.mrf.mxu0
        %v1034 = vadd.f32 %v846, %v1033
        %v1035 = vpop.f32.mrf.mxu0
        %1036 = vmatprep.mubr.f32.mxu0 0.0
        %v1037 = vand.u32 %v291, 4294901760
        %v1038 = vsub.f32 %v291, %v1037
        %v1039 = vand.u32 %v1038, 4294901760
        %1040 = vmatmul.mubr.f32.gmra.mxu0 %v1039
        %v1041 = vpop.f32.mrf.mxu0
        %v1042 = vadd.f32 %v853, %v1041
        %v1043 = vpop.f32.mrf.mxu0
        %1044 = vmatprep.mubr.f32.mxu0 0.0
        %v1045 = vand.u32 %v294, 4294901760
        %v1046 = vsub.f32 %v294, %v1045
        %v1047 = vand.u32 %v1046, 4294901760
        %1048 = vmatmul.mubr.f32.gmra.mxu0 %v1047
        %v1049 = vpop.f32.mrf.mxu0
        %v1050 = vadd.f32 %v860, %v1049
        %v1051 = vpop.f32.mrf.mxu0
        %1052 = vmatprep.mubr.f32.mxu0 0.0
        %v1053 = vand.u32 %v297, 4294901760
        %v1054 = vsub.f32 %v297, %v1053
        %v1055 = vand.u32 %v1054, 4294901760
        %1056 = vmatmul.mubr.f32.gmra.mxu0 %v1055
        %v1057 = vpop.f32.mrf.mxu0
        %v1058 = vadd.f32 %v867, %v1057
        %v1059 = vpop.f32.mrf.mxu0
        %1060 = vmatprep.mubr.f32.mxu0 0.0
        %v1061 = vand.u32 %v300, 4294901760
        %v1062 = vsub.f32 %v300, %v1061
        %v1063 = vand.u32 %v1062, 4294901760
        %1064 = vmatmul.mubr.f32.gmra.mxu0 %v1063
        %v1065 = vpop.f32.mrf.mxu0
        %v1066 = vadd.f32 %v874, %v1065
        %v1067 = vpop.f32.mrf.mxu0
        %1068 = vmatprep.mubr.f32.mxu0 0.0
        %v1069 = vand.u32 %v303, 4294901760
        %v1070 = vsub.f32 %v303, %v1069
        %v1071 = vand.u32 %v1070, 4294901760
        %1072 = vmatmul.mubr.f32.gmra.mxu0 %v1071
        %v1073 = vpop.f32.mrf.mxu0
        %v1074 = vadd.f32 %v881, %v1073
        %v1075 = vpop.f32.mrf.mxu0
        %1076 = vmatprep.mubr.f32.mxu0 0.0
        %v1077 = vand.u32 %v306, 4294901760
        %v1078 = vsub.f32 %v306, %v1077
        %v1079 = vand.u32 %v1078, 4294901760
        %1080 = vmatmul.mubr.f32.gmra.mxu0 %v1079
        %v1081 = vpop.f32.mrf.mxu0
        %v1082 = vadd.f32 %v888, %v1081
        %v1083 = vpop.f32.mrf.mxu0
        %1084 = vmatprep.mubr.f32.mxu0 0.0
        %v1085 = vand.u32 %v309, 4294901760
        %v1086 = vsub.f32 %v309, %v1085
        %v1087 = vand.u32 %v1086, 4294901760
        %1088 = vmatmul.mubr.f32.gmra.mxu0 %v1087
        %v1089 = vpop.f32.mrf.mxu0
        %v1090 = vadd.f32 %v895, %v1089
        %v1091 = vpop.f32.mrf.mxu0
        %1092 = vmatprep.mubr.f32.mxu0 0.0
        %v1093 = vand.u32 %v312, 4294901760
        %v1094 = vsub.f32 %v312, %v1093
        %v1095 = vand.u32 %v1094, 4294901760
        %1096 = vmatmul.mubr.f32.gmra.mxu0 %v1095
        %v1097 = vpop.f32.mrf.mxu0
        %v1098 = vadd.f32 %v902, %v1097
        %v1099 = vpop.f32.mrf.mxu0
        %1100 = vmatprep.mubr.f32.mxu0 0.0
        %v1101 = vand.u32 %v315, 4294901760
        %v1102 = vsub.f32 %v315, %v1101
        %v1103 = vand.u32 %v1102, 4294901760
        %1104 = vmatmul.mubr.f32.gmra.mxu0 %v1103
        %v1105 = vpop.f32.mrf.mxu0
        %v1106 = vadd.f32 %v909, %v1105
        %v1107 = vpop.f32.mrf.mxu0
        %1108 = vdwg.mxu0
        %1109 = vmatprep.subr.mxu0 0.0
        %1110 = vmatpush1.msra.mxu0 0.0
        %1111 = vmatprep.subr.mxu0 0.0
        %1112 = vmatpush1.msra.mxu0 0.0
        %1113 = vmatprep.subr.mxu0 0.0
        %1114 = vmatpush1.msra.mxu0 0.0
        %1115 = vmatprep.subr.mxu0 0.0
        %1116 = vmatpush1.msra.mxu0 0.0
        %1117 = vmatprep.subr.mxu0 0.0
        %1118 = vmatpush1.msra.mxu0 0.0
        %1119 = vmatprep.subr.mxu0 0.0
        %1120 = vmatpush1.msra.mxu0 0.0
        %1121 = vmatprep.subr.mxu0 0.0
        %1122 = vmatpush1.msra.mxu0 0.0
        %1123 = vmatprep.subr.mxu0 0.0
        %1124 = vmatpush1.msra.mxu0 0.0
        %1125 = vmatprep.subr.mxu0 0.0
        %1126 = vmatpush1.msra.mxu0 0.0
        %1127 = vmatprep.subr.mxu0 0.0
        %1128 = vmatpush1.msra.mxu0 0.0
        %1129 = vmatprep.subr.mxu0 0.0
        %1130 = vmatpush1.msra.mxu0 0.0
        %1131 = vmatprep.subr.mxu0 0.0
        %1132 = vmatpush1.msra.mxu0 0.0
        %1133 = vmatprep.subr.mxu0 0.0
        %v1134 = vand.u32 %v260, 4294901760
        %v1135 = vsub.f32 %v260, %v1134
        %v1136 = vand.u32 %v1135, 4294901760
        %1137 = vmatpush1.msra.mxu0 %v1136
        %1138 = vmatprep.subr.mxu0 0.0
        %v1139 = vand.u32 %v259, 4294901760
        %v1140 = vsub.f32 %v259, %v1139
        %v1141 = vand.u32 %v1140, 4294901760
        %1142 = vmatpush1.msra.mxu0 %v1141
        %1143 = vmatprep.subr.mxu0 0.0
        %v1144 = vand.u32 %v258, 4294901760
        %v1145 = vsub.f32 %v258, %v1144
        %v1146 = vand.u32 %v1145, 4294901760
        %1147 = vmatpush1.msra.mxu0 %v1146
        %1148 = vmatprep.subr.mxu0 0.0
        %v1149 = vand.u32 %v257, 4294901760
        %v1150 = vsub.f32 %v257, %v1149
        %v1151 = vand.u32 %v1150, 4294901760
        %1152 = vmatpush1.msra.mxu0 %v1151
        %1153 = vmatprep.subr.mxu0 0.0
        %1154 = vmatpush2.msra.mxu0 0.0
        %1155 = vmatprep.subr.mxu0 0.0
        %1156 = vmatpush2.msra.mxu0 0.0
        %1157 = vmatprep.subr.mxu0 0.0
        %1158 = vmatpush2.msra.mxu0 0.0
        %1159 = vmatprep.subr.mxu0 0.0
        %1160 = vmatpush2.msra.mxu0 0.0
        %1161 = vmatprep.subr.mxu0 0.0
        %1162 = vmatpush2.msra.mxu0 0.0
        %1163 = vmatprep.subr.mxu0 0.0
        %1164 = vmatpush2.msra.mxu0 0.0
        %1165 = vmatprep.subr.mxu0 0.0
        %1166 = vmatpush2.msra.mxu0 0.0
        %1167 = vmatprep.subr.mxu0 0.0
        %1168 = vmatpush2.msra.mxu0 0.0
        %1169 = vmatprep.subr.mxu0 0.0
        %1170 = vmatpush2.msra.mxu0 0.0
        %1171 = vmatprep.subr.mxu0 0.0
        %1172 = vmatpush2.msra.mxu0 0.0
        %1173 = vmatprep.subr.mxu0 0.0
        %1174 = vmatpush2.msra.mxu0 0.0
        %1175 = vmatprep.subr.mxu0 0.0
        %1176 = vmatpush2.msra.mxu0 0.0
        %1177 = vmatprep.subr.mxu0 0.0
        %1178 = vmatpush2.msra.mxu0 0.0
        %1179 = vmatprep.subr.mxu0 0.0
        %1180 = vmatpush2.msra.mxu0 0.0
        %1181 = vmatprep.subr.mxu0 0.0
        %1182 = vmatpush2.msra.mxu0 0.0
        %1183 = vmatprep.subr.mxu0 0.0
        %1184 = vmatpush2.msra.mxu0 0.0
        %1185 = vmatprep.mubr.f32.mxu0 0.0
        %v1186 = vand.u32 %v270, 4294901760
        %1187 = vmatmul.mubr.f32.gmra.mxu0 %v1186
        %v1188 = vpop.f32.mrf.mxu0
        %v1189 = vadd.f32 %v986, %v1188
        %v1190 = vpop.f32.mrf.mxu0
        %1191 = vmatprep.mubr.f32.mxu0 0.0
        %v1192 = vand.u32 %v273, 4294901760
        %1193 = vmatmul.mubr.f32.gmra.mxu0 %v1192
        %v1194 = vpop.f32.mrf.mxu0
        %v1195 = vadd.f32 %v994, %v1194
        %v1196 = vpop.f32.mrf.mxu0
        %1197 = vmatprep.mubr.f32.mxu0 0.0
        %v1198 = vand.u32 %v276, 4294901760
        %1199 = vmatmul.mubr.f32.gmra.mxu0 %v1198
        %v1200 = vpop.f32.mrf.mxu0
        %v1201 = vadd.f32 %v1002, %v1200
        %v1202 = vpop.f32.mrf.mxu0
        %1203 = vmatprep.mubr.f32.mxu0 0.0
        %v1204 = vand.u32 %v279, 4294901760
        %1205 = vmatmul.mubr.f32.gmra.mxu0 %v1204
        %v1206 = vpop.f32.mrf.mxu0
        %v1207 = vadd.f32 %v1010, %v1206
        %v1208 = vpop.f32.mrf.mxu0
        %1209 = vmatprep.mubr.f32.mxu0 0.0
        %v1210 = vand.u32 %v282, 4294901760
        %1211 = vmatmul.mubr.f32.gmra.mxu0 %v1210
        %v1212 = vpop.f32.mrf.mxu0
        %v1213 = vadd.f32 %v1018, %v1212
        %v1214 = vpop.f32.mrf.mxu0
        %1215 = vmatprep.mubr.f32.mxu0 0.0
        %v1216 = vand.u32 %v285, 4294901760
        %1217 = vmatmul.mubr.f32.gmra.mxu0 %v1216
        %v1218 = vpop.f32.mrf.mxu0
        %v1219 = vadd.f32 %v1026, %v1218
        %v1220 = vpop.f32.mrf.mxu0
        %1221 = vmatprep.mubr.f32.mxu0 0.0
        %v1222 = vand.u32 %v288, 4294901760
        %1223 = vmatmul.mubr.f32.gmra.mxu0 %v1222
        %v1224 = vpop.f32.mrf.mxu0
        %v1225 = vadd.f32 %v1034, %v1224
        %v1226 = vpop.f32.mrf.mxu0
        %1227 = vmatprep.mubr.f32.mxu0 0.0
        %v1228 = vand.u32 %v291, 4294901760
        %1229 = vmatmul.mubr.f32.gmra.mxu0 %v1228
        %v1230 = vpop.f32.mrf.mxu0
        %v1231 = vadd.f32 %v1042, %v1230
        %v1232 = vpop.f32.mrf.mxu0
        %1233 = vmatprep.mubr.f32.mxu0 0.0
        %v1234 = vand.u32 %v294, 4294901760
        %1235 = vmatmul.mubr.f32.gmra.mxu0 %v1234
        %v1236 = vpop.f32.mrf.mxu0
        %v1237 = vadd.f32 %v1050, %v1236
        %v1238 = vpop.f32.mrf.mxu0
        %1239 = vmatprep.mubr.f32.mxu0 0.0
        %v1240 = vand.u32 %v297, 4294901760
        %1241 = vmatmul.mubr.f32.gmra.mxu0 %v1240
        %v1242 = vpop.f32.mrf.mxu0
        %v1243 = vadd.f32 %v1058, %v1242
        %v1244 = vpop.f32.mrf.mxu0
        %1245 = vmatprep.mubr.f32.mxu0 0.0
        %v1246 = vand.u32 %v300, 4294901760
        %1247 = vmatmul.mubr.f32.gmra.mxu0 %v1246
        %v1248 = vpop.f32.mrf.mxu0
        %v1249 = vadd.f32 %v1066, %v1248
        %v1250 = vpop.f32.mrf.mxu0
        %1251 = vmatprep.mubr.f32.mxu0 0.0
        %v1252 = vand.u32 %v303, 4294901760
        %1253 = vmatmul.mubr.f32.gmra.mxu0 %v1252
        %v1254 = vpop.f32.mrf.mxu0
        %v1255 = vadd.f32 %v1074, %v1254
        %v1256 = vpop.f32.mrf.mxu0
        %1257 = vmatprep.mubr.f32.mxu0 0.0
        %v1258 = vand.u32 %v306, 4294901760
        %1259 = vmatmul.mubr.f32.gmra.mxu0 %v1258
        %v1260 = vpop.f32.mrf.mxu0
        %v1261 = vadd.f32 %v1082, %v1260
        %v1262 = vpop.f32.mrf.mxu0
        %1263 = vmatprep.mubr.f32.mxu0 0.0
        %v1264 = vand.u32 %v309, 4294901760
        %1265 = vmatmul.mubr.f32.gmra.mxu0 %v1264
        %v1266 = vpop.f32.mrf.mxu0
        %v1267 = vadd.f32 %v1090, %v1266
        %v1268 = vpop.f32.mrf.mxu0
        %1269 = vmatprep.mubr.f32.mxu0 0.0
        %v1270 = vand.u32 %v312, 4294901760
        %1271 = vmatmul.mubr.f32.gmra.mxu0 %v1270
        %v1272 = vpop.f32.mrf.mxu0
        %v1273 = vadd.f32 %v1098, %v1272
        %v1274 = vpop.f32.mrf.mxu0
        %1275 = vmatprep.mubr.f32.mxu0 0.0
        %v1276 = vand.u32 %v315, 4294901760
        %1277 = vmatmul.mubr.f32.gmra.mxu0 %v1276
        %v1278 = vpop.f32.mrf.mxu0
        %v1279 = vadd.f32 %v1106, %v1278
        %v1280 = vpop.f32.mrf.mxu0
        %1281 = vdwg.mxu0
        %1282 = vmatprep.subr.mxu0 0.0
        %1283 = vmatpush1.msra.mxu0 0.0
        %1284 = vmatprep.subr.mxu0 0.0
        %1285 = vmatpush1.msra.mxu0 0.0
        %1286 = vmatprep.subr.mxu0 0.0
        %1287 = vmatpush1.msra.mxu0 0.0
        %1288 = vmatprep.subr.mxu0 0.0
        %1289 = vmatpush1.msra.mxu0 0.0
        %1290 = vmatprep.subr.mxu0 0.0
        %1291 = vmatpush1.msra.mxu0 0.0
        %1292 = vmatprep.subr.mxu0 0.0
        %1293 = vmatpush1.msra.mxu0 0.0
        %1294 = vmatprep.subr.mxu0 0.0
        %1295 = vmatpush1.msra.mxu0 0.0
        %1296 = vmatprep.subr.mxu0 0.0
        %1297 = vmatpush1.msra.mxu0 0.0
        %1298 = vmatprep.subr.mxu0 0.0
        %1299 = vmatpush1.msra.mxu0 0.0
        %1300 = vmatprep.subr.mxu0 0.0
        %1301 = vmatpush1.msra.mxu0 0.0
        %1302 = vmatprep.subr.mxu0 0.0
        %1303 = vmatpush1.msra.mxu0 0.0
        %1304 = vmatprep.subr.mxu0 0.0
        %1305 = vmatpush1.msra.mxu0 0.0
        %1306 = vmatprep.subr.mxu0 0.0
        %v1307 = vand.u32 %v260, 4294901760
        %1308 = vmatpush1.msra.mxu0 %v1307
        %1309 = vmatprep.subr.mxu0 0.0
        %v1310 = vand.u32 %v259, 4294901760
        %1311 = vmatpush1.msra.mxu0 %v1310
        %1312 = vmatprep.subr.mxu0 0.0
        %v1313 = vand.u32 %v258, 4294901760
        %1314 = vmatpush1.msra.mxu0 %v1313
        %1315 = vmatprep.subr.mxu0 0.0
        %v1316 = vand.u32 %v257, 4294901760
        %1317 = vmatpush1.msra.mxu0 %v1316
        %1318 = vmatprep.subr.mxu0 0.0
        %1319 = vmatpush2.msra.mxu0 0.0
        %1320 = vmatprep.subr.mxu0 0.0
        %1321 = vmatpush2.msra.mxu0 0.0
        %1322 = vmatprep.subr.mxu0 0.0
        %1323 = vmatpush2.msra.mxu0 0.0
        %1324 = vmatprep.subr.mxu0 0.0
        %1325 = vmatpush2.msra.mxu0 0.0
        %1326 = vmatprep.subr.mxu0 0.0
        %1327 = vmatpush2.msra.mxu0 0.0
        %1328 = vmatprep.subr.mxu0 0.0
        %1329 = vmatpush2.msra.mxu0 0.0
        %1330 = vmatprep.subr.mxu0 0.0
        %1331 = vmatpush2.msra.mxu0 0.0
        %1332 = vmatprep.subr.mxu0 0.0
        %1333 = vmatpush2.msra.mxu0 0.0
        %1334 = vmatprep.subr.mxu0 0.0
        %1335 = vmatpush2.msra.mxu0 0.0
        %1336 = vmatprep.subr.mxu0 0.0
        %1337 = vmatpush2.msra.mxu0 0.0
        %1338 = vmatprep.subr.mxu0 0.0
        %1339 = vmatpush2.msra.mxu0 0.0
        %1340 = vmatprep.subr.mxu0 0.0
        %1341 = vmatpush2.msra.mxu0 0.0
        %1342 = vmatprep.subr.mxu0 0.0
        %1343 = vmatpush2.msra.mxu0 0.0
        %1344 = vmatprep.subr.mxu0 0.0
        %1345 = vmatpush2.msra.mxu0 0.0
        %1346 = vmatprep.subr.mxu0 0.0
        %1347 = vmatpush2.msra.mxu0 0.0
        %1348 = vmatprep.subr.mxu0 0.0
        %1349 = vmatpush2.msra.mxu0 0.0
        %1350 = vmatprep.mubr.f32.mxu0 0.0
        %v1351 = vand.u32 %v270, 4294901760
        %1352 = vmatmul.mubr.f32.gmra.mxu0 %v1351
        %v1353 = vpop.f32.mrf.mxu0
        %v1354 = vadd.f32 %v1189, %v1353
        %v1355 = vpop.f32.mrf.mxu0
        %1356 = vmatprep.mubr.f32.mxu0 0.0
        %v1357 = vand.u32 %v273, 4294901760
        %1358 = vmatmul.mubr.f32.gmra.mxu0 %v1357
        %v1359 = vpop.f32.mrf.mxu0
        %v1360 = vadd.f32 %v1195, %v1359
        %v1361 = vpop.f32.mrf.mxu0
        %1362 = vmatprep.mubr.f32.mxu0 0.0
        %v1363 = vand.u32 %v276, 4294901760
        %1364 = vmatmul.mubr.f32.gmra.mxu0 %v1363
        %v1365 = vpop.f32.mrf.mxu0
        %v1366 = vadd.f32 %v1201, %v1365
        %v1367 = vpop.f32.mrf.mxu0
        %1368 = vmatprep.mubr.f32.mxu0 0.0
        %v1369 = vand.u32 %v279, 4294901760
        %1370 = vmatmul.mubr.f32.gmra.mxu0 %v1369
        %v1371 = vpop.f32.mrf.mxu0
        %v1372 = vadd.f32 %v1207, %v1371
        %v1373 = vpop.f32.mrf.mxu0
        %1374 = vmatprep.mubr.f32.mxu0 0.0
        %v1375 = vand.u32 %v282, 4294901760
        %1376 = vmatmul.mubr.f32.gmra.mxu0 %v1375
        %v1377 = vpop.f32.mrf.mxu0
        %v1378 = vadd.f32 %v1213, %v1377
        %v1379 = vpop.f32.mrf.mxu0
        %1380 = vmatprep.mubr.f32.mxu0 0.0
        %v1381 = vand.u32 %v285, 4294901760
        %1382 = vmatmul.mubr.f32.gmra.mxu0 %v1381
        %v1383 = vpop.f32.mrf.mxu0
        %v1384 = vadd.f32 %v1219, %v1383
        %v1385 = vpop.f32.mrf.mxu0
        %1386 = vmatprep.mubr.f32.mxu0 0.0
        %v1387 = vand.u32 %v288, 4294901760
        %1388 = vmatmul.mubr.f32.gmra.mxu0 %v1387
        %v1389 = vpop.f32.mrf.mxu0
        %v1390 = vadd.f32 %v1225, %v1389
        %v1391 = vpop.f32.mrf.mxu0
        %1392 = vmatprep.mubr.f32.mxu0 0.0
        %v1393 = vand.u32 %v291, 4294901760
        %1394 = vmatmul.mubr.f32.gmra.mxu0 %v1393
        %v1395 = vpop.f32.mrf.mxu0
        %v1396 = vadd.f32 %v1231, %v1395
        %v1397 = vpop.f32.mrf.mxu0
        %1398 = vmatprep.mubr.f32.mxu0 0.0
        %v1399 = vand.u32 %v294, 4294901760
        %1400 = vmatmul.mubr.f32.gmra.mxu0 %v1399
        %v1401 = vpop.f32.mrf.mxu0
        %v1402 = vadd.f32 %v1237, %v1401
        %v1403 = vpop.f32.mrf.mxu0
        %1404 = vmatprep.mubr.f32.mxu0 0.0
        %v1405 = vand.u32 %v297, 4294901760
        %1406 = vmatmul.mubr.f32.gmra.mxu0 %v1405
        %v1407 = vpop.f32.mrf.mxu0
        %v1408 = vadd.f32 %v1243, %v1407
        %v1409 = vpop.f32.mrf.mxu0
        %1410 = vmatprep.mubr.f32.mxu0 0.0
        %v1411 = vand.u32 %v300, 4294901760
        %1412 = vmatmul.mubr.f32.gmra.mxu0 %v1411
        %v1413 = vpop.f32.mrf.mxu0
        %v1414 = vadd.f32 %v1249, %v1413
        %v1415 = vpop.f32.mrf.mxu0
        %1416 = vmatprep.mubr.f32.mxu0 0.0
        %v1417 = vand.u32 %v303, 4294901760
        %1418 = vmatmul.mubr.f32.gmra.mxu0 %v1417
        %v1419 = vpop.f32.mrf.mxu0
        %v1420 = vadd.f32 %v1255, %v1419
        %v1421 = vpop.f32.mrf.mxu0
        %1422 = vmatprep.mubr.f32.mxu0 0.0
        %v1423 = vand.u32 %v306, 4294901760
        %1424 = vmatmul.mubr.f32.gmra.mxu0 %v1423
        %v1425 = vpop.f32.mrf.mxu0
        %v1426 = vadd.f32 %v1261, %v1425
        %v1427 = vpop.f32.mrf.mxu0
        %1428 = vmatprep.mubr.f32.mxu0 0.0
        %v1429 = vand.u32 %v309, 4294901760
        %1430 = vmatmul.mubr.f32.gmra.mxu0 %v1429
        %v1431 = vpop.f32.mrf.mxu0
        %v1432 = vadd.f32 %v1267, %v1431
        %v1433 = vpop.f32.mrf.mxu0
        %1434 = vmatprep.mubr.f32.mxu0 0.0
        %v1435 = vand.u32 %v312, 4294901760
        %1436 = vmatmul.mubr.f32.gmra.mxu0 %v1435
        %v1437 = vpop.f32.mrf.mxu0
        %v1438 = vadd.f32 %v1273, %v1437
        %v1439 = vpop.f32.mrf.mxu0
        %1440 = vmatprep.mubr.f32.mxu0 0.0
        %v1441 = vand.u32 %v315, 4294901760
        %1442 = vmatmul.mubr.f32.gmra.mxu0 %v1441
        %v1443 = vpop.f32.mrf.mxu0
        %v1444 = vadd.f32 %v1279, %v1443
        %v1445 = vpop.f32.mrf.mxu0
        %1446 = vdwg.mxu0
        %v1447 = vmul.f32 %v1354, %v1354
        %v1448 = vmul.f32 %v1360, %v1360
        %v1449 = vmul.f32 %v1366, %v1366
        %v1450 = vmul.f32 %v1372, %v1372
        %v1451 = vmul.f32 %v1378, %v1378
        %v1452 = vmul.f32 %v1384, %v1384
        %v1453 = vmul.f32 %v1390, %v1390
        %v1454 = vmul.f32 %v1396, %v1396
        %v1455 = vmul.f32 %v1402, %v1402
        %v1456 = vmul.f32 %v1408, %v1408
        %v1457 = vmul.f32 %v1414, %v1414
        %v1458 = vmul.f32 %v1420, %v1420
        %v1459 = vmul.f32 %v1426, %v1426
        %v1460 = vmul.f32 %v1432, %v1432
        %v1461 = vmul.f32 %v1438, %v1438
        %v1462 = vmul.f32 %v1444, %v1444
        %v1463 = vmul.f32 %v1447, -50.0
        %v1464 = vmul.f32 %v1448, -50.0
        %v1465 = vmul.f32 %v1449, -50.0
        %v1466 = vmul.f32 %v1450, -50.0
        %v1467 = vmul.f32 %v1451, -50.0
        %v1468 = vmul.f32 %v1452, -50.0
        %v1469 = vmul.f32 %v1453, -50.0
        %v1470 = vmul.f32 %v1454, -50.0
        %v1471 = vmul.f32 %v1455, -50.0
        %v1472 = vmul.f32 %v1456, -50.0
        %v1473 = vmul.f32 %v1457, -50.0
        %v1474 = vmul.f32 %v1458, -50.0
        %v1475 = vmul.f32 %v1459, -50.0
        %v1476 = vmul.f32 %v1460, -50.0
        %v1477 = vmul.f32 %v1461, -50.0
        %v1478 = vmul.f32 %v1462, -50.0
        %v1479 = vmul.f32 %v1463, 1.442695
        %v1480 = vpow.pop %v1479
        %v1481 = vmul.f32 %v1464, 1.442695
        %v1482 = vpow.pop %v1481
        %v1483 = vmul.f32 %v1465, 1.442695
        %v1484 = vpow.pop %v1483
        %v1485 = vmul.f32 %v1466, 1.442695
        %v1486 = vpow.pop %v1485
        %v1487 = vmul.f32 %v1467, 1.442695
        %v1488 = vpow.pop %v1487
        %v1489 = vmul.f32 %v1468, 1.442695
        %v1490 = vpow.pop %v1489
        %v1491 = vmul.f32 %v1469, 1.442695
        %v1492 = vpow.pop %v1491
        %v1493 = vmul.f32 %v1470, 1.442695
        %v1494 = vpow.pop %v1493
        %v1495 = vmul.f32 %v1471, 1.442695
        %v1496 = vpow.pop %v1495
        %v1497 = vmul.f32 %v1472, 1.442695
        %v1498 = vpow.pop %v1497
        %v1499 = vmul.f32 %v1473, 1.442695
        %v1500 = vpow.pop %v1499
        %v1501 = vmul.f32 %v1474, 1.442695
        %v1502 = vpow.pop %v1501
        %v1503 = vmul.f32 %v1475, 1.442695
        %v1504 = vpow.pop %v1503
        %v1505 = vmul.f32 %v1476, 1.442695
        %v1506 = vpow.pop %v1505
        %v1507 = vmul.f32 %v1477, 1.442695
        %v1508 = vpow.pop %v1507
        %v1509 = vmul.f32 %v1478, 1.442695
        %v1510 = vpow.pop %v1509
        %1511 = vst [vmem:[%s214] sm:$0xff] %v1480
        %1512 = vst [vmem:[%s214 + $0x8] sm:$0xff] %v1482
        %1513 = vst [vmem:[%s214 + $0x10] sm:$0xff] %v1484
        %1514 = vst [vmem:[%s214 + $0x18] sm:$0xff] %v1486
        %1515 = vst [vmem:[%s214 + $0x20] sm:$0xff] %v1488
        %1516 = vst [vmem:[%s214 + $0x28] sm:$0xff] %v1490
        %1517 = vst [vmem:[%s214 + $0x30] sm:$0xff] %v1492
        %1518 = vst [vmem:[%s214 + $0x38] sm:$0xff] %v1494
        %1519 = vst [vmem:[%s214 + $0x40] sm:$0xff] %v1496
        %1520 = vst [vmem:[%s214 + $0x48] sm:$0xff] %v1498
        %1521 = vst [vmem:[%s214 + $0x50] sm:$0xff] %v1500
        %1522 = vst [vmem:[%s214 + $0x58] sm:$0xff] %v1502
        %1523 = vst [vmem:[%s214 + $0x60] sm:$0xff] %v1504
        %1524 = vst [vmem:[%s214 + $0x68] sm:$0xff] %v1506
        %1525 = vst [vmem:[%s214 + $0x70] sm:$0xff] %v1508
        %1526 = vst [vmem:[%s214 + $0x78] sm:$0xff] %v1510
        %s1527 = sand.u32 %s117, 1
        %s1528 = scalar_lea.sflag [#allocation3], %s1527
        %s1529 = sand.u32 %s117, 1
        %s1530 = smul.addr %s1529, 128
        %s1531 = scalar_lea.vmem [#allocation2], %s1530
        // Predicated region
        $region33: #{tpu_custom_call.1} parent=31 // pred_check
          %p1532 = pneg %p127
        $region34: #{tpu_custom_call.1} parent=31 // pred_check_branch
          %1534 = sbr.rel (%p1532) target = $region36
        $region35: #{tpu_custom_call.1} parent=31 // pred_region
          %s1535 = smul.u32 16, %s21
          %s1536 = ssub.s32 38, %s1535
          %p1537 = scmp.lt.s32.totalorder %s1536, 16
          %s1538 = scalar_select %p1537, %s1536, 16
          %s1539 = smul.u32 128, %s1538
          %s1541 = ssub.s32 2048, %s1539
          %1542 = vsyncadd %s1528, %s1541
          %p1543 = scmp.ne.s32.totalorder 0, %s1539
          %s1544 = sadd.s32 %s22, %s1535
          %s1545 = smul.addr %s1544, 128
          %s1546 = scalar_lea.hbm %s3, %s1545
          %s1547 = smul.u32 8, %s1538
          %s1548 = sshll.u32 %s1531, 4
          %s1549 = int_to_ptr.vmem [resolvable:$true] %s1548
          %s1550 = sshll.u32 %s1547, 4
          %1554 = dma.vmem_to_hbm [thread:$0]  (%p1543), %s1549, %s1550, %s1546, %s1528, 128, 128, 8
        $region36: #{tpu_custom_call.1} parent=31 // pred_fallthru
          _
      $region32: #{tpu_custom_call.1} parent=5 // pred_fallthru
        _
      %p1555 = scmp.le.s32.totalorder 2, %s12
      // Predicated region
      $region37: #{tpu_custom_call.1} parent=5 // pred_check
        %p1556 = pneg %p1555
      $region38: #{tpu_custom_call.1} parent=5 // pred_check_branch
        %1558 = sbr.rel (%p1556) target = $region40
      $region39: #{tpu_custom_call.1} parent=5 // pred_region
        %s1559 = ssub.s32 %s12, 2
        // Predicated region
        $region41: #{tpu_custom_call.1} parent=39 // pred_check
          %p1560 = pneg %p133
        $region42: #{tpu_custom_call.1} parent=39 // pred_check_branch
          %1562 = sbr.rel (%p1560) target = $region44
        $region43: #{tpu_custom_call.1} parent=39 // pred_region
          %s1563 = sand.u32 %s118, 1
          %s1564 = scalar_lea.sflag [#allocation3], %s1563
          %s1565 = sand.u32 %s118, 1
          %s1566 = smul.addr %s1565, 128
          %s1567 = scalar_lea.vmem [#allocation2], %s1566
          %1568 = dma.done %s1564, 2048
        $region44: #{tpu_custom_call.1} parent=39 // pred_fallthru
          _
      $region40: #{tpu_custom_call.1} parent=5 // pred_fallthru
        _
    $region6: #{tpu_custom_call.1} parent=1 // loop_footer
      %s16 = sadd.s32 1, %s12
    $region7: #{tpu_custom_call.1} parent=1 // loop_footer_branch
      %11 = sbr.rel target = $region3
    $region8: #{tpu_custom_call.1} parent=1 // loop_exit
      _
    %1569 = vsyncpa [#allocation3], 1
    %s1570 = scalar_lea.sflag [#allocation3], 1
    %1571 = vsyncpa %s1570, 1

</llo_original>
